<compile_context>
chip_gen: v7x
topology: tpu7x:2x2x1
jax: 0.10.0
libtpu: 0.0.40
codegen_flags: <defaults>
</compile_context>

<pallas_src>
import functools
import numpy as np
import jax
import jax.numpy as jnp
from jax import lax
from jax.experimental import pallas as pl
from jax.experimental.pallas import tpu as pltpu

# ------------------------- small whisper-base-like config -------------------------
N_FFT = 400
HOP = 160
N_MELS = 80          # whisper-base: 80
D_MODEL = 64         # whisper-base: 512
N_HEADS = 4          # whisper-base: 8
HEAD_DIM = D_MODEL // N_HEADS
FFN_DIM = 256        # whisper-base: 2048
N_LAYERS = 2         # whisper-base: 6
MAX_POS = 32         # whisper-base: 1500
AUDIO_LEN = 3200     # 0.2 s @ 16 kHz -> 20 mel frames -> 10 encoder positions

FREQ_PAD = 256       # 201 rfft bins padded to a lane-aligned contraction dim
MEL_PAD = 128        # 80 mel channels padded to a lane-aligned width

_INV_SQRT2 = np.float32(1.0 / np.sqrt(2.0))
_INV_LN10 = np.float32(1.0 / np.log(10.0))


# ------------------------------ in-kernel math helpers ----------------------------
def _erf(x):
    # Abramowitz & Stegun 7.1.26 rational approx (~1.5e-7 abs err vs exact erf).
    a1, a2, a3, a4, a5 = 0.254829592, -0.284496736, 1.421413741, -1.453152027, 1.061405429
    p = 0.3275911
    ax = jnp.abs(x)
    t = pl.reciprocal(1.0 + p * ax, approx=True)
    poly = ((((a5 * t + a4) * t + a3) * t + a2) * t + a1) * t
    y = 1.0 - poly * jnp.exp(-ax * ax)
    return jnp.where(x >= 0.0, y, -y)


def _gelu(x):
    # erf-based GELU (matches nn.functional.gelu default / HF "gelu")
    return 0.5 * x * (1.0 + _erf(x * _INV_SQRT2))


def _layer_norm(x, w, b, eps=1e-5):
    mu = jnp.mean(x, axis=-1, keepdims=True)
    var = jnp.mean(jnp.square(x - mu), axis=-1, keepdims=True)
    return (x - mu) * lax.rsqrt(var + eps) * w + b


# ----------------------------------- fused kernel ----------------------------------
def whisper_kernel(
    # frontend operands (constant block index -> resident after grid step 0)
    mag_ref, filt_ref, c1w_ref, c1b_ref, c2w_ref, c2b_ref, pos_ref,
    # per-layer stacked weights (block index follows the layer grid axis)
    ln1w_ref, ln1b_ref, wqkv_ref, bqkv_ref, wo_ref, bo_ref,
    ln2w_ref, ln2b_ref, w1_ref, b1_ref, w2_ref, b2_ref,
    # final LayerNorm
    lnfw_ref, lnfb_ref,
    # output
    out_ref,
    # scratch
    x_sc, feat_sc, h1_sc,
    *, t_mel, t_out, t_pad, num_heads,
):
    l = pl.program_id(0)
    n_layers = pl.num_programs(0)
    d = x_sc.shape[-1]

    # ------------------- frontend: only on the first grid step -------------------
    @pl.when(l == 0)
    def _frontend():
        # log-mel: (|STFT|^2) @ filters^T in f32, log10, dynamic-range clamp, normalize
        mel = jnp.dot(mag_ref[...], filt_ref[...], preferred_element_type=jnp.float32)
        log_spec = jnp.log(jnp.maximum(mel, 1e-10)) * _INV_LN10        # (t_mel, MEL_PAD)
        col = lax.broadcasted_iota(jnp.int32, log_spec.shape, 1)
        valid = col < N_MELS                                           # mask padded channels
        gmax = jnp.max(jnp.where(valid, log_spec, -1e30))              # max over real spec
        log_spec = jnp.maximum(log_spec, gmax - 8.0)
        feat = jnp.where(valid, (log_spec + 4.0) * 0.25, 0.0)          # f32 until here

        # zero-row-padded copy (pad=1) feeding the conv1 taps
        feat_sc[...] = jnp.zeros(feat_sc.shape, feat_sc.dtype)
        feat_sc[1:1 + t_mel, :] = feat

        # conv1 (k=3, s=1, p=1) + GELU: im2col via 3 contiguous slices, ONE matmul
        x1 = jnp.concatenate([feat_sc[k:k + t_mel, :] for k in range(3)],
                             axis=-1).astype(jnp.bfloat16)             # (t_mel, 3*MEL_PAD)
        h1 = _gelu(jnp.dot(x1, c1w_ref[...], preferred_element_type=jnp.float32)
                   + c1b_ref[...])                                     # (t_mel, D) f32

        # zero-row-padded copy feeding the conv2 taps (strided reads, stride=2)
        h1_sc[...] = jnp.zeros(h1_sc.shape, h1_sc.dtype)
        h1_sc[1:1 + t_mel, :] = h1

        # conv2 (k=3, s=2, p=1) + GELU: strided taps, ONE matmul
        x2 = jnp.concatenate([h1_sc[pl.ds(k, t_out, 2), :] for k in range(3)],
                             axis=-1).astype(jnp.bfloat16)             # (t_out, 3*D)
        h2 = _gelu(jnp.dot(x2, c2w_ref[...], preferred_element_type=jnp.float32)
                   + c2b_ref[...])                                     # (t_out, D)

        # + positional embedding, into the (time-padded) residual stream
        x_sc[...] = jnp.zeros(x_sc.shape, x_sc.dtype)
        x_sc[0:t_out, :] = h2 + pos_ref[...]

    # ------------------------- one encoder layer per grid step -------------------
    x = x_sc[...]                                                      # (t_pad, D) f32

    # ---- self-attention (pre-LN), fused QKV projection ----
    h = _layer_norm(x, ln1w_ref[0], ln1b_ref[0])
    qkv = jnp.dot(h.astype(jnp.bfloat16), wqkv_ref[0],
                  preferred_element_type=jnp.float32) + bqkv_ref[0]    # (t_pad, 3D)
    # 1/sqrt(head_dim) folded into the q weights/bias; k_proj carries no bias.

    # key mask for the time padding (t_out valid positions out of t_pad)
    kcol = lax.broadcasted_iota(jnp.int32, (t_pad, t_pad), 1)
    kmask = kcol < t_out

    ctx_parts = []
    for hh in range(num_heads):
        q_h = qkv[:, hh * HEAD_DIM:(hh + 1) * HEAD_DIM].astype(jnp.bfloat16)
        k_h = qkv[:, d + hh * HEAD_DIM:d + (hh + 1) * HEAD_DIM].astype(jnp.bfloat16)
        v_h = qkv[:, 2 * d + hh * HEAD_DIM:2 * d + (hh + 1) * HEAD_DIM].astype(jnp.bfloat16)
        s = lax.dot_general(q_h, k_h, (((1,), (1,)), ((), ())),
                            preferred_element_type=jnp.float32)        # (t_pad, t_pad)
        s = jnp.where(kmask, s, -1e30)
        s = s - jnp.max(s, axis=-1, keepdims=True)
        p = jnp.exp(s)
        p = p * pl.reciprocal(jnp.sum(p, axis=-1, keepdims=True), approx=True)
        ctx_parts.append(jnp.dot(p.astype(jnp.bfloat16), v_h,
                                 preferred_element_type=jnp.float32))  # (t_pad, hd)
    ctx = jnp.concatenate(ctx_parts, axis=-1).astype(jnp.bfloat16)     # (t_pad, D)

    attn = jnp.dot(ctx, wo_ref[0], preferred_element_type=jnp.float32) + bo_ref[0]
    x = x + attn

    # ---- feed-forward (pre-LN) ----
    h2 = _layer_norm(x, ln2w_ref[0], ln2b_ref[0])
    ff = _gelu(jnp.dot(h2.astype(jnp.bfloat16), w1_ref[0],
                       preferred_element_type=jnp.float32) + b1_ref[0])
    ff = jnp.dot(ff.astype(jnp.bfloat16), w2_ref[0],
                 preferred_element_type=jnp.float32) + b2_ref[0]
    x = x + ff

    x_sc[...] = x                                                      # carry to next layer

    # ---- write this layer's hidden state (lane-dense 128-wide slab) ----
    @pl.when(l < n_layers - 1)
    def _store_mid():
        out_ref[0] = jnp.concatenate([x, jnp.zeros_like(x)], axis=-1)

    @pl.when(l == n_layers - 1)
    def _store_last():
        # HF stack(hidden_states)[1:]: last entry is the final-LayerNorm output.
        y = _layer_norm(x, lnfw_ref[...], lnfb_ref[...])
        out_ref[0] = jnp.concatenate([y, jnp.zeros_like(y)], axis=-1)


# ----------------------------------- wrapper ----------------------------------------
_ENC_KEYS = ("ln1_w", "ln1_b", "wqkv", "bqkv", "wo", "bo",
             "ln2_w", "ln2_b", "w1", "b1", "w2", "b2")


def whisper_encode(mag, params):
    """mag: (t_mel, n_fft//2+1) f32 time-major power spectrum -> (L, t_out, D) f32."""
    t_mel = mag.shape[0]
    t_out = (t_mel - 1) // 2 + 1
    t_pad = ((t_out + 7) // 8) * 8                      # sublane-aligned working length
    mag_p = jnp.pad(mag, ((0, 0), (0, FREQ_PAD - mag.shape[1])))   # stays f32

    enc = params["enc"]
    const2 = lambda l: (0, 0)
    layer3 = lambda l: (l, 0, 0)

    in_specs = [
        pl.BlockSpec((t_mel, FREQ_PAD), const2),             # power spectrum
        pl.BlockSpec((FREQ_PAD, MEL_PAD), const2),           # mel filterbank (f32)
        pl.BlockSpec((3 * MEL_PAD, D_MODEL), const2),        # conv1 packed weight
        pl.BlockSpec((1, D_MODEL), const2),                  # conv1 bias
        pl.BlockSpec((3 * D_MODEL, D_MODEL), const2),        # conv2 packed weight
        pl.BlockSpec((1, D_MODEL), const2),                  # conv2 bias
        pl.BlockSpec((t_out, D_MODEL), const2),              # positional embedding
        pl.BlockSpec((1, 1, D_MODEL), layer3),               # ln1_w
        pl.BlockSpec((1, 1, D_MODEL), layer3),               # ln1_b
        pl.BlockSpec((1, D_MODEL, 3 * D_MODEL), layer3),     # wqkv
        pl.BlockSpec((1, 1, 3 * D_MODEL), layer3),           # bqkv
        pl.BlockSpec((1, D_MODEL, D_MODEL), layer3),         # wo
        pl.BlockSpec((1, 1, D_MODEL), layer3),               # bo
        pl.BlockSpec((1, 1, D_MODEL), layer3),               # ln2_w
        pl.BlockSpec((1, 1, D_MODEL), layer3),               # ln2_b
        pl.BlockSpec((1, D_MODEL, FFN_DIM), layer3),         # w1
        pl.BlockSpec((1, 1, FFN_DIM), layer3),               # b1
        pl.BlockSpec((1, FFN_DIM, D_MODEL), layer3),         # w2
        pl.BlockSpec((1, 1, D_MODEL), layer3),               # b2
        pl.BlockSpec((1, D_MODEL), const2),                  # final LN weight
        pl.BlockSpec((1, D_MODEL), const2),                  # final LN bias
    ]
    out_spec = pl.BlockSpec((1, t_pad, 2 * D_MODEL), layer3)

    kernel = functools.partial(whisper_kernel, t_mel=t_mel, t_out=t_out,
                               t_pad=t_pad, num_heads=N_HEADS)

    out = pl.pallas_call(
        kernel,
        out_shape=jax.ShapeDtypeStruct((N_LAYERS, t_pad, 2 * D_MODEL), jnp.float32),
        grid_spec=pltpu.PrefetchScalarGridSpec(
            num_scalar_prefetch=0,
            grid=(N_LAYERS,),                                 # one encoder layer per step
            in_specs=in_specs,
            out_specs=out_spec,
            scratch_shapes=[
                pltpu.VMEM((t_pad, D_MODEL), jnp.float32),        # residual stream
                pltpu.VMEM((t_mel + 2, MEL_PAD), jnp.float32),    # pad=1 conv1 taps
                pltpu.VMEM((t_mel + 2, D_MODEL), jnp.float32),    # pad=1 conv2 taps
            ]),
        compiler_params=pltpu.CompilerParams(
            dimension_semantics=("arbitrary",),               # layers are sequential
            vmem_limit_bytes=32 * 1024 * 1024),
    )(mag_p, params["filt_t"], params["conv1_w"], params["conv1_b"],
      params["conv2_w"], params["conv2_b"], params["pos_emb"][:t_out],
      enc["ln1_w"], enc["ln1_b"], enc["wqkv"], enc["bqkv"], enc["wo"], enc["bo"],
      enc["ln2_w"], enc["ln2_b"], enc["w1"], enc["b1"], enc["w2"], enc["b2"],
      params["lnf_w"], params["lnf_b"])
    return out[:, :t_out, :D_MODEL]


# --------------------------------- plain-JAX glue -----------------------------------
def mel_filterbank(sr=16000, n_fft=N_FFT, n_mels=N_MELS):
    # Deterministic triangular (HTK-style) mel filterbank standing in for mel_filters.npz.
    def hz_to_mel(f):
        return 2595.0 * np.log10(1.0 + f / 700.0)

    def mel_to_hz(m):
        return 700.0 * (10.0 ** (m / 2595.0) - 1.0)

    mels = np.linspace(hz_to_mel(0.0), hz_to_mel(sr / 2.0), n_mels + 2)
    hz = mel_to_hz(mels)
    bins = np.fft.rfftfreq(n_fft, 1.0 / sr)
    fb = np.zeros((n_mels, n_fft // 2 + 1), dtype=np.float32)
    for m in range(1, n_mels + 1):
        left, center, right = hz[m - 1], hz[m], hz[m + 1]
        up = (bins - left) / max(center - left, 1e-9)
        down = (right - bins) / max(right - center, 1e-9)
        fb[m - 1] = np.maximum(0.0, np.minimum(up, down))
    return fb


def stft_magnitudes(audio):
    # torch.stft(audio, 400, 160, window=hann(400), center=True, reflect) equivalent,
    # |.|^2, drop the last frame (matches `stft[..., :-1]`), returned time-major.
    # TODO(synk): rFFT has no Pallas primitive; framing + FFT stay in plain JAX, and the
    # HF feature_extractor's pad-to-30s is not replicated (log-mel math matches otherwise).
    pad = N_FFT // 2
    xp = jnp.pad(audio, (pad, pad), mode="reflect")
    n_frames = 1 + (xp.shape[0] - N_FFT) // HOP
    idx = jnp.arange(n_frames)[:, None] * HOP + jnp.arange(N_FFT)[None, :]
    frames = xp[idx]
    n = jnp.arange(N_FFT, dtype=jnp.float32)
    window = 0.5 - 0.5 * jnp.cos(2.0 * jnp.pi * n / N_FFT)               # periodic hann
    spec = jnp.fft.rfft(frames * window, axis=-1)                        # (n_frames, 201)
    mag = jnp.abs(spec).astype(jnp.float32) ** 2
    return mag[:-1]                                                      # (n_frames-1, 201)


def get_feat_extract_output_lengths(input_lengths):
    input_lengths = input_lengths // 160
    return (input_lengths - 1) // 2 + 1


# --------------------------------- parameters --------------------------------------
def init_params(key):
    def nrm(k, shape, scale=0.02):
        return scale * jax.random.normal(k, shape, jnp.float32)

    keys = jax.random.split(key, 5 + N_LAYERS)

    # ---- front end ----
    fb = mel_filterbank()                                     # (80, 201)
    filt_t = np.zeros((FREQ_PAD, MEL_PAD), np.float32)
    filt_t[:fb.shape[1], :fb.shape[0]] = fb.T                 # padded, transposed (stays f32)

    conv1_w = nrm(keys[0], (D_MODEL, N_MELS, 3))              # torch Conv1d layout (Cout,Cin,K)
    conv1_b = nrm(keys[1], (D_MODEL,))
    conv2_w = nrm(keys[2], (D_MODEL, D_MODEL, 3))
    conv2_b = nrm(keys[3], (D_MODEL,))
    # packed tap-major weights for the fused im2col matmuls: row k*C + c -> W[out, c, k]
    c1 = np.zeros((3, MEL_PAD, D_MODEL), np.float32)
    c1[:, :N_MELS, :] = np.transpose(np.asarray(conv1_w), (2, 1, 0))
    c1 = c1.reshape(3 * MEL_PAD, D_MODEL)
    c2 = np.transpose(np.asarray(conv2_w), (2, 1, 0)).reshape(3 * D_MODEL, D_MODEL)

    params = {
        "filt_t": jnp.asarray(filt_t, jnp.float32),
        "conv1_w": jnp.asarray(c1, jnp.bfloat16),
        "conv1_b": conv1_b.reshape(1, D_MODEL),
        "conv2_w": jnp.asarray(c2, jnp.bfloat16),
        "conv2_b": conv2_b.reshape(1, D_MODEL),
        "pos_emb": nrm(keys[4], (MAX_POS, D_MODEL)),
        "lnf_w": jnp.ones((1, D_MODEL), jnp.float32),
        "lnf_b": jnp.zeros((1, D_MODEL), jnp.float32),
    }

    # ---- encoder layers: qkv fused, q-scaling folded, bf16 weights, stacked over L ----
    scaling = float(HEAD_DIM) ** -0.5
    per = {n: [] for n in _ENC_KEYS}
    for l in range(N_LAYERS):
        lk = jax.random.split(keys[5 + l], 10)
        wq = nrm(lk[0], (D_MODEL, D_MODEL)); bq = nrm(lk[1], (1, D_MODEL))
        wk = nrm(lk[2], (D_MODEL, D_MODEL))                       # k_proj has no bias
        wv = nrm(lk[3], (D_MODEL, D_MODEL)); bv = nrm(lk[4], (1, D_MODEL))
        wo = nrm(lk[5], (D_MODEL, D_MODEL)); bo = nrm(lk[6], (1, D_MODEL))
        w1 = nrm(lk[7], (D_MODEL, FFN_DIM)); b1 = nrm(lk[8], (1, FFN_DIM))
        w2 = nrm(lk[9], (FFN_DIM, D_MODEL))
        per["ln1_w"].append(jnp.ones((1, D_MODEL), jnp.float32))
        per["ln1_b"].append(jnp.zeros((1, D_MODEL), jnp.float32))
        per["wqkv"].append(jnp.concatenate([wq * scaling, wk, wv], axis=1).astype(jnp.bfloat16))
        per["bqkv"].append(jnp.concatenate([bq * scaling, jnp.zeros_like(bq), bv], axis=1))
        per["wo"].append(wo.astype(jnp.bfloat16))
        per["bo"].append(bo)
        per["ln2_w"].append(jnp.ones((1, D_MODEL), jnp.float32))
        per["ln2_b"].append(jnp.zeros((1, D_MODEL), jnp.float32))
        per["w1"].append(w1.astype(jnp.bfloat16))
        per["b1"].append(b1)
        per["w2"].append(w2.astype(jnp.bfloat16))
        per["b2"].append(jnp.zeros((1, D_MODEL), jnp.float32))
    params["enc"] = {n: jnp.stack(v, axis=0) for n, v in per.items()}
    return params


# ----------------------------------- forward ----------------------------------------
def whisper_base_forward(x, params):
    """Mirrors WhisperBase.forward for length=None: audio -> log-mel -> encoder
    hidden states; returns torch.stack(hidden_states)[1:]  ==  (N_LAYERS, 1, T', D)."""
    audio = x[0]                                              # module uses x[0]
    mag = stft_magnitudes(audio)                              # (t_mel, 201), time-major
    _length = get_feat_extract_output_lengths(x.shape[1])     # unused when mask is None
    feats = whisper_encode(mag, params)                       # (L, T', D): [h_1,...,LN(h_L)]
    return feats[:, None, :, :]                               # (L, 1, T', D)


# ------------------------------------ main -------------------------------------------
if __name__ == "__main__":
    key = jax.random.PRNGKey(0)
    k_audio, k_params = jax.random.split(key)
    x = 0.1 * jax.random.normal(k_audio, (1, AUDIO_LEN), jnp.float32)   # raw waveform batch
    params = init_params(k_params)

    out = whisper_base_forward(x, params)
    out = jax.block_until_ready(out)

    t_out = int(get_feat_extract_output_lengths(AUDIO_LEN))
    assert out.shape == (N_LAYERS, 1, t_out, D_MODEL), out.shape
    assert bool(jnp.all(jnp.isfinite(out)))
    print("KERNEL_OK")
</pallas_src>

<mosaic_0001>
module attributes {stable_mosaic.version = 11 : i64} {
  func.func @whisper_kernel(%arg0: i32, %arg1: memref<20x256xf32, #tpu.memory_space<vmem>>, %arg2: memref<256x128xf32, #tpu.memory_space<vmem>>, %arg3: memref<384x64xbf16, #tpu.memory_space<vmem>>, %arg4: memref<1x64xf32, #tpu.memory_space<vmem>>, %arg5: memref<192x64xbf16, #tpu.memory_space<vmem>>, %arg6: memref<1x64xf32, #tpu.memory_space<vmem>>, %arg7: memref<10x64xf32, #tpu.memory_space<vmem>>, %arg8: memref<1x1x64xf32, #tpu.memory_space<vmem>>, %arg9: memref<1x1x64xf32, #tpu.memory_space<vmem>>, %arg10: memref<1x64x192xbf16, #tpu.memory_space<vmem>>, %arg11: memref<1x1x192xf32, #tpu.memory_space<vmem>>, %arg12: memref<1x64x64xbf16, #tpu.memory_space<vmem>>, %arg13: memref<1x1x64xf32, #tpu.memory_space<vmem>>, %arg14: memref<1x1x64xf32, #tpu.memory_space<vmem>>, %arg15: memref<1x1x64xf32, #tpu.memory_space<vmem>>, %arg16: memref<1x64x256xbf16, #tpu.memory_space<vmem>>, %arg17: memref<1x1x256xf32, #tpu.memory_space<vmem>>, %arg18: memref<1x256x64xbf16, #tpu.memory_space<vmem>>, %arg19: memref<1x1x64xf32, #tpu.memory_space<vmem>>, %arg20: memref<1x64xf32, #tpu.memory_space<vmem>>, %arg21: memref<1x64xf32, #tpu.memory_space<vmem>>, %arg22: memref<1x16x128xf32, #tpu.memory_space<vmem>>, %arg23: memref<16x64xf32, #tpu.memory_space<vmem>>, %arg24: memref<22x128xf32, #tpu.memory_space<vmem>>, %arg25: memref<22x64xf32, #tpu.memory_space<vmem>>) attributes {dimension_semantics = [#tpu.dimension_semantics<arbitrary>], iteration_bounds = array<i64: 2>, scalar_prefetch = 0 : i64, scratch_operands = 3 : i64, tpu.core_type = #tpu.core_type<tc>, window_params = [{pipeline_mode = #tpu.pipeline_mode<synchronous>, transform_indices = @transform_0, window_bounds = array<i64: 20, 256>}, {pipeline_mode = #tpu.pipeline_mode<synchronous>, transform_indices = @transform_1, window_bounds = array<i64: 256, 128>}, {pipeline_mode = #tpu.pipeline_mode<synchronous>, transform_indices = @transform_2, window_bounds = array<i64: 384, 64>}, {pipeline_mode = #tpu.pipeline_mode<synchronous>, transform_indices = @transform_3, window_bounds = array<i64: 1, 64>}, {pipeline_mode = #tpu.pipeline_mode<synchronous>, transform_indices = @transform_4, window_bounds = array<i64: 192, 64>}, {pipeline_mode = #tpu.pipeline_mode<synchronous>, transform_indices = @transform_5, window_bounds = array<i64: 1, 64>}, {pipeline_mode = #tpu.pipeline_mode<synchronous>, transform_indices = @transform_6, window_bounds = array<i64: 10, 64>}, {transform_indices = @transform_7, window_bounds = array<i64: 1, 1, 64>}, {transform_indices = @transform_8, window_bounds = array<i64: 1, 1, 64>}, {transform_indices = @transform_9, window_bounds = array<i64: 1, 64, 192>}, {transform_indices = @transform_10, window_bounds = array<i64: 1, 1, 192>}, {transform_indices = @transform_11, window_bounds = array<i64: 1, 64, 64>}, {transform_indices = @transform_12, window_bounds = array<i64: 1, 1, 64>}, {transform_indices = @transform_13, window_bounds = array<i64: 1, 1, 64>}, {transform_indices = @transform_14, window_bounds = array<i64: 1, 1, 64>}, {transform_indices = @transform_15, window_bounds = array<i64: 1, 64, 256>}, {transform_indices = @transform_16, window_bounds = array<i64: 1, 1, 256>}, {transform_indices = @transform_17, window_bounds = array<i64: 1, 256, 64>}, {transform_indices = @transform_18, window_bounds = array<i64: 1, 1, 64>}, {pipeline_mode = #tpu.pipeline_mode<synchronous>, transform_indices = @transform_19, window_bounds = array<i64: 1, 64>}, {pipeline_mode = #tpu.pipeline_mode<synchronous>, transform_indices = @transform_20, window_bounds = array<i64: 1, 64>}, {transform_indices = @transform_21, window_bounds = array<i64: 1, 16, 128>}]} {
    %c0_i32 = arith.constant 0 : i32
    %0 = arith.cmpi eq, %arg0, %c0_i32 : i32
    %1 = arith.extui %0 : i1 to i32
    %c0_i32_0 = arith.constant 0 : i32
    %2 = arith.cmpi ne, %1, %c0_i32_0 : i32
    scf.if %2 {
      %c0_90 = arith.constant 0 : index
      %c0_91 = arith.constant 0 : index
      %224 = vector.load %arg1[%c0_90, %c0_91] : memref<20x256xf32, #tpu.memory_space<vmem>>, vector<20x256xf32>
      %c0_92 = arith.constant 0 : index
      %c0_93 = arith.constant 0 : index
      %225 = vector.load %arg2[%c0_92, %c0_93] : memref<256x128xf32, #tpu.memory_space<vmem>>, vector<256x128xf32>
      %cst_94 = arith.constant dense<0.000000e+00> : vector<20x128xf32>
      %226 = tpu.matmul %224, %225, %cst_94 {dimension_numbers = #tpu.dot_dimension_numbers<[1], [0], [0], [1], [0, 0, 1, 1], [], []>} : vector<20x256xf32>, vector<256x128xf32>, vector<20x128xf32> -> vector<20x128xf32>
      %cst_95 = arith.constant 1.000000e-10 : f32
      %227 = vector.broadcast %cst_95 : f32 to vector<20x128xf32>
      %228 = arith.maximumf %226, %227 : vector<20x128xf32>
      %229 = math.log %228 : vector<20x128xf32>
      %cst_96 = arith.constant 0.434294492 : f32
      %230 = vector.broadcast %cst_96 : f32 to vector<20x128xf32>
      %231 = arith.mulf %229, %230 : vector<20x128xf32>
      %232 = tpu.iota {dimensions = array<i32: 1>} : vector<20x128xi32>
      %c80_i32 = arith.constant 80 : i32
      %233 = vector.broadcast %c80_i32 : i32 to vector<20x128xi32>
      %234 = arith.cmpi slt, %232, %233 : vector<20x128xi32>
      %cst_97 = arith.constant -1.000000e+30 : f32
      %235 = vector.broadcast %cst_97 : f32 to vector<20x128xf32>
      %236 = arith.select %234, %231, %235 : vector<20x128xi1>, vector<20x128xf32>
      %237 = vector.shape_cast %236 : vector<20x128xf32> to vector<1x20x128xf32>
      %cst_98 = arith.constant dense<0xFF800000> : vector<1xf32>
      %238 = vector.multi_reduction <maximumf>, %237, %cst_98 [1, 2] : vector<1x20x128xf32> to vector<1xf32>
      %239 = vector.shape_cast %238 : vector<1xf32> to vector<1x1x1xf32>
      %240 = vector.extract %239[0, 0, 0] : f32 from vector<1x1x1xf32>
      %cst_99 = arith.constant 8.000000e+00 : f32
      %241 = arith.subf %240, %cst_99 : f32
      %242 = vector.broadcast %241 : f32 to vector<20x128xf32>
      %243 = arith.maximumf %231, %242 : vector<20x128xf32>
      %cst_100 = arith.constant 4.000000e+00 : f32
      %244 = vector.broadcast %cst_100 : f32 to vector<20x128xf32>
      %245 = arith.addf %243, %244 : vector<20x128xf32>
      %cst_101 = arith.constant 2.500000e-01 : f32
      %246 = vector.broadcast %cst_101 : f32 to vector<20x128xf32>
      %247 = arith.mulf %245, %246 : vector<20x128xf32>
      %cst_102 = arith.constant 0.000000e+00 : f32
      %248 = vector.broadcast %cst_102 : f32 to vector<20x128xf32>
      %249 = arith.select %234, %247, %248 : vector<20x128xi1>, vector<20x128xf32>
      %cst_103 = arith.constant 0.000000e+00 : f32
      %250 = vector.broadcast %cst_103 : f32 to vector<22x128xf32>
      %c0_104 = arith.constant 0 : index
      %c0_105 = arith.constant 0 : index
      %251 = vector.load %arg24[%c0_104, %c0_105] : memref<22x128xf32, #tpu.memory_space<vmem>>, vector<22x128xf32>
      tpu.vector_store %arg24[%c0_104, %c0_105], %250 {strides = array<i32>} : memref<22x128xf32, #tpu.memory_space<vmem>>, vector<22x128xf32>,
      %c1 = arith.constant 1 : index
      %c0_106 = arith.constant 0 : index
      %252 = vector.load %arg24[%c1, %c0_106] : memref<22x128xf32, #tpu.memory_space<vmem>>, vector<20x128xf32>
      tpu.vector_store %arg24[%c1, %c0_106], %249 {strides = array<i32>} : memref<22x128xf32, #tpu.memory_space<vmem>>, vector<20x128xf32>,
      %c0_107 = arith.constant 0 : index
      %c0_108 = arith.constant 0 : index
      %253 = vector.load %arg24[%c0_107, %c0_108] : memref<22x128xf32, #tpu.memory_space<vmem>>, vector<20x128xf32>
      %c1_109 = arith.constant 1 : index
      %c0_110 = arith.constant 0 : index
      %254 = vector.load %arg24[%c1_109, %c0_110] : memref<22x128xf32, #tpu.memory_space<vmem>>, vector<20x128xf32>
      %c2 = arith.constant 2 : index
      %c0_111 = arith.constant 0 : index
      %255 = vector.load %arg24[%c2, %c0_111] : memref<22x128xf32, #tpu.memory_space<vmem>>, vector<20x128xf32>
      %256 = tpu.concatenate %253, %254, %255 in 1 : vector<20x128xf32>, vector<20x128xf32>, vector<20x128xf32> -> vector<20x384xf32>
      %257 = arith.truncf %256 : vector<20x384xf32> to vector<20x384xbf16>
      %c0_112 = arith.constant 0 : index
      %c0_113 = arith.constant 0 : index
      %258 = vector.load %arg3[%c0_112, %c0_113] : memref<384x64xbf16, #tpu.memory_space<vmem>>, vector<384x64xbf16>
      %cst_114 = arith.constant dense<0.000000e+00> : vector<20x64xf32>
      %259 = tpu.matmul %257, %258, %cst_114 {dimension_numbers = #tpu.dot_dimension_numbers<[1], [0], [0], [1], [0, 0, 1, 1], [], []>} : vector<20x384xbf16>, vector<384x64xbf16>, vector<20x64xf32> -> vector<20x64xf32>
      %c0_115 = arith.constant 0 : index
      %c0_116 = arith.constant 0 : index
      %260 = vector.load %arg4[%c0_115, %c0_116] : memref<1x64xf32, #tpu.memory_space<vmem>>, vector<1x64xf32>
      %261 = vector.broadcast %260 : vector<1x64xf32> to vector<20x64xf32>
      %262 = arith.addf %259, %261 : vector<20x64xf32>
      %cst_117 = arith.constant 5.000000e-01 : f32
      %263 = vector.broadcast %cst_117 : f32 to vector<20x64xf32>
      %264 = arith.mulf %263, %262 : vector<20x64xf32>
      %cst_118 = arith.constant 0.707106769 : f32
      %265 = vector.broadcast %cst_118 : f32 to vector<20x64xf32>
      %266 = arith.mulf %262, %265 : vector<20x64xf32>
      %267 = math.absf %266 : vector<20x64xf32>
      %cst_119 = arith.constant 0.327591091 : f32
      %268 = vector.broadcast %cst_119 : f32 to vector<20x64xf32>
      %269 = arith.mulf %268, %267 : vector<20x64xf32>
      %cst_120 = arith.constant 1.000000e+00 : f32
      %270 = vector.broadcast %cst_120 : f32 to vector<20x64xf32>
      %271 = arith.addf %270, %269 : vector<20x64xf32>
      %272 = tpu.reciprocal %271 {approx = true} : vector<20x64xf32> -> vector<20x64xf32>
      %cst_121 = arith.constant 1.06140542 : f32
      %273 = vector.broadcast %cst_121 : f32 to vector<20x64xf32>
      %274 = arith.mulf %273, %272 : vector<20x64xf32>
      %cst_122 = arith.constant -1.45315206 : f32
      %275 = vector.broadcast %cst_122 : f32 to vector<20x64xf32>
      %276 = arith.addf %274, %275 : vector<20x64xf32>
      %277 = arith.mulf %276, %272 : vector<20x64xf32>
      %cst_123 = arith.constant 1.42141378 : f32
      %278 = vector.broadcast %cst_123 : f32 to vector<20x64xf32>
      %279 = arith.addf %277, %278 : vector<20x64xf32>
      %280 = arith.mulf %279, %272 : vector<20x64xf32>
      %cst_124 = arith.constant -0.284496725 : f32
      %281 = vector.broadcast %cst_124 : f32 to vector<20x64xf32>
      %282 = arith.addf %280, %281 : vector<20x64xf32>
      %283 = arith.mulf %282, %272 : vector<20x64xf32>
      %cst_125 = arith.constant 0.254829586 : f32
      %284 = vector.broadcast %cst_125 : f32 to vector<20x64xf32>
      %285 = arith.addf %283, %284 : vector<20x64xf32>
      %286 = arith.mulf %285, %272 : vector<20x64xf32>
      %cst_126 = arith.constant 0.000000e+00 : f32
      %287 = vector.broadcast %cst_126 : f32 to vector<20x64xf32>
      %288 = arith.subf %287, %267 : vector<20x64xf32>
      %289 = arith.mulf %288, %267 : vector<20x64xf32>
      %290 = math.exp %289 : vector<20x64xf32>
      %291 = arith.mulf %286, %290 : vector<20x64xf32>
      %cst_127 = arith.constant 1.000000e+00 : f32
      %292 = vector.broadcast %cst_127 : f32 to vector<20x64xf32>
      %293 = arith.subf %292, %291 : vector<20x64xf32>
      %cst_128 = arith.constant 0.000000e+00 : f32
      %294 = vector.broadcast %cst_128 : f32 to vector<20x64xf32>
      %295 = arith.cmpf oge, %266, %294 : vector<20x64xf32>
      %cst_129 = arith.constant 0.000000e+00 : f32
      %296 = vector.broadcast %cst_129 : f32 to vector<20x64xf32>
      %297 = arith.subf %296, %293 : vector<20x64xf32>
      %298 = arith.select %295, %293, %297 : vector<20x64xi1>, vector<20x64xf32>
      %cst_130 = arith.constant 1.000000e+00 : f32
      %299 = vector.broadcast %cst_130 : f32 to vector<20x64xf32>
      %300 = arith.addf %299, %298 : vector<20x64xf32>
      %301 = arith.mulf %264, %300 : vector<20x64xf32>
      %cst_131 = arith.constant 0.000000e+00 : f32
      %302 = vector.broadcast %cst_131 : f32 to vector<22x64xf32>
      %c0_132 = arith.constant 0 : index
      %c0_133 = arith.constant 0 : index
      %303 = vector.load %arg25[%c0_132, %c0_133] : memref<22x64xf32, #tpu.memory_space<vmem>>, vector<22x64xf32>
      tpu.vector_store %arg25[%c0_132, %c0_133], %302 {strides = array<i32>} : memref<22x64xf32, #tpu.memory_space<vmem>>, vector<22x64xf32>,
      %c1_134 = arith.constant 1 : index
      %c0_135 = arith.constant 0 : index
      %304 = vector.load %arg25[%c1_134, %c0_135] : memref<22x64xf32, #tpu.memory_space<vmem>>, vector<20x64xf32>
      tpu.vector_store %arg25[%c1_134, %c0_135], %301 {strides = array<i32>} : memref<22x64xf32, #tpu.memory_space<vmem>>, vector<20x64xf32>,
      %c0_136 = arith.constant 0 : index
      %c0_137 = arith.constant 0 : index
      %305 = tpu.strided_load %arg25[%c0_136, %c0_137] {strides = array<i32: 2, 1>} : memref<22x64xf32, #tpu.memory_space<vmem>>, vector<10x64xf32>
      %c1_138 = arith.constant 1 : index
      %c0_139 = arith.constant 0 : index
      %306 = tpu.strided_load %arg25[%c1_138, %c0_139] {strides = array<i32: 2, 1>} : memref<22x64xf32, #tpu.memory_space<vmem>>, vector<10x64xf32>
      %c2_140 = arith.constant 2 : index
      %c0_141 = arith.constant 0 : index
      %307 = tpu.strided_load %arg25[%c2_140, %c0_141] {strides = array<i32: 2, 1>} : memref<22x64xf32, #tpu.memory_space<vmem>>, vector<10x64xf32>
      %308 = tpu.concatenate %305, %306, %307 in 1 : vector<10x64xf32>, vector<10x64xf32>, vector<10x64xf32> -> vector<10x192xf32>
      %309 = arith.truncf %308 : vector<10x192xf32> to vector<10x192xbf16>
      %c0_142 = arith.constant 0 : index
      %c0_143 = arith.constant 0 : index
      %310 = vector.load %arg5[%c0_142, %c0_143] : memref<192x64xbf16, #tpu.memory_space<vmem>>, vector<192x64xbf16>
      %cst_144 = arith.constant dense<0.000000e+00> : vector<10x64xf32>
      %311 = tpu.matmul %309, %310, %cst_144 {dimension_numbers = #tpu.dot_dimension_numbers<[1], [0], [0], [1], [0, 0, 1, 1], [], []>} : vector<10x192xbf16>, vector<192x64xbf16>, vector<10x64xf32> -> vector<10x64xf32>
      %c0_145 = arith.constant 0 : index
      %c0_146 = arith.constant 0 : index
      %312 = vector.load %arg6[%c0_145, %c0_146] : memref<1x64xf32, #tpu.memory_space<vmem>>, vector<1x64xf32>
      %313 = vector.broadcast %312 : vector<1x64xf32> to vector<10x64xf32>
      %314 = arith.addf %311, %313 : vector<10x64xf32>
      %cst_147 = arith.constant 5.000000e-01 : f32
      %315 = vector.broadcast %cst_147 : f32 to vector<10x64xf32>
      %316 = arith.mulf %315, %314 : vector<10x64xf32>
      %cst_148 = arith.constant 0.707106769 : f32
      %317 = vector.broadcast %cst_148 : f32 to vector<10x64xf32>
      %318 = arith.mulf %314, %317 : vector<10x64xf32>
      %319 = math.absf %318 : vector<10x64xf32>
      %cst_149 = arith.constant 0.327591091 : f32
      %320 = vector.broadcast %cst_149 : f32 to vector<10x64xf32>
      %321 = arith.mulf %320, %319 : vector<10x64xf32>
      %cst_150 = arith.constant 1.000000e+00 : f32
      %322 = vector.broadcast %cst_150 : f32 to vector<10x64xf32>
      %323 = arith.addf %322, %321 : vector<10x64xf32>
      %324 = tpu.reciprocal %323 {approx = true} : vector<10x64xf32> -> vector<10x64xf32>
      %cst_151 = arith.constant 1.06140542 : f32
      %325 = vector.broadcast %cst_151 : f32 to vector<10x64xf32>
      %326 = arith.mulf %325, %324 : vector<10x64xf32>
      %cst_152 = arith.constant -1.45315206 : f32
      %327 = vector.broadcast %cst_152 : f32 to vector<10x64xf32>
      %328 = arith.addf %326, %327 : vector<10x64xf32>
      %329 = arith.mulf %328, %324 : vector<10x64xf32>
      %cst_153 = arith.constant 1.42141378 : f32
      %330 = vector.broadcast %cst_153 : f32 to vector<10x64xf32>
      %331 = arith.addf %329, %330 : vector<10x64xf32>
      %332 = arith.mulf %331, %324 : vector<10x64xf32>
      %cst_154 = arith.constant -0.284496725 : f32
      %333 = vector.broadcast %cst_154 : f32 to vector<10x64xf32>
      %334 = arith.addf %332, %333 : vector<10x64xf32>
      %335 = arith.mulf %334, %324 : vector<10x64xf32>
      %cst_155 = arith.constant 0.254829586 : f32
      %336 = vector.broadcast %cst_155 : f32 to vector<10x64xf32>
      %337 = arith.addf %335, %336 : vector<10x64xf32>
      %338 = arith.mulf %337, %324 : vector<10x64xf32>
      %cst_156 = arith.constant 0.000000e+00 : f32
      %339 = vector.broadcast %cst_156 : f32 to vector<10x64xf32>
      %340 = arith.subf %339, %319 : vector<10x64xf32>
      %341 = arith.mulf %340, %319 : vector<10x64xf32>
      %342 = math.exp %341 : vector<10x64xf32>
      %343 = arith.mulf %338, %342 : vector<10x64xf32>
      %cst_157 = arith.constant 1.000000e+00 : f32
      %344 = vector.broadcast %cst_157 : f32 to vector<10x64xf32>
      %345 = arith.subf %344, %343 : vector<10x64xf32>
      %cst_158 = arith.constant 0.000000e+00 : f32
      %346 = vector.broadcast %cst_158 : f32 to vector<10x64xf32>
      %347 = arith.cmpf oge, %318, %346 : vector<10x64xf32>
      %cst_159 = arith.constant 0.000000e+00 : f32
      %348 = vector.broadcast %cst_159 : f32 to vector<10x64xf32>
      %349 = arith.subf %348, %345 : vector<10x64xf32>
      %350 = arith.select %347, %345, %349 : vector<10x64xi1>, vector<10x64xf32>
      %cst_160 = arith.constant 1.000000e+00 : f32
      %351 = vector.broadcast %cst_160 : f32 to vector<10x64xf32>
      %352 = arith.addf %351, %350 : vector<10x64xf32>
      %353 = arith.mulf %316, %352 : vector<10x64xf32>
      %cst_161 = arith.constant 0.000000e+00 : f32
      %354 = vector.broadcast %cst_161 : f32 to vector<16x64xf32>
      %c0_162 = arith.constant 0 : index
      %c0_163 = arith.constant 0 : index
      %355 = vector.load %arg23[%c0_162, %c0_163] : memref<16x64xf32, #tpu.memory_space<vmem>>, vector<16x64xf32>
      tpu.vector_store %arg23[%c0_162, %c0_163], %354 {strides = array<i32>} : memref<16x64xf32, #tpu.memory_space<vmem>>, vector<16x64xf32>,
      %c0_164 = arith.constant 0 : index
      %c0_165 = arith.constant 0 : index
      %356 = vector.load %arg7[%c0_164, %c0_165] : memref<10x64xf32, #tpu.memory_space<vmem>>, vector<10x64xf32>
      %357 = arith.addf %353, %356 : vector<10x64xf32>
      %c0_166 = arith.constant 0 : index
      %c0_167 = arith.constant 0 : index
      %358 = vector.load %arg23[%c0_166, %c0_167] : memref<16x64xf32, #tpu.memory_space<vmem>>, vector<10x64xf32>
      tpu.vector_store %arg23[%c0_166, %c0_167], %357 {strides = array<i32>} : memref<16x64xf32, #tpu.memory_space<vmem>>, vector<10x64xf32>,
    } else {
    }
    %c0 = arith.constant 0 : index
    %c0_1 = arith.constant 0 : index
    %3 = vector.load %arg23[%c0, %c0_1] : memref<16x64xf32, #tpu.memory_space<vmem>>, vector<16x64xf32>
    %c0_2 = arith.constant 0 : index
    %c0_3 = arith.constant 0 : index
    %c0_4 = arith.constant 0 : index
    %4 = vector.load %arg8[%c0_2, %c0_3, %c0_4] : memref<1x1x64xf32, #tpu.memory_space<vmem>>, vector<1x1x64xf32>
    %5 = vector.shape_cast %4 : vector<1x1x64xf32> to vector<1x64xf32>
    %c0_5 = arith.constant 0 : index
    %c0_6 = arith.constant 0 : index
    %c0_7 = arith.constant 0 : index
    %6 = vector.load %arg9[%c0_5, %c0_6, %c0_7] : memref<1x1x64xf32, #tpu.memory_space<vmem>>, vector<1x1x64xf32>
    %7 = vector.shape_cast %6 : vector<1x1x64xf32> to vector<1x64xf32>
    %cst = arith.constant dense<0.000000e+00> : vector<16xf32>
    %8 = vector.multi_reduction <add>, %3, %cst [1] : vector<16x64xf32> to vector<16xf32>
    %9 = vector.shape_cast %8 : vector<16xf32> to vector<16x1xf32>
    %cst_8 = arith.constant 6.400000e+01 : f32
    %10 = vector.broadcast %cst_8 : f32 to vector<16x1xf32>
    %11 = arith.divf %9, %10 : vector<16x1xf32>
    %12 = vector.broadcast %11 : vector<16x1xf32> to vector<16x64xf32>
    %13 = arith.subf %3, %12 : vector<16x64xf32>
    %14 = arith.mulf %13, %13 : vector<16x64xf32>
    %cst_9 = arith.constant dense<0.000000e+00> : vector<16xf32>
    %15 = vector.multi_reduction <add>, %14, %cst_9 [1] : vector<16x64xf32> to vector<16xf32>
    %16 = vector.shape_cast %15 : vector<16xf32> to vector<16x1xf32>
    %cst_10 = arith.constant 6.400000e+01 : f32
    %17 = vector.broadcast %cst_10 : f32 to vector<16x1xf32>
    %18 = arith.divf %16, %17 : vector<16x1xf32>
    %19 = vector.broadcast %11 : vector<16x1xf32> to vector<16x64xf32>
    %20 = arith.subf %3, %19 : vector<16x64xf32>
    %cst_11 = arith.constant 9.99999974E-6 : f32
    %21 = vector.broadcast %cst_11 : f32 to vector<16x1xf32>
    %22 = arith.addf %18, %21 : vector<16x1xf32>
    %23 = math.rsqrt %22 : vector<16x1xf32>
    %24 = vector.broadcast %23 : vector<16x1xf32> to vector<16x64xf32>
    %25 = arith.mulf %20, %24 : vector<16x64xf32>
    %26 = vector.broadcast %5 : vector<1x64xf32> to vector<16x64xf32>
    %27 = arith.mulf %25, %26 : vector<16x64xf32>
    %28 = vector.broadcast %7 : vector<1x64xf32> to vector<16x64xf32>
    %29 = arith.addf %27, %28 : vector<16x64xf32>
    %30 = arith.truncf %29 : vector<16x64xf32> to vector<16x64xbf16>
    %c0_12 = arith.constant 0 : index
    %c0_13 = arith.constant 0 : index
    %c0_14 = arith.constant 0 : index
    %31 = vector.load %arg10[%c0_12, %c0_13, %c0_14] : memref<1x64x192xbf16, #tpu.memory_space<vmem>>, vector<1x64x192xbf16>
    %32 = vector.shape_cast %31 : vector<1x64x192xbf16> to vector<64x192xbf16>
    %cst_15 = arith.constant dense<0.000000e+00> : vector<16x192xf32>
    %33 = tpu.matmul %30, %32, %cst_15 {dimension_numbers = #tpu.dot_dimension_numbers<[1], [0], [0], [1], [0, 0, 1, 1], [], []>} : vector<16x64xbf16>, vector<64x192xbf16>, vector<16x192xf32> -> vector<16x192xf32>
    %c0_16 = arith.constant 0 : index
    %c0_17 = arith.constant 0 : index
    %c0_18 = arith.constant 0 : index
    %34 = vector.load %arg11[%c0_16, %c0_17, %c0_18] : memref<1x1x192xf32, #tpu.memory_space<vmem>>, vector<1x1x192xf32>
    %35 = vector.shape_cast %34 : vector<1x1x192xf32> to vector<1x192xf32>
    %36 = vector.broadcast %35 : vector<1x192xf32> to vector<16x192xf32>
    %37 = arith.addf %33, %36 : vector<16x192xf32>
    %38 = tpu.iota {dimensions = array<i32: 1>} : vector<16x16xi32>
    %c10_i32 = arith.constant 10 : i32
    %39 = vector.broadcast %c10_i32 : i32 to vector<16x16xi32>
    %40 = arith.cmpi slt, %38, %39 : vector<16x16xi32>
    %41 = vector.extract_strided_slice %37 {offsets = [0, 0], sizes = [16, 16], strides = [1, 1]} : vector<16x192xf32> to vector<16x16xf32>
    %42 = arith.truncf %41 : vector<16x16xf32> to vector<16x16xbf16>
    %43 = vector.extract_strided_slice %37 {offsets = [0, 64], sizes = [16, 16], strides = [1, 1]} : vector<16x192xf32> to vector<16x16xf32>
    %44 = arith.truncf %43 : vector<16x16xf32> to vector<16x16xbf16>
    %45 = vector.extract_strided_slice %37 {offsets = [0, 128], sizes = [16, 16], strides = [1, 1]} : vector<16x192xf32> to vector<16x16xf32>
    %46 = arith.truncf %45 : vector<16x16xf32> to vector<16x16xbf16>
    %cst_19 = arith.constant dense<0.000000e+00> : vector<16x16xf32>
    %47 = tpu.matmul %42, %44, %cst_19 {dimension_numbers = #tpu.dot_dimension_numbers<[1], [1], [0], [0], [0, 0, 1, 0], [], []>} : vector<16x16xbf16>, vector<16x16xbf16>, vector<16x16xf32> -> vector<16x16xf32>
    %cst_20 = arith.constant -1.000000e+30 : f32
    %48 = vector.broadcast %cst_20 : f32 to vector<16x16xf32>
    %49 = arith.select %40, %47, %48 : vector<16x16xi1>, vector<16x16xf32>
    %cst_21 = arith.constant dense<0xFF800000> : vector<16xf32>
    %50 = vector.multi_reduction <maximumf>, %49, %cst_21 [1] : vector<16x16xf32> to vector<16xf32>
    %51 = vector.shape_cast %50 : vector<16xf32> to vector<16x1xf32>
    %52 = vector.broadcast %51 : vector<16x1xf32> to vector<16x16xf32>
    %53 = arith.subf %49, %52 : vector<16x16xf32>
    %54 = math.exp %53 : vector<16x16xf32>
    %cst_22 = arith.constant dense<0.000000e+00> : vector<16xf32>
    %55 = vector.multi_reduction <add>, %54, %cst_22 [1] : vector<16x16xf32> to vector<16xf32>
    %56 = vector.shape_cast %55 : vector<16xf32> to vector<16x1xf32>
    %57 = tpu.reciprocal %56 {approx = true} : vector<16x1xf32> -> vector<16x1xf32>
    %58 = vector.broadcast %57 : vector<16x1xf32> to vector<16x16xf32>
    %59 = arith.mulf %54, %58 : vector<16x16xf32>
    %60 = arith.truncf %59 : vector<16x16xf32> to vector<16x16xbf16>
    %cst_23 = arith.constant dense<0.000000e+00> : vector<16x16xf32>
    %61 = tpu.matmul %60, %46, %cst_23 {dimension_numbers = #tpu.dot_dimension_numbers<[1], [0], [0], [1], [0, 0, 1, 1], [], []>} : vector<16x16xbf16>, vector<16x16xbf16>, vector<16x16xf32> -> vector<16x16xf32>
    %62 = vector.extract_strided_slice %37 {offsets = [0, 16], sizes = [16, 16], strides = [1, 1]} : vector<16x192xf32> to vector<16x16xf32>
    %63 = arith.truncf %62 : vector<16x16xf32> to vector<16x16xbf16>
    %64 = vector.extract_strided_slice %37 {offsets = [0, 80], sizes = [16, 16], strides = [1, 1]} : vector<16x192xf32> to vector<16x16xf32>
    %65 = arith.truncf %64 : vector<16x16xf32> to vector<16x16xbf16>
    %66 = vector.extract_strided_slice %37 {offsets = [0, 144], sizes = [16, 16], strides = [1, 1]} : vector<16x192xf32> to vector<16x16xf32>
    %67 = arith.truncf %66 : vector<16x16xf32> to vector<16x16xbf16>
    %cst_24 = arith.constant dense<0.000000e+00> : vector<16x16xf32>
    %68 = tpu.matmul %63, %65, %cst_24 {dimension_numbers = #tpu.dot_dimension_numbers<[1], [1], [0], [0], [0, 0, 1, 0], [], []>} : vector<16x16xbf16>, vector<16x16xbf16>, vector<16x16xf32> -> vector<16x16xf32>
    %cst_25 = arith.constant -1.000000e+30 : f32
    %69 = vector.broadcast %cst_25 : f32 to vector<16x16xf32>
    %70 = arith.select %40, %68, %69 : vector<16x16xi1>, vector<16x16xf32>
    %cst_26 = arith.constant dense<0xFF800000> : vector<16xf32>
    %71 = vector.multi_reduction <maximumf>, %70, %cst_26 [1] : vector<16x16xf32> to vector<16xf32>
    %72 = vector.shape_cast %71 : vector<16xf32> to vector<16x1xf32>
    %73 = vector.broadcast %72 : vector<16x1xf32> to vector<16x16xf32>
    %74 = arith.subf %70, %73 : vector<16x16xf32>
    %75 = math.exp %74 : vector<16x16xf32>
    %cst_27 = arith.constant dense<0.000000e+00> : vector<16xf32>
    %76 = vector.multi_reduction <add>, %75, %cst_27 [1] : vector<16x16xf32> to vector<16xf32>
    %77 = vector.shape_cast %76 : vector<16xf32> to vector<16x1xf32>
    %78 = tpu.reciprocal %77 {approx = true} : vector<16x1xf32> -> vector<16x1xf32>
    %79 = vector.broadcast %78 : vector<16x1xf32> to vector<16x16xf32>
    %80 = arith.mulf %75, %79 : vector<16x16xf32>
    %81 = arith.truncf %80 : vector<16x16xf32> to vector<16x16xbf16>
    %cst_28 = arith.constant dense<0.000000e+00> : vector<16x16xf32>
    %82 = tpu.matmul %81, %67, %cst_28 {dimension_numbers = #tpu.dot_dimension_numbers<[1], [0], [0], [1], [0, 0, 1, 1], [], []>} : vector<16x16xbf16>, vector<16x16xbf16>, vector<16x16xf32> -> vector<16x16xf32>
    %83 = vector.extract_strided_slice %37 {offsets = [0, 32], sizes = [16, 16], strides = [1, 1]} : vector<16x192xf32> to vector<16x16xf32>
    %84 = arith.truncf %83 : vector<16x16xf32> to vector<16x16xbf16>
    %85 = vector.extract_strided_slice %37 {offsets = [0, 96], sizes = [16, 16], strides = [1, 1]} : vector<16x192xf32> to vector<16x16xf32>
    %86 = arith.truncf %85 : vector<16x16xf32> to vector<16x16xbf16>
    %87 = vector.extract_strided_slice %37 {offsets = [0, 160], sizes = [16, 16], strides = [1, 1]} : vector<16x192xf32> to vector<16x16xf32>
    %88 = arith.truncf %87 : vector<16x16xf32> to vector<16x16xbf16>
    %cst_29 = arith.constant dense<0.000000e+00> : vector<16x16xf32>
    %89 = tpu.matmul %84, %86, %cst_29 {dimension_numbers = #tpu.dot_dimension_numbers<[1], [1], [0], [0], [0, 0, 1, 0], [], []>} : vector<16x16xbf16>, vector<16x16xbf16>, vector<16x16xf32> -> vector<16x16xf32>
    %cst_30 = arith.constant -1.000000e+30 : f32
    %90 = vector.broadcast %cst_30 : f32 to vector<16x16xf32>
    %91 = arith.select %40, %89, %90 : vector<16x16xi1>, vector<16x16xf32>
    %cst_31 = arith.constant dense<0xFF800000> : vector<16xf32>
    %92 = vector.multi_reduction <maximumf>, %91, %cst_31 [1] : vector<16x16xf32> to vector<16xf32>
    %93 = vector.shape_cast %92 : vector<16xf32> to vector<16x1xf32>
    %94 = vector.broadcast %93 : vector<16x1xf32> to vector<16x16xf32>
    %95 = arith.subf %91, %94 : vector<16x16xf32>
    %96 = math.exp %95 : vector<16x16xf32>
    %cst_32 = arith.constant dense<0.000000e+00> : vector<16xf32>
    %97 = vector.multi_reduction <add>, %96, %cst_32 [1] : vector<16x16xf32> to vector<16xf32>
    %98 = vector.shape_cast %97 : vector<16xf32> to vector<16x1xf32>
    %99 = tpu.reciprocal %98 {approx = true} : vector<16x1xf32> -> vector<16x1xf32>
    %100 = vector.broadcast %99 : vector<16x1xf32> to vector<16x16xf32>
    %101 = arith.mulf %96, %100 : vector<16x16xf32>
    %102 = arith.truncf %101 : vector<16x16xf32> to vector<16x16xbf16>
    %cst_33 = arith.constant dense<0.000000e+00> : vector<16x16xf32>
    %103 = tpu.matmul %102, %88, %cst_33 {dimension_numbers = #tpu.dot_dimension_numbers<[1], [0], [0], [1], [0, 0, 1, 1], [], []>} : vector<16x16xbf16>, vector<16x16xbf16>, vector<16x16xf32> -> vector<16x16xf32>
    %104 = vector.extract_strided_slice %37 {offsets = [0, 48], sizes = [16, 16], strides = [1, 1]} : vector<16x192xf32> to vector<16x16xf32>
    %105 = arith.truncf %104 : vector<16x16xf32> to vector<16x16xbf16>
    %106 = vector.extract_strided_slice %37 {offsets = [0, 112], sizes = [16, 16], strides = [1, 1]} : vector<16x192xf32> to vector<16x16xf32>
    %107 = arith.truncf %106 : vector<16x16xf32> to vector<16x16xbf16>
    %108 = vector.extract_strided_slice %37 {offsets = [0, 176], sizes = [16, 16], strides = [1, 1]} : vector<16x192xf32> to vector<16x16xf32>
    %109 = arith.truncf %108 : vector<16x16xf32> to vector<16x16xbf16>
    %cst_34 = arith.constant dense<0.000000e+00> : vector<16x16xf32>
    %110 = tpu.matmul %105, %107, %cst_34 {dimension_numbers = #tpu.dot_dimension_numbers<[1], [1], [0], [0], [0, 0, 1, 0], [], []>} : vector<16x16xbf16>, vector<16x16xbf16>, vector<16x16xf32> -> vector<16x16xf32>
    %cst_35 = arith.constant -1.000000e+30 : f32
    %111 = vector.broadcast %cst_35 : f32 to vector<16x16xf32>
    %112 = arith.select %40, %110, %111 : vector<16x16xi1>, vector<16x16xf32>
    %cst_36 = arith.constant dense<0xFF800000> : vector<16xf32>
    %113 = vector.multi_reduction <maximumf>, %112, %cst_36 [1] : vector<16x16xf32> to vector<16xf32>
    %114 = vector.shape_cast %113 : vector<16xf32> to vector<16x1xf32>
    %115 = vector.broadcast %114 : vector<16x1xf32> to vector<16x16xf32>
    %116 = arith.subf %112, %115 : vector<16x16xf32>
    %117 = math.exp %116 : vector<16x16xf32>
    %cst_37 = arith.constant dense<0.000000e+00> : vector<16xf32>
    %118 = vector.multi_reduction <add>, %117, %cst_37 [1] : vector<16x16xf32> to vector<16xf32>
    %119 = vector.shape_cast %118 : vector<16xf32> to vector<16x1xf32>
    %120 = tpu.reciprocal %119 {approx = true} : vector<16x1xf32> -> vector<16x1xf32>
    %121 = vector.broadcast %120 : vector<16x1xf32> to vector<16x16xf32>
    %122 = arith.mulf %117, %121 : vector<16x16xf32>
    %123 = arith.truncf %122 : vector<16x16xf32> to vector<16x16xbf16>
    %cst_38 = arith.constant dense<0.000000e+00> : vector<16x16xf32>
    %124 = tpu.matmul %123, %109, %cst_38 {dimension_numbers = #tpu.dot_dimension_numbers<[1], [0], [0], [1], [0, 0, 1, 1], [], []>} : vector<16x16xbf16>, vector<16x16xbf16>, vector<16x16xf32> -> vector<16x16xf32>
    %125 = tpu.concatenate %61, %82, %103, %124 in 1 : vector<16x16xf32>, vector<16x16xf32>, vector<16x16xf32>, vector<16x16xf32> -> vector<16x64xf32>
    %126 = arith.truncf %125 : vector<16x64xf32> to vector<16x64xbf16>
    %c0_39 = arith.constant 0 : index
    %c0_40 = arith.constant 0 : index
    %c0_41 = arith.constant 0 : index
    %127 = vector.load %arg12[%c0_39, %c0_40, %c0_41] : memref<1x64x64xbf16, #tpu.memory_space<vmem>>, vector<1x64x64xbf16>
    %128 = vector.shape_cast %127 : vector<1x64x64xbf16> to vector<64x64xbf16>
    %cst_42 = arith.constant dense<0.000000e+00> : vector<16x64xf32>
    %129 = tpu.matmul %126, %128, %cst_42 {dimension_numbers = #tpu.dot_dimension_numbers<[1], [0], [0], [1], [0, 0, 1, 1], [], []>} : vector<16x64xbf16>, vector<64x64xbf16>, vector<16x64xf32> -> vector<16x64xf32>
    %c0_43 = arith.constant 0 : index
    %c0_44 = arith.constant 0 : index
    %c0_45 = arith.constant 0 : index
    %130 = vector.load %arg13[%c0_43, %c0_44, %c0_45] : memref<1x1x64xf32, #tpu.memory_space<vmem>>, vector<1x1x64xf32>
    %131 = vector.shape_cast %130 : vector<1x1x64xf32> to vector<1x64xf32>
    %132 = vector.broadcast %131 : vector<1x64xf32> to vector<16x64xf32>
    %133 = arith.addf %129, %132 : vector<16x64xf32>
    %134 = arith.addf %3, %133 : vector<16x64xf32>
    %c0_46 = arith.constant 0 : index
    %c0_47 = arith.constant 0 : index
    %c0_48 = arith.constant 0 : index
    %135 = vector.load %arg14[%c0_46, %c0_47, %c0_48] : memref<1x1x64xf32, #tpu.memory_space<vmem>>, vector<1x1x64xf32>
    %136 = vector.shape_cast %135 : vector<1x1x64xf32> to vector<1x64xf32>
    %c0_49 = arith.constant 0 : index
    %c0_50 = arith.constant 0 : index
    %c0_51 = arith.constant 0 : index
    %137 = vector.load %arg15[%c0_49, %c0_50, %c0_51] : memref<1x1x64xf32, #tpu.memory_space<vmem>>, vector<1x1x64xf32>
    %138 = vector.shape_cast %137 : vector<1x1x64xf32> to vector<1x64xf32>
    %cst_52 = arith.constant dense<0.000000e+00> : vector<16xf32>
    %139 = vector.multi_reduction <add>, %134, %cst_52 [1] : vector<16x64xf32> to vector<16xf32>
    %140 = vector.shape_cast %139 : vector<16xf32> to vector<16x1xf32>
    %cst_53 = arith.constant 6.400000e+01 : f32
    %141 = vector.broadcast %cst_53 : f32 to vector<16x1xf32>
    %142 = arith.divf %140, %141 : vector<16x1xf32>
    %143 = vector.broadcast %142 : vector<16x1xf32> to vector<16x64xf32>
    %144 = arith.subf %134, %143 : vector<16x64xf32>
    %145 = arith.mulf %144, %144 : vector<16x64xf32>
    %cst_54 = arith.constant dense<0.000000e+00> : vector<16xf32>
    %146 = vector.multi_reduction <add>, %145, %cst_54 [1] : vector<16x64xf32> to vector<16xf32>
    %147 = vector.shape_cast %146 : vector<16xf32> to vector<16x1xf32>
    %cst_55 = arith.constant 6.400000e+01 : f32
    %148 = vector.broadcast %cst_55 : f32 to vector<16x1xf32>
    %149 = arith.divf %147, %148 : vector<16x1xf32>
    %150 = vector.broadcast %142 : vector<16x1xf32> to vector<16x64xf32>
    %151 = arith.subf %134, %150 : vector<16x64xf32>
    %cst_56 = arith.constant 9.99999974E-6 : f32
    %152 = vector.broadcast %cst_56 : f32 to vector<16x1xf32>
    %153 = arith.addf %149, %152 : vector<16x1xf32>
    %154 = math.rsqrt %153 : vector<16x1xf32>
    %155 = vector.broadcast %154 : vector<16x1xf32> to vector<16x64xf32>
    %156 = arith.mulf %151, %155 : vector<16x64xf32>
    %157 = vector.broadcast %136 : vector<1x64xf32> to vector<16x64xf32>
    %158 = arith.mulf %156, %157 : vector<16x64xf32>
    %159 = vector.broadcast %138 : vector<1x64xf32> to vector<16x64xf32>
    %160 = arith.addf %158, %159 : vector<16x64xf32>
    %161 = arith.truncf %160 : vector<16x64xf32> to vector<16x64xbf16>
    %c0_57 = arith.constant 0 : index
    %c0_58 = arith.constant 0 : index
    %c0_59 = arith.constant 0 : index
    %162 = vector.load %arg16[%c0_57, %c0_58, %c0_59] : memref<1x64x256xbf16, #tpu.memory_space<vmem>>, vector<1x64x256xbf16>
    %163 = vector.shape_cast %162 : vector<1x64x256xbf16> to vector<64x256xbf16>
    %cst_60 = arith.constant dense<0.000000e+00> : vector<16x256xf32>
    %164 = tpu.matmul %161, %163, %cst_60 {dimension_numbers = #tpu.dot_dimension_numbers<[1], [0], [0], [1], [0, 0, 1, 1], [], []>} : vector<16x64xbf16>, vector<64x256xbf16>, vector<16x256xf32> -> vector<16x256xf32>
    %c0_61 = arith.constant 0 : index
    %c0_62 = arith.constant 0 : index
    %c0_63 = arith.constant 0 : index
    %165 = vector.load %arg17[%c0_61, %c0_62, %c0_63] : memref<1x1x256xf32, #tpu.memory_space<vmem>>, vector<1x1x256xf32>
    %166 = vector.shape_cast %165 : vector<1x1x256xf32> to vector<1x256xf32>
    %167 = vector.broadcast %166 : vector<1x256xf32> to vector<16x256xf32>
    %168 = arith.addf %164, %167 : vector<16x256xf32>
    %cst_64 = arith.constant 5.000000e-01 : f32
    %169 = vector.broadcast %cst_64 : f32 to vector<16x256xf32>
    %170 = arith.mulf %169, %168 : vector<16x256xf32>
    %cst_65 = arith.constant 0.707106769 : f32
    %171 = vector.broadcast %cst_65 : f32 to vector<16x256xf32>
    %172 = arith.mulf %168, %171 : vector<16x256xf32>
    %173 = math.absf %172 : vector<16x256xf32>
    %cst_66 = arith.constant 0.327591091 : f32
    %174 = vector.broadcast %cst_66 : f32 to vector<16x256xf32>
    %175 = arith.mulf %174, %173 : vector<16x256xf32>
    %cst_67 = arith.constant 1.000000e+00 : f32
    %176 = vector.broadcast %cst_67 : f32 to vector<16x256xf32>
    %177 = arith.addf %176, %175 : vector<16x256xf32>
    %178 = tpu.reciprocal %177 {approx = true} : vector<16x256xf32> -> vector<16x256xf32>
    %cst_68 = arith.constant 1.06140542 : f32
    %179 = vector.broadcast %cst_68 : f32 to vector<16x256xf32>
    %180 = arith.mulf %179, %178 : vector<16x256xf32>
    %cst_69 = arith.constant -1.45315206 : f32
    %181 = vector.broadcast %cst_69 : f32 to vector<16x256xf32>
    %182 = arith.addf %180, %181 : vector<16x256xf32>
    %183 = arith.mulf %182, %178 : vector<16x256xf32>
    %cst_70 = arith.constant 1.42141378 : f32
    %184 = vector.broadcast %cst_70 : f32 to vector<16x256xf32>
    %185 = arith.addf %183, %184 : vector<16x256xf32>
    %186 = arith.mulf %185, %178 : vector<16x256xf32>
    %cst_71 = arith.constant -0.284496725 : f32
    %187 = vector.broadcast %cst_71 : f32 to vector<16x256xf32>
    %188 = arith.addf %186, %187 : vector<16x256xf32>
    %189 = arith.mulf %188, %178 : vector<16x256xf32>
    %cst_72 = arith.constant 0.254829586 : f32
    %190 = vector.broadcast %cst_72 : f32 to vector<16x256xf32>
    %191 = arith.addf %189, %190 : vector<16x256xf32>
    %192 = arith.mulf %191, %178 : vector<16x256xf32>
    %cst_73 = arith.constant 0.000000e+00 : f32
    %193 = vector.broadcast %cst_73 : f32 to vector<16x256xf32>
    %194 = arith.subf %193, %173 : vector<16x256xf32>
    %195 = arith.mulf %194, %173 : vector<16x256xf32>
    %196 = math.exp %195 : vector<16x256xf32>
    %197 = arith.mulf %192, %196 : vector<16x256xf32>
    %cst_74 = arith.constant 1.000000e+00 : f32
    %198 = vector.broadcast %cst_74 : f32 to vector<16x256xf32>
    %199 = arith.subf %198, %197 : vector<16x256xf32>
    %cst_75 = arith.constant 0.000000e+00 : f32
    %200 = vector.broadcast %cst_75 : f32 to vector<16x256xf32>
    %201 = arith.cmpf oge, %172, %200 : vector<16x256xf32>
    %cst_76 = arith.constant 0.000000e+00 : f32
    %202 = vector.broadcast %cst_76 : f32 to vector<16x256xf32>
    %203 = arith.subf %202, %199 : vector<16x256xf32>
    %204 = arith.select %201, %199, %203 : vector<16x256xi1>, vector<16x256xf32>
    %cst_77 = arith.constant 1.000000e+00 : f32
    %205 = vector.broadcast %cst_77 : f32 to vector<16x256xf32>
    %206 = arith.addf %205, %204 : vector<16x256xf32>
    %207 = arith.mulf %170, %206 : vector<16x256xf32>
    %208 = arith.truncf %207 : vector<16x256xf32> to vector<16x256xbf16>
    %c0_78 = arith.constant 0 : index
    %c0_79 = arith.constant 0 : index
    %c0_80 = arith.constant 0 : index
    %209 = vector.load %arg18[%c0_78, %c0_79, %c0_80] : memref<1x256x64xbf16, #tpu.memory_space<vmem>>, vector<1x256x64xbf16>
    %210 = vector.shape_cast %209 : vector<1x256x64xbf16> to vector<256x64xbf16>
    %cst_81 = arith.constant dense<0.000000e+00> : vector<16x64xf32>
    %211 = tpu.matmul %208, %210, %cst_81 {dimension_numbers = #tpu.dot_dimension_numbers<[1], [0], [0], [1], [0, 0, 1, 1], [], []>} : vector<16x256xbf16>, vector<256x64xbf16>, vector<16x64xf32> -> vector<16x64xf32>
    %c0_82 = arith.constant 0 : index
    %c0_83 = arith.constant 0 : index
    %c0_84 = arith.constant 0 : index
    %212 = vector.load %arg19[%c0_82, %c0_83, %c0_84] : memref<1x1x64xf32, #tpu.memory_space<vmem>>, vector<1x1x64xf32>
    %213 = vector.shape_cast %212 : vector<1x1x64xf32> to vector<1x64xf32>
    %214 = vector.broadcast %213 : vector<1x64xf32> to vector<16x64xf32>
    %215 = arith.addf %211, %214 : vector<16x64xf32>
    %216 = arith.addf %134, %215 : vector<16x64xf32>
    %c0_85 = arith.constant 0 : index
    %c0_86 = arith.constant 0 : index
    %217 = vector.load %arg23[%c0_85, %c0_86] : memref<16x64xf32, #tpu.memory_space<vmem>>, vector<16x64xf32>
    tpu.vector_store %arg23[%c0_85, %c0_86], %216 {strides = array<i32>} : memref<16x64xf32, #tpu.memory_space<vmem>>, vector<16x64xf32>,
    %c1_i32 = arith.constant 1 : i32
    %218 = arith.cmpi slt, %arg0, %c1_i32 : i32
    %219 = arith.extui %218 : i1 to i32
    %c0_i32_87 = arith.constant 0 : i32
    %220 = arith.cmpi ne, %219, %c0_i32_87 : i32
    scf.if %220 {
      %cst_90 = arith.constant 0.000000e+00 : f32
      %224 = vector.broadcast %cst_90 : f32 to vector<16x64xf32>
      %225 = tpu.concatenate %216, %224 in 1 : vector<16x64xf32>, vector<16x64xf32> -> vector<16x128xf32>
      %c0_91 = arith.constant 0 : index
      %c0_92 = arith.constant 0 : index
      %c0_93 = arith.constant 0 : index
      %226 = vector.load %arg22[%c0_91, %c0_92, %c0_93] : memref<1x16x128xf32, #tpu.memory_space<vmem>>, vector<1x16x128xf32>
      %227 = vector.shape_cast %226 : vector<1x16x128xf32> to vector<16x128xf32>
      %228 = vector.shape_cast %225 : vector<16x128xf32> to vector<1x16x128xf32>
      tpu.vector_store %arg22[%c0_91, %c0_92, %c0_93], %228 {strides = array<i32>} : memref<1x16x128xf32, #tpu.memory_space<vmem>>, vector<1x16x128xf32>,
    } else {
    }
    %c1_i32_88 = arith.constant 1 : i32
    %221 = arith.cmpi eq, %arg0, %c1_i32_88 : i32
    %222 = arith.extui %221 : i1 to i32
    %c0_i32_89 = arith.constant 0 : i32
    %223 = arith.cmpi ne, %222, %c0_i32_89 : i32
    scf.if %223 {
      %c0_90 = arith.constant 0 : index
      %c0_91 = arith.constant 0 : index
      %224 = vector.load %arg20[%c0_90, %c0_91] : memref<1x64xf32, #tpu.memory_space<vmem>>, vector<1x64xf32>
      %c0_92 = arith.constant 0 : index
      %c0_93 = arith.constant 0 : index
      %225 = vector.load %arg21[%c0_92, %c0_93] : memref<1x64xf32, #tpu.memory_space<vmem>>, vector<1x64xf32>
      %cst_94 = arith.constant dense<0.000000e+00> : vector<16xf32>
      %226 = vector.multi_reduction <add>, %216, %cst_94 [1] : vector<16x64xf32> to vector<16xf32>
      %227 = vector.shape_cast %226 : vector<16xf32> to vector<16x1xf32>
      %cst_95 = arith.constant 6.400000e+01 : f32
      %228 = vector.broadcast %cst_95 : f32 to vector<16x1xf32>
      %229 = arith.divf %227, %228 : vector<16x1xf32>
      %230 = vector.broadcast %229 : vector<16x1xf32> to vector<16x64xf32>
      %231 = arith.subf %216, %230 : vector<16x64xf32>
      %232 = arith.mulf %231, %231 : vector<16x64xf32>
      %cst_96 = arith.constant dense<0.000000e+00> : vector<16xf32>
      %233 = vector.multi_reduction <add>, %232, %cst_96 [1] : vector<16x64xf32> to vector<16xf32>
      %234 = vector.shape_cast %233 : vector<16xf32> to vector<16x1xf32>
      %cst_97 = arith.constant 6.400000e+01 : f32
      %235 = vector.broadcast %cst_97 : f32 to vector<16x1xf32>
      %236 = arith.divf %234, %235 : vector<16x1xf32>
      %237 = vector.broadcast %229 : vector<16x1xf32> to vector<16x64xf32>
      %238 = arith.subf %216, %237 : vector<16x64xf32>
      %cst_98 = arith.constant 9.99999974E-6 : f32
      %239 = vector.broadcast %cst_98 : f32 to vector<16x1xf32>
      %240 = arith.addf %236, %239 : vector<16x1xf32>
      %241 = math.rsqrt %240 : vector<16x1xf32>
      %242 = vector.broadcast %241 : vector<16x1xf32> to vector<16x64xf32>
      %243 = arith.mulf %238, %242 : vector<16x64xf32>
      %244 = vector.broadcast %224 : vector<1x64xf32> to vector<16x64xf32>
      %245 = arith.mulf %243, %244 : vector<16x64xf32>
      %246 = vector.broadcast %225 : vector<1x64xf32> to vector<16x64xf32>
      %247 = arith.addf %245, %246 : vector<16x64xf32>
      %cst_99 = arith.constant 0.000000e+00 : f32
      %248 = vector.broadcast %cst_99 : f32 to vector<16x64xf32>
      %249 = tpu.concatenate %247, %248 in 1 : vector<16x64xf32>, vector<16x64xf32> -> vector<16x128xf32>
      %c0_100 = arith.constant 0 : index
      %c0_101 = arith.constant 0 : index
      %c0_102 = arith.constant 0 : index
      %250 = vector.load %arg22[%c0_100, %c0_101, %c0_102] : memref<1x16x128xf32, #tpu.memory_space<vmem>>, vector<1x16x128xf32>
      %251 = vector.shape_cast %250 : vector<1x16x128xf32> to vector<16x128xf32>
      %252 = vector.shape_cast %249 : vector<16x128xf32> to vector<1x16x128xf32>
      tpu.vector_store %arg22[%c0_100, %c0_101, %c0_102], %252 {strides = array<i32>} : memref<1x16x128xf32, #tpu.memory_space<vmem>>, vector<1x16x128xf32>,
    } else {
    }
    return
  }
  func.func @transform_0(%arg0: i32) -> (i32, i32) {
    %c0_i32 = arith.constant 0 : i32
    %c0_i32_0 = arith.constant 0 : i32
    %c0_i32_1 = arith.constant 0 : i32
    return %c0_i32, %c0_i32_0 : i32, i32
  }
  func.func @transform_1(%arg0: i32) -> (i32, i32) {
    %c0_i32 = arith.constant 0 : i32
    %c0_i32_0 = arith.constant 0 : i32
    %c0_i32_1 = arith.constant 0 : i32
    return %c0_i32, %c0_i32_0 : i32, i32
  }
  func.func @transform_2(%arg0: i32) -> (i32, i32) {
    %c0_i32 = arith.constant 0 : i32
    %c0_i32_0 = arith.constant 0 : i32
    %c0_i32_1 = arith.constant 0 : i32
    return %c0_i32, %c0_i32_0 : i32, i32
  }
  func.func @transform_3(%arg0: i32) -> (i32, i32) {
    %c0_i32 = arith.constant 0 : i32
    %c0_i32_0 = arith.constant 0 : i32
    %c0_i32_1 = arith.constant 0 : i32
    return %c0_i32, %c0_i32_0 : i32, i32
  }
  func.func @transform_4(%arg0: i32) -> (i32, i32) {
    %c0_i32 = arith.constant 0 : i32
    %c0_i32_0 = arith.constant 0 : i32
    %c0_i32_1 = arith.constant 0 : i32
    return %c0_i32, %c0_i32_0 : i32, i32
  }
  func.func @transform_5(%arg0: i32) -> (i32, i32) {
    %c0_i32 = arith.constant 0 : i32
    %c0_i32_0 = arith.constant 0 : i32
    %c0_i32_1 = arith.constant 0 : i32
    return %c0_i32, %c0_i32_0 : i32, i32
  }
  func.func @transform_6(%arg0: i32) -> (i32, i32) {
    %c0_i32 = arith.constant 0 : i32
    %c0_i32_0 = arith.constant 0 : i32
    %c0_i32_1 = arith.constant 0 : i32
    return %c0_i32, %c0_i32_0 : i32, i32
  }
  func.func @transform_7(%arg0: i32) -> (i32, i32, i32) {
    %c0_i32 = arith.constant 0 : i32
    %c0_i32_0 = arith.constant 0 : i32
    %c0_i32_1 = arith.constant 0 : i32
    return %arg0, %c0_i32, %c0_i32_0 : i32, i32, i32
  }
  func.func @transform_8(%arg0: i32) -> (i32, i32, i32) {
    %c0_i32 = arith.constant 0 : i32
    %c0_i32_0 = arith.constant 0 : i32
    %c0_i32_1 = arith.constant 0 : i32
    return %arg0, %c0_i32, %c0_i32_0 : i32, i32, i32
  }
  func.func @transform_9(%arg0: i32) -> (i32, i32, i32) {
    %c0_i32 = arith.constant 0 : i32
    %c0_i32_0 = arith.constant 0 : i32
    %c0_i32_1 = arith.constant 0 : i32
    return %arg0, %c0_i32, %c0_i32_0 : i32, i32, i32
  }
  func.func @transform_10(%arg0: i32) -> (i32, i32, i32) {
    %c0_i32 = arith.constant 0 : i32
    %c0_i32_0 = arith.constant 0 : i32
    %c0_i32_1 = arith.constant 0 : i32
    return %arg0, %c0_i32, %c0_i32_0 : i32, i32, i32
  }
  func.func @transform_11(%arg0: i32) -> (i32, i32, i32) {
    %c0_i32 = arith.constant 0 : i32
    %c0_i32_0 = arith.constant 0 : i32
    %c0_i32_1 = arith.constant 0 : i32
    return %arg0, %c0_i32, %c0_i32_0 : i32, i32, i32
  }
  func.func @transform_12(%arg0: i32) -> (i32, i32, i32) {
    %c0_i32 = arith.constant 0 : i32
    %c0_i32_0 = arith.constant 0 : i32
    %c0_i32_1 = arith.constant 0 : i32
    return %arg0, %c0_i32, %c0_i32_0 : i32, i32, i32
  }
  func.func @transform_13(%arg0: i32) -> (i32, i32, i32) {
    %c0_i32 = arith.constant 0 : i32
    %c0_i32_0 = arith.constant 0 : i32
    %c0_i32_1 = arith.constant 0 : i32
    return %arg0, %c0_i32, %c0_i32_0 : i32, i32, i32
  }
  func.func @transform_14(%arg0: i32) -> (i32, i32, i32) {
    %c0_i32 = arith.constant 0 : i32
    %c0_i32_0 = arith.constant 0 : i32
    %c0_i32_1 = arith.constant 0 : i32
    return %arg0, %c0_i32, %c0_i32_0 : i32, i32, i32
  }
  func.func @transform_15(%arg0: i32) -> (i32, i32, i32) {
    %c0_i32 = arith.constant 0 : i32
    %c0_i32_0 = arith.constant 0 : i32
    %c0_i32_1 = arith.constant 0 : i32
    return %arg0, %c0_i32, %c0_i32_0 : i32, i32, i32
  }
  func.func @transform_16(%arg0: i32) -> (i32, i32, i32) {
    %c0_i32 = arith.constant 0 : i32
    %c0_i32_0 = arith.constant 0 : i32
    %c0_i32_1 = arith.constant 0 : i32
    return %arg0, %c0_i32, %c0_i32_0 : i32, i32, i32
  }
  func.func @transform_17(%arg0: i32) -> (i32, i32, i32) {
    %c0_i32 = arith.constant 0 : i32
    %c0_i32_0 = arith.constant 0 : i32
    %c0_i32_1 = arith.constant 0 : i32
    return %arg0, %c0_i32, %c0_i32_0 : i32, i32, i32
  }
  func.func @transform_18(%arg0: i32) -> (i32, i32, i32) {
    %c0_i32 = arith.constant 0 : i32
    %c0_i32_0 = arith.constant 0 : i32
    %c0_i32_1 = arith.constant 0 : i32
    return %arg0, %c0_i32, %c0_i32_0 : i32, i32, i32
  }
  func.func @transform_19(%arg0: i32) -> (i32, i32) {
    %c0_i32 = arith.constant 0 : i32
    %c0_i32_0 = arith.constant 0 : i32
    %c0_i32_1 = arith.constant 0 : i32
    return %c0_i32, %c0_i32_0 : i32, i32
  }
  func.func @transform_20(%arg0: i32) -> (i32, i32) {
    %c0_i32 = arith.constant 0 : i32
    %c0_i32_0 = arith.constant 0 : i32
    %c0_i32_1 = arith.constant 0 : i32
    return %c0_i32, %c0_i32_0 : i32, i32
  }
  func.func @transform_21(%arg0: i32) -> (i32, i32, i32) {
    %c0_i32 = arith.constant 0 : i32
    %c0_i32_0 = arith.constant 0 : i32
    %c0_i32_1 = arith.constant 0 : i32
    return %arg0, %c0_i32, %c0_i32_0 : i32, i32, i32
  }
}

</mosaic_0001>

<llo_original>
// kernel: tpu_custom_call.1
$region0: #{tpu_custom_call.1}
  #allocation0 [shape = 'u32[]', space=smem, size = 0x4, offset = 0x4, fixed_abs, tag = 'smem constant byte address 0x4 - core index']
  #allocation1 [shape = 'u32[144,128]{1,0:T(1,128)}', space=vmem, size = 0x12000, scoped, tag = 'internal scratch']
  #allocation2 [shape = 'f32[16,64]{1,0:T(8,128)}', space=vmem, size = 0x2000, scoped, tag = 'scratch operand']
  #allocation3 [shape = 'f32[22,128]{1,0:T(8,128)}', space=vmem, size = 0x3000, scoped, tag = 'scratch operand']
  #allocation4 [shape = 'f32[22,64]{1,0:T(8,128)}', space=vmem, size = 0x3000, scoped, tag = 'scratch operand']
  %s0 = inlined_call_operand.hbm [shape: f32[20,256], index: 0, kind: input, shape index: {}]
  %s1 = inlined_call_operand.vmem [shape: f32[256,128], index: 1, kind: input, shape index: {}]
  %s2 = inlined_call_operand.vmem [shape: bf16[384,64], index: 2, kind: input, shape index: {}]
  %s3 = inlined_call_operand.vmem [shape: f32[1,64], index: 3, kind: input, shape index: {}]
  %s4 = inlined_call_operand.vmem [shape: bf16[192,64], index: 4, kind: input, shape index: {}]
  %s5 = inlined_call_operand.vmem [shape: f32[1,64], index: 5, kind: input, shape index: {}]
  %s6 = inlined_call_operand.vmem [shape: f32[10,64], index: 6, kind: input, shape index: {}]
  %s7 = inlined_call_operand.vmem [shape: f32[2,1,64], index: 7, kind: input, shape index: {}]
  %s8 = inlined_call_operand.vmem [shape: f32[2,1,64], index: 8, kind: input, shape index: {}]
  %s9 = inlined_call_operand.vmem [shape: bf16[2,64,192], index: 9, kind: input, shape index: {}]
  %s10 = inlined_call_operand.vmem [shape: f32[2,1,192], index: 10, kind: input, shape index: {}]
  %s11 = inlined_call_operand.vmem [shape: bf16[2,64,64], index: 11, kind: input, shape index: {}]
  %s12 = inlined_call_operand.vmem [shape: f32[2,1,64], index: 12, kind: input, shape index: {}]
  %s13 = inlined_call_operand.vmem [shape: f32[2,1,64], index: 13, kind: input, shape index: {}]
  %s14 = inlined_call_operand.vmem [shape: f32[2,1,64], index: 14, kind: input, shape index: {}]
  %s15 = inlined_call_operand.vmem [shape: bf16[2,64,256], index: 15, kind: input, shape index: {}]
  %s16 = inlined_call_operand.vmem [shape: f32[2,1,256], index: 16, kind: input, shape index: {}]
  %s17 = inlined_call_operand.vmem [shape: bf16[2,256,64], index: 17, kind: input, shape index: {}]
  %s18 = inlined_call_operand.vmem [shape: f32[2,1,64], index: 18, kind: input, shape index: {}]
  %s19 = inlined_call_operand.vmem [shape: f32[1,64], index: 19, kind: input, shape index: {}]
  %s20 = inlined_call_operand.vmem [shape: f32[1,64], index: 20, kind: input, shape index: {}]
  %s21 = inlined_call_operand.hbm [shape: f32[2,16,128], index: 21, kind: output, shape index: {}]
  %s22 = sld [smem:[#allocation0]]
  $region133: #{tpu_custom_call.1} parent=0
    _
  %s24 = ssub.s32 1, %s22
  %s25 = scalar_select 0, %s24, %s22
  $region1: #{tpu_custom_call.1} parent=0
    #allocation5 [shape = 'u8[24576]{0}', space=vmem, size = 0x6000, scoped, tag = 'input window, operand 0, single buffered']
    #allocation6 [shape = 's32[2]{0}', space=sflag, size = 0x8, scoped, tag = 'scoped memory for tpu_custom_call.1']
    #allocation7 [shape = 's32[2]{0}', space=sflag, size = 0x8, scoped, tag = 'scoped memory for tpu_custom_call.1']
    #allocation8 [shape = 'u8[16384]{0}', space=vmem, size = 0x4000, scoped, tag = 'output window, operand 0']
    %26 = vsyncpa [#allocation6], 0
    %27 = vsyncpa [#allocation7], 0
    %s28 = scalar_lea.sflag [#allocation7], 1
    %29 = vsyncpa %s28, 0
    loop: start=0, step=1, limit=4
    $region2: #{tpu_custom_call.1} parent=1 // loop_pre_header
      _
    $region3: #{tpu_custom_call.1} parent=1 // loop_header
      %s31 = sphi 0, %s35
      %p32 = scmp.ge.s32.totalorder %s31, 4
      %s39 = sphi 0, %s39
      %s41 = sphi 0, %s39
      %s42 = sphi 0, %s41
      %s56 = sphi 0, %s42
      %s60 = sphi 0, %s60
      %s62 = sphi 0, %s60
      %s63 = sphi 0, %s62
      %s77 = sphi 0, %s63
      %s81 = sphi 0, %s81
      %s83 = sphi 0, %s81
      %s84 = sphi 0, %s83
      %s98 = sphi 0, %s84
      %s102 = sphi 0, %s102
      %s104 = sphi 0, %s102
      %s105 = sphi 0, %s104
      %s119 = sphi 0, %s105
      %s123 = sphi 0, %s123
      %s125 = sphi 0, %s123
      %s126 = sphi 0, %s125
      %s140 = sphi 0, %s126
      %s144 = sphi 0, %s144
      %s146 = sphi 0, %s144
      %s147 = sphi 0, %s146
      %s161 = sphi 0, %s147
      %s165 = sphi 0, %s165
      %s167 = sphi 0, %s165
      %s168 = sphi 0, %s167
      %s182 = sphi 0, %s168
      %s188 = sphi 0, %s190
      %s191 = sphi 0, %s188
      %s192 = sphi 0, %s191
      %s208 = sphi 0, %s192
      %s214 = sphi 0, %s216
      %s217 = sphi 0, %s214
      %s218 = sphi 0, %s217
      %s234 = sphi 0, %s218
      %s240 = sphi 0, %s242
      %s243 = sphi 0, %s240
      %s244 = sphi 0, %s243
      %s260 = sphi 0, %s244
      %s266 = sphi 0, %s268
      %s269 = sphi 0, %s266
      %s270 = sphi 0, %s269
      %s286 = sphi 0, %s270
      %s292 = sphi 0, %s294
      %s295 = sphi 0, %s292
      %s296 = sphi 0, %s295
      %s312 = sphi 0, %s296
      %s318 = sphi 0, %s320
      %s321 = sphi 0, %s318
      %s322 = sphi 0, %s321
      %s338 = sphi 0, %s322
      %s344 = sphi 0, %s346
      %s347 = sphi 0, %s344
      %s348 = sphi 0, %s347
      %s364 = sphi 0, %s348
      %s370 = sphi 0, %s372
      %s373 = sphi 0, %s370
      %s374 = sphi 0, %s373
      %s390 = sphi 0, %s374
      %s396 = sphi 0, %s398
      %s399 = sphi 0, %s396
      %s400 = sphi 0, %s399
      %s416 = sphi 0, %s400
      %s422 = sphi 0, %s424
      %s425 = sphi 0, %s422
      %s426 = sphi 0, %s425
      %s442 = sphi 0, %s426
      %s448 = sphi 0, %s450
      %s451 = sphi 0, %s448
      %s452 = sphi 0, %s451
      %s468 = sphi 0, %s452
      %s474 = sphi 0, %s476
      %s477 = sphi 0, %s474
      %s478 = sphi 0, %s477
      %s494 = sphi 0, %s478
      %s498 = sphi 0, %s498
      %s500 = sphi 0, %s498
      %s501 = sphi 0, %s500
      %s515 = sphi 0, %s501
      %s519 = sphi 0, %s519
      %s521 = sphi 0, %s519
      %s522 = sphi 0, %s521
      %s536 = sphi 0, %s522
      %s542 = sphi 0, %s544
      %s545 = sphi 0, %s542
      %s546 = sphi 0, %s545
      %s562 = sphi 0, %s546
    $region4: #{tpu_custom_call.1} parent=1 // loop_header_branch
      %34 = sbr.rel (%p32) target = $region8
    $region5: #{tpu_custom_call.1} parent=1 // loop_body
      %s36 = ssub.s32 %s31, 1
      %s37 = ssub.s32 %s31, 2
      %s38 = sadd.s32 %s31, 1
      %s40 = sadd.s32 %s39, 1
      %p43 = scmp.eq.s32.totalorder %s31, 1
      %p44 = scmp.ne.s32.totalorder %s39, %s41
      %p45 = scmp.eq.s32.totalorder %s31, 0
      %p46 = por %p44, %p45
      %p47 = scmp.ne.s32.totalorder %s39, %s41
      %p48 = scmp.eq.s32.totalorder %s36, 1
      %p49 = por %p47, %p48
      %p50 = scmp.ne.s32.totalorder %s41, %s42
      %p51 = scmp.eq.s32.totalorder %s36, 0
      %p52 = por %p50, %p51
      %p53 = scmp.ne.s32.totalorder %s41, %s42
      %p54 = scmp.eq.s32.totalorder %s37, 1
      %p55 = por %p53, %p54
      %p57 = scmp.ne.s32.totalorder %s42, %s56
      %p58 = scmp.eq.s32.totalorder %s37, 0
      %p59 = por %p57, %p58
      %s61 = sadd.s32 %s60, 1
      %p64 = scmp.eq.s32.totalorder %s31, 1
      %p65 = scmp.ne.s32.totalorder %s60, %s62
      %p66 = scmp.eq.s32.totalorder %s31, 0
      %p67 = por %p65, %p66
      %p68 = scmp.ne.s32.totalorder %s60, %s62
      %p69 = scmp.eq.s32.totalorder %s36, 1
      %p70 = por %p68, %p69
      %p71 = scmp.ne.s32.totalorder %s62, %s63
      %p72 = scmp.eq.s32.totalorder %s36, 0
      %p73 = por %p71, %p72
      %p74 = scmp.ne.s32.totalorder %s62, %s63
      %p75 = scmp.eq.s32.totalorder %s37, 1
      %p76 = por %p74, %p75
      %p78 = scmp.ne.s32.totalorder %s63, %s77
      %p79 = scmp.eq.s32.totalorder %s37, 0
      %p80 = por %p78, %p79
      %s82 = sadd.s32 %s81, 1
      %p85 = scmp.eq.s32.totalorder %s31, 1
      %p86 = scmp.ne.s32.totalorder %s81, %s83
      %p87 = scmp.eq.s32.totalorder %s31, 0
      %p88 = por %p86, %p87
      %p89 = scmp.ne.s32.totalorder %s81, %s83
      %p90 = scmp.eq.s32.totalorder %s36, 1
      %p91 = por %p89, %p90
      %p92 = scmp.ne.s32.totalorder %s83, %s84
      %p93 = scmp.eq.s32.totalorder %s36, 0
      %p94 = por %p92, %p93
      %p95 = scmp.ne.s32.totalorder %s83, %s84
      %p96 = scmp.eq.s32.totalorder %s37, 1
      %p97 = por %p95, %p96
      %p99 = scmp.ne.s32.totalorder %s84, %s98
      %p100 = scmp.eq.s32.totalorder %s37, 0
      %p101 = por %p99, %p100
      %s103 = sadd.s32 %s102, 1
      %p106 = scmp.eq.s32.totalorder %s31, 1
      %p107 = scmp.ne.s32.totalorder %s102, %s104
      %p108 = scmp.eq.s32.totalorder %s31, 0
      %p109 = por %p107, %p108
      %p110 = scmp.ne.s32.totalorder %s102, %s104
      %p111 = scmp.eq.s32.totalorder %s36, 1
      %p112 = por %p110, %p111
      %p113 = scmp.ne.s32.totalorder %s104, %s105
      %p114 = scmp.eq.s32.totalorder %s36, 0
      %p115 = por %p113, %p114
      %p116 = scmp.ne.s32.totalorder %s104, %s105
      %p117 = scmp.eq.s32.totalorder %s37, 1
      %p118 = por %p116, %p117
      %p120 = scmp.ne.s32.totalorder %s105, %s119
      %p121 = scmp.eq.s32.totalorder %s37, 0
      %p122 = por %p120, %p121
      %s124 = sadd.s32 %s123, 1
      %p127 = scmp.eq.s32.totalorder %s31, 1
      %p128 = scmp.ne.s32.totalorder %s123, %s125
      %p129 = scmp.eq.s32.totalorder %s31, 0
      %p130 = por %p128, %p129
      %p131 = scmp.ne.s32.totalorder %s123, %s125
      %p132 = scmp.eq.s32.totalorder %s36, 1
      %p133 = por %p131, %p132
      %p134 = scmp.ne.s32.totalorder %s125, %s126
      %p135 = scmp.eq.s32.totalorder %s36, 0
      %p136 = por %p134, %p135
      %p137 = scmp.ne.s32.totalorder %s125, %s126
      %p138 = scmp.eq.s32.totalorder %s37, 1
      %p139 = por %p137, %p138
      %p141 = scmp.ne.s32.totalorder %s126, %s140
      %p142 = scmp.eq.s32.totalorder %s37, 0
      %p143 = por %p141, %p142
      %s145 = sadd.s32 %s144, 1
      %p148 = scmp.eq.s32.totalorder %s31, 1
      %p149 = scmp.ne.s32.totalorder %s144, %s146
      %p150 = scmp.eq.s32.totalorder %s31, 0
      %p151 = por %p149, %p150
      %p152 = scmp.ne.s32.totalorder %s144, %s146
      %p153 = scmp.eq.s32.totalorder %s36, 1
      %p154 = por %p152, %p153
      %p155 = scmp.ne.s32.totalorder %s146, %s147
      %p156 = scmp.eq.s32.totalorder %s36, 0
      %p157 = por %p155, %p156
      %p158 = scmp.ne.s32.totalorder %s146, %s147
      %p159 = scmp.eq.s32.totalorder %s37, 1
      %p160 = por %p158, %p159
      %p162 = scmp.ne.s32.totalorder %s147, %s161
      %p163 = scmp.eq.s32.totalorder %s37, 0
      %p164 = por %p162, %p163
      %s166 = sadd.s32 %s165, 1
      %p169 = scmp.eq.s32.totalorder %s31, 1
      %p170 = scmp.ne.s32.totalorder %s165, %s167
      %p171 = scmp.eq.s32.totalorder %s31, 0
      %p172 = por %p170, %p171
      %p173 = scmp.ne.s32.totalorder %s165, %s167
      %p174 = scmp.eq.s32.totalorder %s36, 1
      %p175 = por %p173, %p174
      %p176 = scmp.ne.s32.totalorder %s167, %s168
      %p177 = scmp.eq.s32.totalorder %s36, 0
      %p178 = por %p176, %p177
      %p179 = scmp.ne.s32.totalorder %s167, %s168
      %p180 = scmp.eq.s32.totalorder %s37, 1
      %p181 = por %p179, %p180
      %p183 = scmp.ne.s32.totalorder %s168, %s182
      %p184 = scmp.eq.s32.totalorder %s37, 0
      %p185 = por %p183, %p184
      %s186 = ssub.s32 %s31, %s38
      %p187 = scmp.eq.s32.totalorder %s186, 0
      %s189 = sadd.s32 %s188, 1
      %s190 = scalar_select %p187, %s188, %s189
      %p193 = pneg %p187
      %p194 = scmp.eq.s32.totalorder %s31, 1
      %p195 = por %p193, %p194
      %p196 = scmp.ne.s32.totalorder %s188, %s191
      %p197 = scmp.eq.s32.totalorder %s31, 0
      %p198 = por %p196, %p197
      %p199 = scmp.ne.s32.totalorder %s188, %s191
      %p200 = scmp.eq.s32.totalorder %s36, 1
      %p201 = por %p199, %p200
      %p202 = scmp.ne.s32.totalorder %s191, %s192
      %p203 = scmp.eq.s32.totalorder %s36, 0
      %p204 = por %p202, %p203
      %p205 = scmp.ne.s32.totalorder %s191, %s192
      %p206 = scmp.eq.s32.totalorder %s37, 1
      %p207 = por %p205, %p206
      %p209 = scmp.ne.s32.totalorder %s192, %s208
      %p210 = scmp.eq.s32.totalorder %s37, 0
      %p211 = por %p209, %p210
      %s212 = ssub.s32 %s31, %s38
      %p213 = scmp.eq.s32.totalorder %s212, 0
      %s215 = sadd.s32 %s214, 1
      %s216 = scalar_select %p213, %s214, %s215
      %p219 = pneg %p213
      %p220 = scmp.eq.s32.totalorder %s31, 1
      %p221 = por %p219, %p220
      %p222 = scmp.ne.s32.totalorder %s214, %s217
      %p223 = scmp.eq.s32.totalorder %s31, 0
      %p224 = por %p222, %p223
      %p225 = scmp.ne.s32.totalorder %s214, %s217
      %p226 = scmp.eq.s32.totalorder %s36, 1
      %p227 = por %p225, %p226
      %p228 = scmp.ne.s32.totalorder %s217, %s218
      %p229 = scmp.eq.s32.totalorder %s36, 0
      %p230 = por %p228, %p229
      %p231 = scmp.ne.s32.totalorder %s217, %s218
      %p232 = scmp.eq.s32.totalorder %s37, 1
      %p233 = por %p231, %p232
      %p235 = scmp.ne.s32.totalorder %s218, %s234
      %p236 = scmp.eq.s32.totalorder %s37, 0
      %p237 = por %p235, %p236
      %s238 = ssub.s32 %s31, %s38
      %p239 = scmp.eq.s32.totalorder %s238, 0
      %s241 = sadd.s32 %s240, 1
      %s242 = scalar_select %p239, %s240, %s241
      %p245 = pneg %p239
      %p246 = scmp.eq.s32.totalorder %s31, 1
      %p247 = por %p245, %p246
      %p248 = scmp.ne.s32.totalorder %s240, %s243
      %p249 = scmp.eq.s32.totalorder %s31, 0
      %p250 = por %p248, %p249
      %p251 = scmp.ne.s32.totalorder %s240, %s243
      %p252 = scmp.eq.s32.totalorder %s36, 1
      %p253 = por %p251, %p252
      %p254 = scmp.ne.s32.totalorder %s243, %s244
      %p255 = scmp.eq.s32.totalorder %s36, 0
      %p256 = por %p254, %p255
      %p257 = scmp.ne.s32.totalorder %s243, %s244
      %p258 = scmp.eq.s32.totalorder %s37, 1
      %p259 = por %p257, %p258
      %p261 = scmp.ne.s32.totalorder %s244, %s260
      %p262 = scmp.eq.s32.totalorder %s37, 0
      %p263 = por %p261, %p262
      %s264 = ssub.s32 %s31, %s38
      %p265 = scmp.eq.s32.totalorder %s264, 0
      %s267 = sadd.s32 %s266, 1
      %s268 = scalar_select %p265, %s266, %s267
      %p271 = pneg %p265
      %p272 = scmp.eq.s32.totalorder %s31, 1
      %p273 = por %p271, %p272
      %p274 = scmp.ne.s32.totalorder %s266, %s269
      %p275 = scmp.eq.s32.totalorder %s31, 0
      %p276 = por %p274, %p275
      %p277 = scmp.ne.s32.totalorder %s266, %s269
      %p278 = scmp.eq.s32.totalorder %s36, 1
      %p279 = por %p277, %p278
      %p280 = scmp.ne.s32.totalorder %s269, %s270
      %p281 = scmp.eq.s32.totalorder %s36, 0
      %p282 = por %p280, %p281
      %p283 = scmp.ne.s32.totalorder %s269, %s270
      %p284 = scmp.eq.s32.totalorder %s37, 1
      %p285 = por %p283, %p284
      %p287 = scmp.ne.s32.totalorder %s270, %s286
      %p288 = scmp.eq.s32.totalorder %s37, 0
      %p289 = por %p287, %p288
      %s290 = ssub.s32 %s31, %s38
      %p291 = scmp.eq.s32.totalorder %s290, 0
      %s293 = sadd.s32 %s292, 1
      %s294 = scalar_select %p291, %s292, %s293
      %p297 = pneg %p291
      %p298 = scmp.eq.s32.totalorder %s31, 1
      %p299 = por %p297, %p298
      %p300 = scmp.ne.s32.totalorder %s292, %s295
      %p301 = scmp.eq.s32.totalorder %s31, 0
      %p302 = por %p300, %p301
      %p303 = scmp.ne.s32.totalorder %s292, %s295
      %p304 = scmp.eq.s32.totalorder %s36, 1
      %p305 = por %p303, %p304
      %p306 = scmp.ne.s32.totalorder %s295, %s296
      %p307 = scmp.eq.s32.totalorder %s36, 0
      %p308 = por %p306, %p307
      %p309 = scmp.ne.s32.totalorder %s295, %s296
      %p310 = scmp.eq.s32.totalorder %s37, 1
      %p311 = por %p309, %p310
      %p313 = scmp.ne.s32.totalorder %s296, %s312
      %p314 = scmp.eq.s32.totalorder %s37, 0
      %p315 = por %p313, %p314
      %s316 = ssub.s32 %s31, %s38
      %p317 = scmp.eq.s32.totalorder %s316, 0
      %s319 = sadd.s32 %s318, 1
      %s320 = scalar_select %p317, %s318, %s319
      %p323 = pneg %p317
      %p324 = scmp.eq.s32.totalorder %s31, 1
      %p325 = por %p323, %p324
      %p326 = scmp.ne.s32.totalorder %s318, %s321
      %p327 = scmp.eq.s32.totalorder %s31, 0
      %p328 = por %p326, %p327
      %p329 = scmp.ne.s32.totalorder %s318, %s321
      %p330 = scmp.eq.s32.totalorder %s36, 1
      %p331 = por %p329, %p330
      %p332 = scmp.ne.s32.totalorder %s321, %s322
      %p333 = scmp.eq.s32.totalorder %s36, 0
      %p334 = por %p332, %p333
      %p335 = scmp.ne.s32.totalorder %s321, %s322
      %p336 = scmp.eq.s32.totalorder %s37, 1
      %p337 = por %p335, %p336
      %p339 = scmp.ne.s32.totalorder %s322, %s338
      %p340 = scmp.eq.s32.totalorder %s37, 0
      %p341 = por %p339, %p340
      %s342 = ssub.s32 %s31, %s38
      %p343 = scmp.eq.s32.totalorder %s342, 0
      %s345 = sadd.s32 %s344, 1
      %s346 = scalar_select %p343, %s344, %s345
      %p349 = pneg %p343
      %p350 = scmp.eq.s32.totalorder %s31, 1
      %p351 = por %p349, %p350
      %p352 = scmp.ne.s32.totalorder %s344, %s347
      %p353 = scmp.eq.s32.totalorder %s31, 0
      %p354 = por %p352, %p353
      %p355 = scmp.ne.s32.totalorder %s344, %s347
      %p356 = scmp.eq.s32.totalorder %s36, 1
      %p357 = por %p355, %p356
      %p358 = scmp.ne.s32.totalorder %s347, %s348
      %p359 = scmp.eq.s32.totalorder %s36, 0
      %p360 = por %p358, %p359
      %p361 = scmp.ne.s32.totalorder %s347, %s348
      %p362 = scmp.eq.s32.totalorder %s37, 1
      %p363 = por %p361, %p362
      %p365 = scmp.ne.s32.totalorder %s348, %s364
      %p366 = scmp.eq.s32.totalorder %s37, 0
      %p367 = por %p365, %p366
      %s368 = ssub.s32 %s31, %s38
      %p369 = scmp.eq.s32.totalorder %s368, 0
      %s371 = sadd.s32 %s370, 1
      %s372 = scalar_select %p369, %s370, %s371
      %p375 = pneg %p369
      %p376 = scmp.eq.s32.totalorder %s31, 1
      %p377 = por %p375, %p376
      %p378 = scmp.ne.s32.totalorder %s370, %s373
      %p379 = scmp.eq.s32.totalorder %s31, 0
      %p380 = por %p378, %p379
      %p381 = scmp.ne.s32.totalorder %s370, %s373
      %p382 = scmp.eq.s32.totalorder %s36, 1
      %p383 = por %p381, %p382
      %p384 = scmp.ne.s32.totalorder %s373, %s374
      %p385 = scmp.eq.s32.totalorder %s36, 0
      %p386 = por %p384, %p385
      %p387 = scmp.ne.s32.totalorder %s373, %s374
      %p388 = scmp.eq.s32.totalorder %s37, 1
      %p389 = por %p387, %p388
      %p391 = scmp.ne.s32.totalorder %s374, %s390
      %p392 = scmp.eq.s32.totalorder %s37, 0
      %p393 = por %p391, %p392
      %s394 = ssub.s32 %s31, %s38
      %p395 = scmp.eq.s32.totalorder %s394, 0
      %s397 = sadd.s32 %s396, 1
      %s398 = scalar_select %p395, %s396, %s397
      %p401 = pneg %p395
      %p402 = scmp.eq.s32.totalorder %s31, 1
      %p403 = por %p401, %p402
      %p404 = scmp.ne.s32.totalorder %s396, %s399
      %p405 = scmp.eq.s32.totalorder %s31, 0
      %p406 = por %p404, %p405
      %p407 = scmp.ne.s32.totalorder %s396, %s399
      %p408 = scmp.eq.s32.totalorder %s36, 1
      %p409 = por %p407, %p408
      %p410 = scmp.ne.s32.totalorder %s399, %s400
      %p411 = scmp.eq.s32.totalorder %s36, 0
      %p412 = por %p410, %p411
      %p413 = scmp.ne.s32.totalorder %s399, %s400
      %p414 = scmp.eq.s32.totalorder %s37, 1
      %p415 = por %p413, %p414
      %p417 = scmp.ne.s32.totalorder %s400, %s416
      %p418 = scmp.eq.s32.totalorder %s37, 0
      %p419 = por %p417, %p418
      %s420 = ssub.s32 %s31, %s38
      %p421 = scmp.eq.s32.totalorder %s420, 0
      %s423 = sadd.s32 %s422, 1
      %s424 = scalar_select %p421, %s422, %s423
      %p427 = pneg %p421
      %p428 = scmp.eq.s32.totalorder %s31, 1
      %p429 = por %p427, %p428
      %p430 = scmp.ne.s32.totalorder %s422, %s425
      %p431 = scmp.eq.s32.totalorder %s31, 0
      %p432 = por %p430, %p431
      %p433 = scmp.ne.s32.totalorder %s422, %s425
      %p434 = scmp.eq.s32.totalorder %s36, 1
      %p435 = por %p433, %p434
      %p436 = scmp.ne.s32.totalorder %s425, %s426
      %p437 = scmp.eq.s32.totalorder %s36, 0
      %p438 = por %p436, %p437
      %p439 = scmp.ne.s32.totalorder %s425, %s426
      %p440 = scmp.eq.s32.totalorder %s37, 1
      %p441 = por %p439, %p440
      %p443 = scmp.ne.s32.totalorder %s426, %s442
      %p444 = scmp.eq.s32.totalorder %s37, 0
      %p445 = por %p443, %p444
      %s446 = ssub.s32 %s31, %s38
      %p447 = scmp.eq.s32.totalorder %s446, 0
      %s449 = sadd.s32 %s448, 1
      %s450 = scalar_select %p447, %s448, %s449
      %p453 = pneg %p447
      %p454 = scmp.eq.s32.totalorder %s31, 1
      %p455 = por %p453, %p454
      %p456 = scmp.ne.s32.totalorder %s448, %s451
      %p457 = scmp.eq.s32.totalorder %s31, 0
      %p458 = por %p456, %p457
      %p459 = scmp.ne.s32.totalorder %s448, %s451
      %p460 = scmp.eq.s32.totalorder %s36, 1
      %p461 = por %p459, %p460
      %p462 = scmp.ne.s32.totalorder %s451, %s452
      %p463 = scmp.eq.s32.totalorder %s36, 0
      %p464 = por %p462, %p463
      %p465 = scmp.ne.s32.totalorder %s451, %s452
      %p466 = scmp.eq.s32.totalorder %s37, 1
      %p467 = por %p465, %p466
      %p469 = scmp.ne.s32.totalorder %s452, %s468
      %p470 = scmp.eq.s32.totalorder %s37, 0
      %p471 = por %p469, %p470
      %s472 = ssub.s32 %s31, %s38
      %p473 = scmp.eq.s32.totalorder %s472, 0
      %s475 = sadd.s32 %s474, 1
      %s476 = scalar_select %p473, %s474, %s475
      %p479 = pneg %p473
      %p480 = scmp.eq.s32.totalorder %s31, 1
      %p481 = por %p479, %p480
      %p482 = scmp.ne.s32.totalorder %s474, %s477
      %p483 = scmp.eq.s32.totalorder %s31, 0
      %p484 = por %p482, %p483
      %p485 = scmp.ne.s32.totalorder %s474, %s477
      %p486 = scmp.eq.s32.totalorder %s36, 1
      %p487 = por %p485, %p486
      %p488 = scmp.ne.s32.totalorder %s477, %s478
      %p489 = scmp.eq.s32.totalorder %s36, 0
      %p490 = por %p488, %p489
      %p491 = scmp.ne.s32.totalorder %s477, %s478
      %p492 = scmp.eq.s32.totalorder %s37, 1
      %p493 = por %p491, %p492
      %p495 = scmp.ne.s32.totalorder %s478, %s494
      %p496 = scmp.eq.s32.totalorder %s37, 0
      %p497 = por %p495, %p496
      %s499 = sadd.s32 %s498, 1
      %p502 = scmp.eq.s32.totalorder %s31, 1
      %p503 = scmp.ne.s32.totalorder %s498, %s500
      %p504 = scmp.eq.s32.totalorder %s31, 0
      %p505 = por %p503, %p504
      %p506 = scmp.ne.s32.totalorder %s498, %s500
      %p507 = scmp.eq.s32.totalorder %s36, 1
      %p508 = por %p506, %p507
      %p509 = scmp.ne.s32.totalorder %s500, %s501
      %p510 = scmp.eq.s32.totalorder %s36, 0
      %p511 = por %p509, %p510
      %p512 = scmp.ne.s32.totalorder %s500, %s501
      %p513 = scmp.eq.s32.totalorder %s37, 1
      %p514 = por %p512, %p513
      %p516 = scmp.ne.s32.totalorder %s501, %s515
      %p517 = scmp.eq.s32.totalorder %s37, 0
      %p518 = por %p516, %p517
      %s520 = sadd.s32 %s519, 1
      %p523 = scmp.eq.s32.totalorder %s31, 1
      %p524 = scmp.ne.s32.totalorder %s519, %s521
      %p525 = scmp.eq.s32.totalorder %s31, 0
      %p526 = por %p524, %p525
      %p527 = scmp.ne.s32.totalorder %s519, %s521
      %p528 = scmp.eq.s32.totalorder %s36, 1
      %p529 = por %p527, %p528
      %p530 = scmp.ne.s32.totalorder %s521, %s522
      %p531 = scmp.eq.s32.totalorder %s36, 0
      %p532 = por %p530, %p531
      %p533 = scmp.ne.s32.totalorder %s521, %s522
      %p534 = scmp.eq.s32.totalorder %s37, 1
      %p535 = por %p533, %p534
      %p537 = scmp.ne.s32.totalorder %s522, %s536
      %p538 = scmp.eq.s32.totalorder %s37, 0
      %p539 = por %p537, %p538
      %s540 = ssub.s32 %s31, %s38
      %p541 = scmp.eq.s32.totalorder %s540, 0
      %s543 = sadd.s32 %s542, 1
      %s544 = scalar_select %p541, %s542, %s543
      %p547 = pneg %p541
      %p548 = scmp.eq.s32.totalorder %s31, 1
      %p549 = por %p547, %p548
      %p550 = scmp.ne.s32.totalorder %s542, %s545
      %p551 = scmp.eq.s32.totalorder %s31, 0
      %p552 = por %p550, %p551
      %p553 = scmp.ne.s32.totalorder %s542, %s545
      %p554 = scmp.eq.s32.totalorder %s36, 1
      %p555 = por %p553, %p554
      %p556 = scmp.ne.s32.totalorder %s545, %s546
      %p557 = scmp.eq.s32.totalorder %s36, 0
      %p558 = por %p556, %p557
      %p559 = scmp.ne.s32.totalorder %s545, %s546
      %p560 = scmp.eq.s32.totalorder %s37, 1
      %p561 = por %p559, %p560
      %p563 = scmp.ne.s32.totalorder %s546, %s562
      %p564 = scmp.eq.s32.totalorder %s37, 0
      %p565 = por %p563, %p564
      %p566 = scmp.le.s32.totalorder 1, %s31
      %p567 = scmp.lt.s32.totalorder %s31, 3
      %p568 = pnand %p566, %p567
      %p569 = pneg %p568
      // Predicated region
      $region9: #{tpu_custom_call.1} parent=5 // pred_check
        _
      $region10: #{tpu_custom_call.1} parent=5 // pred_check_branch
        %571 = sbr.rel (%p568) target = $region12
      $region11: #{tpu_custom_call.1} parent=5 // pred_region
        %s572 = ssub.s32 %s31, 1
        // Predicated region
        $region13: #{tpu_custom_call.1} parent=11 // pred_check
          %p573 = pneg %p52
        $region14: #{tpu_custom_call.1} parent=11 // pred_check_branch
          %575 = sbr.rel (%p573) target = $region16
        $region15: #{tpu_custom_call.1} parent=11 // pred_region
          %s577 = ssub.s32 768, 768
          %578 = vsyncadd [#allocation6], %s577
          %s579 = sshll.u32 [#allocation5], 4
          %s580 = int_to_ptr.vmem [resolvable:$true] %s579
          %585 = dma.hbm_to_vmem [thread:$0]  %s0, 768, %s580, [#allocation6], 256, 256, 16
        $region16: #{tpu_custom_call.1} parent=11 // pred_fallthru
          _
        // Predicated region
        $region17: #{tpu_custom_call.1} parent=11 // pred_check
          %p586 = pneg %p73
        $region18: #{tpu_custom_call.1} parent=11 // pred_check_branch
          %588 = sbr.rel (%p586) target = $region20
        $region19: #{tpu_custom_call.1} parent=11 // pred_region
          _
        $region20: #{tpu_custom_call.1} parent=11 // pred_fallthru
          _
        // Predicated region
        $region21: #{tpu_custom_call.1} parent=11 // pred_check
          %p589 = pneg %p94
        $region22: #{tpu_custom_call.1} parent=11 // pred_check_branch
          %591 = sbr.rel (%p589) target = $region24
        $region23: #{tpu_custom_call.1} parent=11 // pred_region
          _
        $region24: #{tpu_custom_call.1} parent=11 // pred_fallthru
          _
        // Predicated region
        $region25: #{tpu_custom_call.1} parent=11 // pred_check
          %p592 = pneg %p115
        $region26: #{tpu_custom_call.1} parent=11 // pred_check_branch
          %594 = sbr.rel (%p592) target = $region28
        $region27: #{tpu_custom_call.1} parent=11 // pred_region
          _
        $region28: #{tpu_custom_call.1} parent=11 // pred_fallthru
          _
        // Predicated region
        $region29: #{tpu_custom_call.1} parent=11 // pred_check
          %p595 = pneg %p136
        $region30: #{tpu_custom_call.1} parent=11 // pred_check_branch
          %597 = sbr.rel (%p595) target = $region32
        $region31: #{tpu_custom_call.1} parent=11 // pred_region
          _
        $region32: #{tpu_custom_call.1} parent=11 // pred_fallthru
          _
        // Predicated region
        $region33: #{tpu_custom_call.1} parent=11 // pred_check
          %p598 = pneg %p157
        $region34: #{tpu_custom_call.1} parent=11 // pred_check_branch
          %600 = sbr.rel (%p598) target = $region36
        $region35: #{tpu_custom_call.1} parent=11 // pred_region
          _
        $region36: #{tpu_custom_call.1} parent=11 // pred_fallthru
          _
        // Predicated region
        $region37: #{tpu_custom_call.1} parent=11 // pred_check
          %p601 = pneg %p178
        $region38: #{tpu_custom_call.1} parent=11 // pred_check_branch
          %603 = sbr.rel (%p601) target = $region40
        $region39: #{tpu_custom_call.1} parent=11 // pred_region
          _
        $region40: #{tpu_custom_call.1} parent=11 // pred_fallthru
          _
        // Predicated region
        $region41: #{tpu_custom_call.1} parent=11 // pred_check
          %p604 = pneg %p511
        $region42: #{tpu_custom_call.1} parent=11 // pred_check_branch
          %606 = sbr.rel (%p604) target = $region44
        $region43: #{tpu_custom_call.1} parent=11 // pred_region
          _
        $region44: #{tpu_custom_call.1} parent=11 // pred_fallthru
          _
        // Predicated region
        $region45: #{tpu_custom_call.1} parent=11 // pred_check
          %p607 = pneg %p532
        $region46: #{tpu_custom_call.1} parent=11 // pred_check_branch
          %609 = sbr.rel (%p607) target = $region48
        $region47: #{tpu_custom_call.1} parent=11 // pred_region
          _
        $region48: #{tpu_custom_call.1} parent=11 // pred_fallthru
          _
      $region12: #{tpu_custom_call.1} parent=5 // pred_fallthru
        _
      %p610 = scmp.lt.s32.totalorder %s31, 2
      // Predicated region
      $region49: #{tpu_custom_call.1} parent=5 // pred_check
        %p611 = pneg %p610
      $region50: #{tpu_custom_call.1} parent=5 // pred_check_branch
        %613 = sbr.rel (%p611) target = $region52
      $region51: #{tpu_custom_call.1} parent=5 // pred_region
        // Predicated region
        $region53: #{tpu_custom_call.1} parent=51 // pred_check
          %p614 = pneg %p198
        $region54: #{tpu_custom_call.1} parent=51 // pred_check_branch
          %616 = sbr.rel (%p614) target = $region56
        $region55: #{tpu_custom_call.1} parent=51 // pred_region
          %p617 = scmp.lt.s32.totalorder %s31, 1
          %s618 = scalar_select %p617, %s31, 1
          %s619 = scalar_lea.vmem %s7, %s618
        $region56: #{tpu_custom_call.1} parent=51 // pred_fallthru
          _
        // Predicated region
        $region57: #{tpu_custom_call.1} parent=51 // pred_check
          %p620 = pneg %p224
        $region58: #{tpu_custom_call.1} parent=51 // pred_check_branch
          %622 = sbr.rel (%p620) target = $region60
        $region59: #{tpu_custom_call.1} parent=51 // pred_region
          %p623 = scmp.lt.s32.totalorder %s31, 1
          %s624 = scalar_select %p623, %s31, 1
          %s625 = scalar_lea.vmem %s8, %s624
        $region60: #{tpu_custom_call.1} parent=51 // pred_fallthru
          _
        // Predicated region
        $region61: #{tpu_custom_call.1} parent=51 // pred_check
          %p626 = pneg %p250
        $region62: #{tpu_custom_call.1} parent=51 // pred_check_branch
          %628 = sbr.rel (%p626) target = $region64
        $region63: #{tpu_custom_call.1} parent=51 // pred_region
          %p629 = scmp.lt.s32.totalorder %s31, 1
          %s630 = scalar_select %p629, %s31, 1
          %s631 = smul.addr %s630, 16
          %s632 = smul.addr %s631, 4
          %s633 = scalar_lea.vmem %s9, %s632
        $region64: #{tpu_custom_call.1} parent=51 // pred_fallthru
          _
        // Predicated region
        $region65: #{tpu_custom_call.1} parent=51 // pred_check
          %p634 = pneg %p276
        $region66: #{tpu_custom_call.1} parent=51 // pred_check_branch
          %636 = sbr.rel (%p634) target = $region68
        $region67: #{tpu_custom_call.1} parent=51 // pred_region
          %p637 = scmp.lt.s32.totalorder %s31, 1
          %s638 = scalar_select %p637, %s31, 1
          %s639 = smul.addr %s638, 2
          %s640 = scalar_lea.vmem %s10, %s639
        $region68: #{tpu_custom_call.1} parent=51 // pred_fallthru
          _
        // Predicated region
        $region69: #{tpu_custom_call.1} parent=51 // pred_check
          %p641 = pneg %p302
        $region70: #{tpu_custom_call.1} parent=51 // pred_check_branch
          %643 = sbr.rel (%p641) target = $region72
        $region71: #{tpu_custom_call.1} parent=51 // pred_region
          %p644 = scmp.lt.s32.totalorder %s31, 1
          %s645 = scalar_select %p644, %s31, 1
          %s646 = smul.addr %s645, 8
          %s647 = smul.addr %s646, 4
          %s648 = scalar_lea.vmem %s11, %s647
        $region72: #{tpu_custom_call.1} parent=51 // pred_fallthru
          _
        // Predicated region
        $region73: #{tpu_custom_call.1} parent=51 // pred_check
          %p649 = pneg %p328
        $region74: #{tpu_custom_call.1} parent=51 // pred_check_branch
          %651 = sbr.rel (%p649) target = $region76
        $region75: #{tpu_custom_call.1} parent=51 // pred_region
          %p652 = scmp.lt.s32.totalorder %s31, 1
          %s653 = scalar_select %p652, %s31, 1
          %s654 = scalar_lea.vmem %s12, %s653
        $region76: #{tpu_custom_call.1} parent=51 // pred_fallthru
          _
        // Predicated region
        $region77: #{tpu_custom_call.1} parent=51 // pred_check
          %p655 = pneg %p354
        $region78: #{tpu_custom_call.1} parent=51 // pred_check_branch
          %657 = sbr.rel (%p655) target = $region80
        $region79: #{tpu_custom_call.1} parent=51 // pred_region
          %p658 = scmp.lt.s32.totalorder %s31, 1
          %s659 = scalar_select %p658, %s31, 1
          %s660 = scalar_lea.vmem %s13, %s659
        $region80: #{tpu_custom_call.1} parent=51 // pred_fallthru
          _
        // Predicated region
        $region81: #{tpu_custom_call.1} parent=51 // pred_check
          %p661 = pneg %p380
        $region82: #{tpu_custom_call.1} parent=51 // pred_check_branch
          %663 = sbr.rel (%p661) target = $region84
        $region83: #{tpu_custom_call.1} parent=51 // pred_region
          %p664 = scmp.lt.s32.totalorder %s31, 1
          %s665 = scalar_select %p664, %s31, 1
          %s666 = scalar_lea.vmem %s14, %s665
        $region84: #{tpu_custom_call.1} parent=51 // pred_fallthru
          _
        // Predicated region
        $region85: #{tpu_custom_call.1} parent=51 // pred_check
          %p667 = pneg %p406
        $region86: #{tpu_custom_call.1} parent=51 // pred_check_branch
          %669 = sbr.rel (%p667) target = $region88
        $region87: #{tpu_custom_call.1} parent=51 // pred_region
          %p670 = scmp.lt.s32.totalorder %s31, 1
          %s671 = scalar_select %p670, %s31, 1
          %s672 = smul.addr %s671, 16
          %s673 = smul.addr %s672, 4
          %s674 = scalar_lea.vmem %s15, %s673
        $region88: #{tpu_custom_call.1} parent=51 // pred_fallthru
          _
        // Predicated region
        $region89: #{tpu_custom_call.1} parent=51 // pred_check
          %p675 = pneg %p432
        $region90: #{tpu_custom_call.1} parent=51 // pred_check_branch
          %677 = sbr.rel (%p675) target = $region92
        $region91: #{tpu_custom_call.1} parent=51 // pred_region
          %p678 = scmp.lt.s32.totalorder %s31, 1
          %s679 = scalar_select %p678, %s31, 1
          %s680 = smul.addr %s679, 2
          %s681 = scalar_lea.vmem %s16, %s680
        $region92: #{tpu_custom_call.1} parent=51 // pred_fallthru
          _
        // Predicated region
        $region93: #{tpu_custom_call.1} parent=51 // pred_check
          %p682 = pneg %p458
        $region94: #{tpu_custom_call.1} parent=51 // pred_check_branch
          %684 = sbr.rel (%p682) target = $region96
        $region95: #{tpu_custom_call.1} parent=51 // pred_region
          %p685 = scmp.lt.s32.totalorder %s31, 1
          %s686 = scalar_select %p685, %s31, 1
          %s687 = smul.addr %s686, 32
          %s688 = smul.addr %s687, 4
          %s689 = scalar_lea.vmem %s17, %s688
        $region96: #{tpu_custom_call.1} parent=51 // pred_fallthru
          _
        // Predicated region
        $region97: #{tpu_custom_call.1} parent=51 // pred_check
          %p690 = pneg %p484
        $region98: #{tpu_custom_call.1} parent=51 // pred_check_branch
          %692 = sbr.rel (%p690) target = $region100
        $region99: #{tpu_custom_call.1} parent=51 // pred_region
          %p693 = scmp.lt.s32.totalorder %s31, 1
          %s694 = scalar_select %p693, %s31, 1
          %s695 = scalar_lea.vmem %s18, %s694
        $region100: #{tpu_custom_call.1} parent=51 // pred_fallthru
          _
      $region52: #{tpu_custom_call.1} parent=5 // pred_fallthru
        _
      %p696 = scmp.le.s32.totalorder 1, %s31
      %p697 = scmp.lt.s32.totalorder %s31, 3
      %p698 = pnand %p696, %p697
      %p699 = pneg %p698
      // Predicated region
      $region101: #{tpu_custom_call.1} parent=5 // pred_check
        _
      $region102: #{tpu_custom_call.1} parent=5 // pred_check_branch
        %701 = sbr.rel (%p698) target = $region104
      $region103: #{tpu_custom_call.1} parent=5 // pred_region
        %s702 = ssub.s32 %s31, 1
        // Predicated region
        $region105: #{tpu_custom_call.1} parent=103 // pred_check
          %p703 = pneg %p52
        $region106: #{tpu_custom_call.1} parent=103 // pred_check_branch
          %705 = sbr.rel (%p703) target = $region108
        $region107: #{tpu_custom_call.1} parent=103 // pred_region
          %706 = dma.done [#allocation6], 768
        $region108: #{tpu_custom_call.1} parent=103 // pred_fallthru
          _
        %p707 = pneg %p52
        %p708 = pneg %p49
        %p709 = pneg %p73
        %p710 = pneg %p70
        %p711 = pneg %p94
        %p712 = pneg %p91
        %p713 = pneg %p115
        %p714 = pneg %p112
        %p715 = pneg %p136
        %p716 = pneg %p133
        %p717 = pneg %p157
        %p718 = pneg %p154
        %p719 = pneg %p178
        %p720 = pneg %p175
        %p721 = scmp.lt.s32.totalorder %s36, 1
        %s722 = scalar_select %p721, %s36, 1
        %s723 = scalar_lea.vmem %s7, %s722
        %p724 = pneg %p204
        %p725 = pneg %p201
        %p726 = scmp.lt.s32.totalorder %s36, 1
        %s727 = scalar_select %p726, %s36, 1
        %s728 = scalar_lea.vmem %s8, %s727
        %p729 = pneg %p230
        %p730 = pneg %p227
        %p731 = scmp.lt.s32.totalorder %s36, 1
        %s732 = scalar_select %p731, %s36, 1
        %s733 = smul.addr %s732, 16
        %s734 = smul.addr %s733, 4
        %s735 = scalar_lea.vmem %s9, %s734
        %p736 = pneg %p256
        %p737 = pneg %p253
        %p738 = scmp.lt.s32.totalorder %s36, 1
        %s739 = scalar_select %p738, %s36, 1
        %s740 = smul.addr %s739, 2
        %s741 = scalar_lea.vmem %s10, %s740
        %p742 = pneg %p282
        %p743 = pneg %p279
        %p744 = scmp.lt.s32.totalorder %s36, 1
        %s745 = scalar_select %p744, %s36, 1
        %s746 = smul.addr %s745, 8
        %s747 = smul.addr %s746, 4
        %s748 = scalar_lea.vmem %s11, %s747
        %p749 = pneg %p308
        %p750 = pneg %p305
        %p751 = scmp.lt.s32.totalorder %s36, 1
        %s752 = scalar_select %p751, %s36, 1
        %s753 = scalar_lea.vmem %s12, %s752
        %p754 = pneg %p334
        %p755 = pneg %p331
        %p756 = scmp.lt.s32.totalorder %s36, 1
        %s757 = scalar_select %p756, %s36, 1
        %s758 = scalar_lea.vmem %s13, %s757
        %p759 = pneg %p360
        %p760 = pneg %p357
        %p761 = scmp.lt.s32.totalorder %s36, 1
        %s762 = scalar_select %p761, %s36, 1
        %s763 = scalar_lea.vmem %s14, %s762
        %p764 = pneg %p386
        %p765 = pneg %p383
        %p766 = scmp.lt.s32.totalorder %s36, 1
        %s767 = scalar_select %p766, %s36, 1
        %s768 = smul.addr %s767, 16
        %s769 = smul.addr %s768, 4
        %s770 = scalar_lea.vmem %s15, %s769
        %p771 = pneg %p412
        %p772 = pneg %p409
        %p773 = scmp.lt.s32.totalorder %s36, 1
        %s774 = scalar_select %p773, %s36, 1
        %s775 = smul.addr %s774, 2
        %s776 = scalar_lea.vmem %s16, %s775
        %p777 = pneg %p438
        %p778 = pneg %p435
        %p779 = scmp.lt.s32.totalorder %s36, 1
        %s780 = scalar_select %p779, %s36, 1
        %s781 = smul.addr %s780, 32
        %s782 = smul.addr %s781, 4
        %s783 = scalar_lea.vmem %s17, %s782
        %p784 = pneg %p464
        %p785 = pneg %p461
        %p786 = scmp.lt.s32.totalorder %s36, 1
        %s787 = scalar_select %p786, %s36, 1
        %s788 = scalar_lea.vmem %s18, %s787
        %p789 = pneg %p490
        %p790 = pneg %p487
        %p791 = pneg %p511
        %p792 = pneg %p508
        %p793 = pneg %p532
        %p794 = pneg %p529
        %p795 = pneg %p558
        %p796 = pneg %p555
        %s797 = sand.u32 %s545, 1
        %s798 = scalar_lea.sflag [#allocation7], %s797
        %s799 = sand.u32 %s545, 1
        %s800 = smul.addr %s799, 16
        %s801 = scalar_lea.vmem [#allocation8], %s800
        %p802 = scmp.lt.s32.totalorder %s36, 1
        %s803 = scalar_select %p802, %s36, 1
        %s804 = scalar_lea.vmem %s7, %s803
        %p805 = scmp.lt.s32.totalorder %s36, 1
        %s806 = scalar_select %p805, %s36, 1
        %s807 = scalar_lea.vmem %s8, %s806
        %p808 = scmp.lt.s32.totalorder %s36, 1
        %s809 = scalar_select %p808, %s36, 1
        %s810 = smul.addr %s809, 16
        %s811 = smul.addr %s810, 4
        %s812 = scalar_lea.vmem %s9, %s811
        %p813 = scmp.lt.s32.totalorder %s36, 1
        %s814 = scalar_select %p813, %s36, 1
        %s815 = smul.addr %s814, 2
        %s816 = scalar_lea.vmem %s10, %s815
        %p817 = scmp.lt.s32.totalorder %s36, 1
        %s818 = scalar_select %p817, %s36, 1
        %s819 = smul.addr %s818, 8
        %s820 = smul.addr %s819, 4
        %s821 = scalar_lea.vmem %s11, %s820
        %p822 = scmp.lt.s32.totalorder %s36, 1
        %s823 = scalar_select %p822, %s36, 1
        %s824 = scalar_lea.vmem %s12, %s823
        %p825 = scmp.lt.s32.totalorder %s36, 1
        %s826 = scalar_select %p825, %s36, 1
        %s827 = scalar_lea.vmem %s13, %s826
        %p828 = scmp.lt.s32.totalorder %s36, 1
        %s829 = scalar_select %p828, %s36, 1
        %s830 = scalar_lea.vmem %s14, %s829
        %p831 = scmp.lt.s32.totalorder %s36, 1
        %s832 = scalar_select %p831, %s36, 1
        %s833 = smul.addr %s832, 16
        %s834 = smul.addr %s833, 4
        %s835 = scalar_lea.vmem %s15, %s834
        %p836 = scmp.lt.s32.totalorder %s36, 1
        %s837 = scalar_select %p836, %s36, 1
        %s838 = smul.addr %s837, 2
        %s839 = scalar_lea.vmem %s16, %s838
        %p840 = scmp.lt.s32.totalorder %s36, 1
        %s841 = scalar_select %p840, %s36, 1
        %s842 = smul.addr %s841, 32
        %s843 = smul.addr %s842, 4
        %s844 = scalar_lea.vmem %s17, %s843
        %p845 = scmp.lt.s32.totalorder %s36, 1
        %s846 = scalar_select %p845, %s36, 1
        %s847 = scalar_lea.vmem %s18, %s846
        %p849 = scmp.eq.s32.totalorder %s36, 0
        // Predicated region
        $region109: #{tpu_custom_call.1} parent=103 // pred_check
          %p850 = pneg %p849
        $region110: #{tpu_custom_call.1} parent=103 // pred_check_branch
          %852 = sbr.rel (%p850) target = $region112
        $region111: #{tpu_custom_call.1} parent=103 // pred_region
          %v853 = vld [vmem:[#allocation5] sm:$0xff]
          %v854 = vld [vmem:[#allocation5 + $0x8] sm:$0xff]
          %v855 = vld [vmem:[#allocation5 + $0x10] sm:$0xff]
          %v856 = vld [vmem:[#allocation5 + $0x18] sm:$0xff]
          %v857 = vld [vmem:[#allocation5 + $0x20] sm:$0xf]
          %v858 = vld [vmem:[#allocation5 + $0x28] sm:$0xf]
          %v859 = vld [vmem:[%s1] sm:$0xff]
          %v860 = vld [vmem:[%s1 + $0x8] sm:$0xff]
          %v861 = vld [vmem:[%s1 + $0x10] sm:$0xff]
          %v862 = vld [vmem:[%s1 + $0x18] sm:$0xff]
          %v863 = vld [vmem:[%s1 + $0x20] sm:$0xff]
          %v864 = vld [vmem:[%s1 + $0x28] sm:$0xff]
          %v865 = vld [vmem:[%s1 + $0x30] sm:$0xff]
          %v866 = vld [vmem:[%s1 + $0x38] sm:$0xff]
          %v867 = vld [vmem:[%s1 + $0x40] sm:$0xff]
          %v868 = vld [vmem:[%s1 + $0x48] sm:$0xff]
          %v869 = vld [vmem:[%s1 + $0x50] sm:$0xff]
          %v870 = vld [vmem:[%s1 + $0x58] sm:$0xff]
          %v871 = vld [vmem:[%s1 + $0x60] sm:$0xff]
          %v872 = vld [vmem:[%s1 + $0x68] sm:$0xff]
          %v873 = vld [vmem:[%s1 + $0x70] sm:$0xff]
          %v874 = vld [vmem:[%s1 + $0x78] sm:$0xff]
          %v875 = vld [vmem:[%s1 + $0x80] sm:$0xff]
          %v876 = vld [vmem:[%s1 + $0x88] sm:$0xff]
          %v877 = vld [vmem:[%s1 + $0x90] sm:$0xff]
          %v878 = vld [vmem:[%s1 + $0x98] sm:$0xff]
          %v879 = vld [vmem:[%s1 + $0xa0] sm:$0xff]
          %v880 = vld [vmem:[%s1 + $0xa8] sm:$0xff]
          %v881 = vld [vmem:[%s1 + $0xb0] sm:$0xff]
          %v882 = vld [vmem:[%s1 + $0xb8] sm:$0xff]
          %v883 = vld [vmem:[%s1 + $0xc0] sm:$0xff]
          %v884 = vld [vmem:[%s1 + $0xc8] sm:$0xff]
          %v885 = vld [vmem:[%s1 + $0xd0] sm:$0xff]
          %v886 = vld [vmem:[%s1 + $0xd8] sm:$0xff]
          %v887 = vld [vmem:[%s1 + $0xe0] sm:$0xff]
          %v888 = vld [vmem:[%s1 + $0xe8] sm:$0xff]
          %v889 = vld [vmem:[%s1 + $0xf0] sm:$0xff]
          %v890 = vld [vmem:[%s1 + $0xf8] sm:$0xff]
          %891 = vmatprep.subr.mxu0 0.0
          %892 = vmatpush1.msra.mxu0 %v859
          %893 = vmatprep.subr.mxu0 0.0
          %894 = vmatpush1.msra.mxu0 %v860
          %895 = vmatprep.subr.mxu0 0.0
          %896 = vmatpush1.msra.mxu0 %v861
          %897 = vmatprep.subr.mxu0 0.0
          %898 = vmatpush1.msra.mxu0 %v862
          %899 = vmatprep.subr.mxu0 0.0
          %900 = vmatpush1.msra.mxu0 %v863
          %901 = vmatprep.subr.mxu0 0.0
          %902 = vmatpush1.msra.mxu0 %v864
          %903 = vmatprep.subr.mxu0 0.0
          %904 = vmatpush1.msra.mxu0 %v865
          %905 = vmatprep.subr.mxu0 0.0
          %906 = vmatpush1.msra.mxu0 %v866
          %907 = vmatprep.subr.mxu0 0.0
          %908 = vmatpush1.msra.mxu0 %v867
          %909 = vmatprep.subr.mxu0 0.0
          %910 = vmatpush1.msra.mxu0 %v868
          %911 = vmatprep.subr.mxu0 0.0
          %912 = vmatpush1.msra.mxu0 %v869
          %913 = vmatprep.subr.mxu0 0.0
          %914 = vmatpush1.msra.mxu0 %v870
          %915 = vmatprep.subr.mxu0 0.0
          %916 = vmatpush1.msra.mxu0 %v871
          %917 = vmatprep.subr.mxu0 0.0
          %918 = vmatpush1.msra.mxu0 %v872
          %919 = vmatprep.subr.mxu0 0.0
          %920 = vmatpush1.msra.mxu0 %v873
          %921 = vmatprep.subr.mxu0 0.0
          %922 = vmatpush1.msra.mxu0 %v874
          %923 = vmatprep.subr.mxu0 0.0
          %924 = vmatpush1.msra.mxu0 %v875
          %925 = vmatprep.subr.mxu0 0.0
          %926 = vmatpush1.msra.mxu0 %v876
          %927 = vmatprep.subr.mxu0 0.0
          %928 = vmatpush1.msra.mxu0 %v877
          %929 = vmatprep.subr.mxu0 0.0
          %930 = vmatpush1.msra.mxu0 %v878
          %931 = vmatprep.subr.mxu0 0.0
          %932 = vmatpush1.msra.mxu0 %v879
          %933 = vmatprep.subr.mxu0 0.0
          %934 = vmatpush1.msra.mxu0 %v880
          %935 = vmatprep.subr.mxu0 0.0
          %936 = vmatpush1.msra.mxu0 %v881
          %937 = vmatprep.subr.mxu0 0.0
          %938 = vmatpush1.msra.mxu0 %v882
          %939 = vmatprep.subr.mxu0 0.0
          %940 = vmatpush1.msra.mxu0 %v883
          %941 = vmatprep.subr.mxu0 0.0
          %942 = vmatpush1.msra.mxu0 %v884
          %943 = vmatprep.subr.mxu0 0.0
          %944 = vmatpush1.msra.mxu0 %v885
          %945 = vmatprep.subr.mxu0 0.0
          %946 = vmatpush1.msra.mxu0 %v886
          %947 = vmatprep.subr.mxu0 0.0
          %948 = vmatpush1.msra.mxu0 %v887
          %949 = vmatprep.subr.mxu0 0.0
          %950 = vmatpush1.msra.mxu0 %v888
          %951 = vmatprep.subr.mxu0 0.0
          %952 = vmatpush1.msra.mxu0 %v889
          %953 = vmatprep.subr.mxu0 0.0
          %954 = vmatpush1.msra.mxu0 %v890
          %955 = vmatprep.mubr.f32.mxu0 %v854
          %956 = vmatmul.mubr.f32.gmra.mrb[0].mxu0 %v853
          %v957 = vpop.f32.mrb[0].mxu0
          %v958 = vadd.f32 0.0, %v957
          %v959 = vpop.f32.mrb[0].mxu0
          %960 = vmatprep.mubr.f32.mxu0 %v856
          %961 = vmatmul.mubr.f32.gmra.mrb[0].mxu0 %v855
          %v962 = vpop.f32.mrb[0].mxu0
          %v963 = vadd.f32 0.0, %v962
          %v964 = vpop.f32.mrb[0].mxu0
          %965 = vmatprep.mubr.f32.mxu0 %v858
          %966 = vmatmul.mubr.f32.gmra.mrb[0].mxu0 %v857
          %v967 = vpop.f32.mrb[0].mxu0
          %v968 = vadd.f32 0.0, %v967
          %v969 = vpop.f32.mrb[0].mxu0
          %970 = vdwg.mxu0
          %v971 = vmax.f32 %v958, 1e-10
          %v972 = vmax.f32 %v963, 1e-10
          %v973 = vmax.f32 %v968, 1e-10
          %v974 = vlog2.pop %v971
          %v975 = vmul.f32 %v974, 0.6931472
          %v976 = vlog2.pop %v972
          %v977 = vmul.f32 %v976, 0.6931472
          %v978 = vlog2.pop %v973
          %v979 = vmul.f32 %v978, 0.6931472
          %v980 = vmul.f32 %v975, 0.4342945
          %v981 = vmul.f32 %v977, 0.4342945
          %v982 = vmul.f32 %v979, 0.4342945
          %v983 = vlaneseq
          %v984 = vand.u32 %v983, 127
          %vm985 = vcmp.lt.s32.totalorder %v984, 80
          %v986 = vsel %vm985, %v980, -1e+30
          %v987 = vsel %vm985, %v981, -1e+30
          %v988 = vsel %vm985, %v982, -1e+30
          %vm989 = vcmask 1043456
          %v990 = vsel %vm989, %v988, -inf
          %v991 = vmax.f32 %v986, %v987
          %v992 = vmax.f32 %v991, %v990
          %993 = vmax.xlane.f32.xlu0 %v992
          %v994 = vpop.xlane.xlu0 %993
          %v995 = vrot.slane %v994, 4
          %v996 = vmax.f32 %v994, %v995
          %v997 = vrot.slane %v996, 2
          %v998 = vmax.f32 %v996, %v997
          %v999 = vrot.slane %v998, 1
          %v1000 = vmax.f32 %v998, %v999
          %s1001 = vtos %v1000
          %s1002 = ssub.f32 %s1001, 8.0
          %v1003 = vstv %s1002
          %v1004 = vmax.f32 %v980, %v1003
          %v1005 = vmax.f32 %v981, %v1003
          %v1006 = vmax.f32 %v982, %v1003
          %v1007 = vadd.f32 %v1004, 4.0
          %v1008 = vadd.f32 %v1005, 4.0
          %v1009 = vadd.f32 %v1006, 4.0
          %v1010 = vmul.f32 %v1007, 0.25
          %v1011 = vmul.f32 %v1008, 0.25
          %v1012 = vmul.f32 %v1009, 0.25
          %v1013 = vsel %vm985, %v1010, 0.0
          %v1014 = vsel %vm985, %v1011, 0.0
          %v1015 = vsel %vm985, %v1012, 0.0
          %1016 = vst [vmem:[#allocation3] sm:$0xff] 0.0
          %1017 = vst [vmem:[#allocation3 + $0x8] sm:$0xff] 0.0
          %1018 = vst [vmem:[#allocation3 + $0x10] sm:$0x3f] 0.0
          %1019 = vst [vmem:[#allocation3 + $0x1] sm:$0xff] %v1013
          %1020 = vst [vmem:[#allocation3 + $0x9] sm:$0xff] %v1014
          %1021 = vst [vmem:[#allocation3 + $0x11] sm:$0xf] %v1015
          %v1022 = vld [vmem:[#allocation3] sm:$0xff]
          %v1023 = vld [vmem:[#allocation3 + $0x8] sm:$0xff]
          %v1024 = vld [vmem:[#allocation3 + $0x10] sm:$0xf]
          %v1025 = vld [vmem:[#allocation3 + $0x1] sm:$0xff]
          %v1026 = vld [vmem:[#allocation3 + $0x9] sm:$0xff]
          %v1027 = vld [vmem:[#allocation3 + $0x11] sm:$0xf]
          %v1028 = vld [vmem:[#allocation3 + $0x2] sm:$0xff]
          %v1029 = vld [vmem:[#allocation3 + $0xa] sm:$0xff]
          %v1030 = vld [vmem:[#allocation3 + $0x12] sm:$0xf]
          %v1031 = vpack.c.bf16 %v1023, %v1022
          %v1032 = vpack.c.bf16 %v1026, %v1025
          %v1033 = vpack.c.bf16 %v1029, %v1028
          %v1034 = vpack.c.bf16 %v1024, %v1024
          %v1035 = vpack.c.bf16 %v1027, %v1027
          %v1036 = vpack.c.bf16 %v1030, %v1030
          %v1037 = vld [vmem:[%s2] sm:$0xf]
          %v1038 = vld [vmem:[%s2 + $0x4] sm:$0xf]
          %v1039 = vld [vmem:[%s2 + $0x8] sm:$0xf]
          %v1040 = vld [vmem:[%s2 + $0xc] sm:$0xf]
          %v1041 = vld [vmem:[%s2 + $0x10] sm:$0xf]
          %v1042 = vld [vmem:[%s2 + $0x14] sm:$0xf]
          %v1043 = vld [vmem:[%s2 + $0x18] sm:$0xf]
          %v1044 = vld [vmem:[%s2 + $0x1c] sm:$0xf]
          %v1045 = vld [vmem:[%s2 + $0x20] sm:$0xf]
          %v1046 = vld [vmem:[%s2 + $0x24] sm:$0xf]
          %v1047 = vld [vmem:[%s2 + $0x28] sm:$0xf]
          %v1048 = vld [vmem:[%s2 + $0x2c] sm:$0xf]
          %v1049 = vld [vmem:[%s2 + $0x30] sm:$0xf]
          %v1050 = vld [vmem:[%s2 + $0x34] sm:$0xf]
          %v1051 = vld [vmem:[%s2 + $0x38] sm:$0xf]
          %v1052 = vld [vmem:[%s2 + $0x3c] sm:$0xf]
          %v1053 = vld [vmem:[%s2 + $0x40] sm:$0xf]
          %v1054 = vld [vmem:[%s2 + $0x44] sm:$0xf]
          %v1055 = vld [vmem:[%s2 + $0x48] sm:$0xf]
          %v1056 = vld [vmem:[%s2 + $0x4c] sm:$0xf]
          %v1057 = vld [vmem:[%s2 + $0x50] sm:$0xf]
          %v1058 = vld [vmem:[%s2 + $0x54] sm:$0xf]
          %v1059 = vld [vmem:[%s2 + $0x58] sm:$0xf]
          %v1060 = vld [vmem:[%s2 + $0x5c] sm:$0xf]
          %v1061 = vld [vmem:[%s2 + $0x60] sm:$0xf]
          %v1062 = vld [vmem:[%s2 + $0x64] sm:$0xf]
          %v1063 = vld [vmem:[%s2 + $0x68] sm:$0xf]
          %v1064 = vld [vmem:[%s2 + $0x6c] sm:$0xf]
          %v1065 = vld [vmem:[%s2 + $0x70] sm:$0xf]
          %v1066 = vld [vmem:[%s2 + $0x74] sm:$0xf]
          %v1067 = vld [vmem:[%s2 + $0x78] sm:$0xf]
          %v1068 = vld [vmem:[%s2 + $0x7c] sm:$0xf]
          %v1069 = vld [vmem:[%s2 + $0x80] sm:$0xf]
          %v1070 = vld [vmem:[%s2 + $0x84] sm:$0xf]
          %v1071 = vld [vmem:[%s2 + $0x88] sm:$0xf]
          %v1072 = vld [vmem:[%s2 + $0x8c] sm:$0xf]
          %v1073 = vld [vmem:[%s2 + $0x90] sm:$0xf]
          %v1074 = vld [vmem:[%s2 + $0x94] sm:$0xf]
          %v1075 = vld [vmem:[%s2 + $0x98] sm:$0xf]
          %v1076 = vld [vmem:[%s2 + $0x9c] sm:$0xf]
          %v1077 = vld [vmem:[%s2 + $0xa0] sm:$0xf]
          %v1078 = vld [vmem:[%s2 + $0xa4] sm:$0xf]
          %v1079 = vld [vmem:[%s2 + $0xa8] sm:$0xf]
          %v1080 = vld [vmem:[%s2 + $0xac] sm:$0xf]
          %v1081 = vld [vmem:[%s2 + $0xb0] sm:$0xf]
          %v1082 = vld [vmem:[%s2 + $0xb4] sm:$0xf]
          %v1083 = vld [vmem:[%s2 + $0xb8] sm:$0xf]
          %v1084 = vld [vmem:[%s2 + $0xbc] sm:$0xf]
          %v1085 = vld [vmem:[%s3] sm:$0x1]
          %v1087 = vlaneseq
          %v1088 = vshrl.u32 %v1087, 7
          %v1089 = vsub.s32 0, %v1088
          %v1090 = vrot.slane %v1085, %v1089
          %v1140 = vunpack.c.l.b16 %v1037
          %v1141 = vunpack.c.l.b16 %v1038
          %v1142 = vunpack.c.l.b16 %v1039
          %v1143 = vunpack.c.l.b16 %v1040
          %v1144 = vunpack.c.l.b16 %v1041
          %v1145 = vunpack.c.l.b16 %v1042
          %v1146 = vunpack.c.l.b16 %v1043
          %v1147 = vunpack.c.l.b16 %v1044
          %v1148 = vunpack.c.l.b16 %v1045
          %v1149 = vunpack.c.l.b16 %v1046
          %v1150 = vunpack.c.l.b16 %v1047
          %v1151 = vunpack.c.l.b16 %v1048
          %v1152 = vunpack.c.l.b16 %v1049
          %v1153 = vunpack.c.l.b16 %v1050
          %v1154 = vunpack.c.l.b16 %v1051
          %v1155 = vunpack.c.l.b16 %v1052
          %v1156 = vunpack.c.l.b16 %v1053
          %v1157 = vunpack.c.l.b16 %v1054
          %v1158 = vunpack.c.l.b16 %v1055
          %v1159 = vunpack.c.l.b16 %v1056
          %v1160 = vunpack.c.l.b16 %v1057
          %v1161 = vunpack.c.l.b16 %v1058
          %v1162 = vunpack.c.l.b16 %v1059
          %v1163 = vunpack.c.l.b16 %v1060
          %v1164 = vunpack.c.l.b16 %v1061
          %v1165 = vunpack.c.l.b16 %v1062
          %v1166 = vunpack.c.l.b16 %v1063
          %v1167 = vunpack.c.l.b16 %v1064
          %v1168 = vunpack.c.l.b16 %v1065
          %v1169 = vunpack.c.l.b16 %v1066
          %v1170 = vunpack.c.l.b16 %v1067
          %v1171 = vunpack.c.l.b16 %v1068
          %v1172 = vunpack.c.l.b16 %v1069
          %v1173 = vunpack.c.l.b16 %v1070
          %v1174 = vunpack.c.l.b16 %v1071
          %v1175 = vunpack.c.l.b16 %v1072
          %v1176 = vunpack.c.l.b16 %v1073
          %v1177 = vunpack.c.l.b16 %v1074
          %v1178 = vunpack.c.l.b16 %v1075
          %v1179 = vunpack.c.l.b16 %v1076
          %v1180 = vunpack.c.l.b16 %v1077
          %v1181 = vunpack.c.l.b16 %v1078
          %v1182 = vunpack.c.l.b16 %v1079
          %v1183 = vunpack.c.l.b16 %v1080
          %v1184 = vunpack.c.l.b16 %v1081
          %v1185 = vunpack.c.l.b16 %v1082
          %v1186 = vunpack.c.l.b16 %v1083
          %v1187 = vunpack.c.l.b16 %v1084
          %v1188 = vpack.c.b16 %v1141, %v1140
          %v1189 = vpack.c.b16 %v1143, %v1142
          %v1190 = vpack.c.b16 %v1145, %v1144
          %v1191 = vpack.c.b16 %v1147, %v1146
          %v1192 = vpack.c.b16 %v1149, %v1148
          %v1193 = vpack.c.b16 %v1151, %v1150
          %v1194 = vpack.c.b16 %v1153, %v1152
          %v1195 = vpack.c.b16 %v1155, %v1154
          %v1196 = vpack.c.b16 %v1157, %v1156
          %v1197 = vpack.c.b16 %v1159, %v1158
          %v1198 = vpack.c.b16 %v1161, %v1160
          %v1199 = vpack.c.b16 %v1163, %v1162
          %v1200 = vpack.c.b16 %v1165, %v1164
          %v1201 = vpack.c.b16 %v1167, %v1166
          %v1202 = vpack.c.b16 %v1169, %v1168
          %v1203 = vpack.c.b16 %v1171, %v1170
          %v1204 = vpack.c.b16 %v1173, %v1172
          %v1205 = vpack.c.b16 %v1175, %v1174
          %v1206 = vpack.c.b16 %v1177, %v1176
          %v1207 = vpack.c.b16 %v1179, %v1178
          %v1208 = vpack.c.b16 %v1181, %v1180
          %v1209 = vpack.c.b16 %v1183, %v1182
          %v1210 = vpack.c.b16 %v1185, %v1184
          %v1211 = vpack.c.b16 %v1187, %v1186
          %1236 = vmatprep.subr.bf16.mxu0 0
          %1237 = vmatpush1.bf16.msra.mxu0 %v1188
          %1238 = vmatprep.subr.bf16.mxu0 0
          %1239 = vmatpush1.bf16.msra.mxu0 %v1189
          %1240 = vmatprep.subr.bf16.mxu0 0
          %1241 = vmatpush1.bf16.msra.mxu0 %v1190
          %1242 = vmatprep.subr.bf16.mxu0 0
          %1243 = vmatpush1.bf16.msra.mxu0 %v1191
          %1244 = vmatprep.subr.bf16.mxu0 0
          %1245 = vmatpush1.bf16.msra.mxu0 %v1192
          %1246 = vmatprep.subr.bf16.mxu0 0
          %1247 = vmatpush1.bf16.msra.mxu0 %v1193
          %1248 = vmatprep.subr.bf16.mxu0 0
          %1249 = vmatpush1.bf16.msra.mxu0 %v1194
          %1250 = vmatprep.subr.bf16.mxu0 0
          %1251 = vmatpush1.bf16.msra.mxu0 %v1195
          %1252 = vmatprep.subr.bf16.mxu0 0
          %1253 = vmatpush1.bf16.msra.mxu0 %v1196
          %1254 = vmatprep.subr.bf16.mxu0 0
          %1255 = vmatpush1.bf16.msra.mxu0 %v1197
          %1256 = vmatprep.subr.bf16.mxu0 0
          %1257 = vmatpush1.bf16.msra.mxu0 %v1198
          %1258 = vmatprep.subr.bf16.mxu0 0
          %1259 = vmatpush1.bf16.msra.mxu0 %v1199
          %1260 = vmatprep.subr.bf16.mxu0 0
          %1261 = vmatpush1.bf16.msra.mxu0 %v1200
          %1262 = vmatprep.subr.bf16.mxu0 0
          %1263 = vmatpush1.bf16.msra.mxu0 %v1201
          %1264 = vmatprep.subr.bf16.mxu0 0
          %1265 = vmatpush1.bf16.msra.mxu0 %v1202
          %1266 = vmatprep.subr.bf16.mxu0 0
          %1267 = vmatpush1.bf16.msra.mxu0 %v1203
          %1268 = vmatprep.mubr.bf16.mxu0 %v1032
          %1269 = vmatmul.mubr.bf16.gmra.mrb[0].mxu0 %v1031
          %v1270 = vpop.f32.mrb[0].mxu0
          %v1271 = vadd.f32 %v1090, %v1270
          %v1272 = vpop.f32.mrb[0].mxu0
          %v1273 = vpop.f32.mrb[0].mxu0
          %v1274 = vadd.f32 %v1090, %v1273
          %v1275 = vpop.f32.mrb[0].mxu0
          %1276 = vmatprep.mubr.bf16.mxu0 %v1035
          %1277 = vmatmul.mubr.bf16.gmra.mrb[0].mxu0 %v1034
          %v1278 = vpop.f32.mrb[0].mxu0
          %v1279 = vadd.f32 %v1090, %v1278
          %v1280 = vpop.f32.mrb[0].mxu0
          %v1281 = vpop.f32.mrb[0].mxu0
          %v1282 = vpop.f32.mrb[0].mxu0
          %1283 = vdwg.mxu0
          %1284 = vmatprep.subr.bf16.mxu0 0
          %1285 = vmatpush1.bf16.msra.mxu0 %v1204
          %1286 = vmatprep.subr.bf16.mxu0 0
          %1287 = vmatpush1.bf16.msra.mxu0 %v1205
          %1288 = vmatprep.subr.bf16.mxu0 0
          %1289 = vmatpush1.bf16.msra.mxu0 %v1206
          %1290 = vmatprep.subr.bf16.mxu0 0
          %1291 = vmatpush1.bf16.msra.mxu0 %v1207
          %1292 = vmatprep.subr.bf16.mxu0 0
          %1293 = vmatpush1.bf16.msra.mxu0 %v1208
          %1294 = vmatprep.subr.bf16.mxu0 0
          %1295 = vmatpush1.bf16.msra.mxu0 %v1209
          %1296 = vmatprep.subr.bf16.mxu0 0
          %1297 = vmatpush1.bf16.msra.mxu0 %v1210
          %1298 = vmatprep.subr.bf16.mxu0 0
          %1299 = vmatpush1.bf16.msra.mxu0 %v1211
          %1300 = vmatprep.subr.bf16.mxu0 0
          %1301 = vmatpush1.bf16.msra.mxu0 0
          %1302 = vmatprep.subr.bf16.mxu0 0
          %1303 = vmatpush1.bf16.msra.mxu0 0
          %1304 = vmatprep.subr.bf16.mxu0 0
          %1305 = vmatpush1.bf16.msra.mxu0 0
          %1306 = vmatprep.subr.bf16.mxu0 0
          %1307 = vmatpush1.bf16.msra.mxu0 0
          %1308 = vmatprep.subr.bf16.mxu0 0
          %1309 = vmatpush1.bf16.msra.mxu0 0
          %1310 = vmatprep.subr.bf16.mxu0 0
          %1311 = vmatpush1.bf16.msra.mxu0 0
          %1312 = vmatprep.subr.bf16.mxu0 0
          %1313 = vmatpush1.bf16.msra.mxu0 0
          %1314 = vmatprep.subr.bf16.mxu0 0
          %1315 = vmatpush1.bf16.msra.mxu0 0
          %1316 = vmatprep.mubr.bf16.mxu0 0
          %1317 = vmatmul.mubr.bf16.gmra.mrb[0].mxu0 %v1033
          %v1318 = vpop.f32.mrb[0].mxu0
          %v1319 = vadd.f32 %v1271, %v1318
          %v1320 = vpop.f32.mrb[0].mxu0
          %v1321 = vpop.f32.mrb[0].mxu0
          %v1322 = vadd.f32 %v1274, %v1321
          %v1323 = vpop.f32.mrb[0].mxu0
          %1324 = vmatprep.mubr.bf16.mxu0 0
          %1325 = vmatmul.mubr.bf16.gmra.mrb[0].mxu0 %v1036
          %v1326 = vpop.f32.mrb[0].mxu0
          %v1327 = vadd.f32 %v1279, %v1326
          %v1328 = vpop.f32.mrb[0].mxu0
          %v1329 = vpop.f32.mrb[0].mxu0
          %v1330 = vpop.f32.mrb[0].mxu0
          %1331 = vdwg.mxu0
          %v1332 = vmul.f32 %v1319, 0.5
          %v1333 = vmul.f32 %v1322, 0.5
          %v1334 = vmul.f32 %v1327, 0.5
          %v1335 = vmul.f32 %v1319, 0.70710677
          %v1336 = vmul.f32 %v1322, 0.70710677
          %v1337 = vmul.f32 %v1327, 0.70710677
          %v1338 = vand.u32 2147483647, %v1335
          %v1339 = vand.u32 2147483647, %v1336
          %v1340 = vand.u32 2147483647, %v1337
          %v1341 = vmul.f32 %v1338, 0.3275911
          %v1342 = vmul.f32 %v1339, 0.3275911
          %v1343 = vmul.f32 %v1340, 0.3275911
          %v1344 = vadd.f32 %v1341, 1.0
          %v1345 = vadd.f32 %v1342, 1.0
          %v1346 = vadd.f32 %v1343, 1.0
          %v1347 = vrcp.pop %v1344
          %v1348 = vrcp.pop %v1345
          %v1349 = vrcp.pop %v1346
          %v1350 = vmul.f32 %v1347, 1.0614054
          %v1351 = vmul.f32 %v1348, 1.0614054
          %v1352 = vmul.f32 %v1349, 1.0614054
          %v1353 = vadd.f32 %v1350, -1.4531521
          %v1354 = vadd.f32 %v1351, -1.4531521
          %v1355 = vadd.f32 %v1352, -1.4531521
          %v1356 = vmul.f32 %v1353, %v1347
          %v1357 = vmul.f32 %v1354, %v1348
          %v1358 = vmul.f32 %v1355, %v1349
          %v1359 = vadd.f32 %v1356, 1.4214138
          %v1360 = vadd.f32 %v1357, 1.4214138
          %v1361 = vadd.f32 %v1358, 1.4214138
          %v1362 = vmul.f32 %v1359, %v1347
          %v1363 = vmul.f32 %v1360, %v1348
          %v1364 = vmul.f32 %v1361, %v1349
          %v1365 = vadd.f32 %v1362, -0.28449672
          %v1366 = vadd.f32 %v1363, -0.28449672
          %v1367 = vadd.f32 %v1364, -0.28449672
          %v1368 = vmul.f32 %v1365, %v1347
          %v1369 = vmul.f32 %v1366, %v1348
          %v1370 = vmul.f32 %v1367, %v1349
          %v1371 = vadd.f32 %v1368, 0.2548296
          %v1372 = vadd.f32 %v1369, 0.2548296
          %v1373 = vadd.f32 %v1370, 0.2548296
          %v1374 = vmul.f32 %v1371, %v1347
          %v1375 = vmul.f32 %v1372, %v1348
          %v1376 = vmul.f32 %v1373, %v1349
          %v1377 = vsub.f32 0.0, %v1338
          %v1378 = vsub.f32 0.0, %v1339
          %v1379 = vsub.f32 0.0, %v1340
          %v1380 = vmul.f32 %v1377, %v1338
          %v1381 = vmul.f32 %v1378, %v1339
          %v1382 = vmul.f32 %v1379, %v1340
          %v1383 = vmul.f32 %v1380, 1.442695
          %v1384 = vpow.pop %v1383
          %v1385 = vmul.f32 %v1381, 1.442695
          %v1386 = vpow.pop %v1385
          %v1387 = vmul.f32 %v1382, 1.442695
          %v1388 = vpow.pop %v1387
          %v1389 = vmul.f32 %v1374, %v1384
          %v1390 = vmul.f32 %v1375, %v1386
          %v1391 = vmul.f32 %v1376, %v1388
          %v1392 = vsub.f32 1.0, %v1389
          %v1393 = vsub.f32 1.0, %v1390
          %v1394 = vsub.f32 1.0, %v1391
          %vm1395 = vcmp.ge.f32.partialorder %v1335, 0.0
          %vm1396 = vcmp.ge.f32.partialorder %v1336, 0.0
          %vm1397 = vcmp.ge.f32.partialorder %v1337, 0.0
          %v1398 = vsub.f32 0.0, %v1392
          %v1399 = vsub.f32 0.0, %v1393
          %v1400 = vsub.f32 0.0, %v1394
          %v1401 = vsel %vm1395, %v1392, %v1398
          %v1402 = vsel %vm1396, %v1393, %v1399
          %v1403 = vsel %vm1397, %v1394, %v1400
          %v1404 = vadd.f32 %v1401, 1.0
          %v1405 = vadd.f32 %v1402, 1.0
          %v1406 = vadd.f32 %v1403, 1.0
          %v1407 = vmul.f32 %v1332, %v1404
          %v1408 = vmul.f32 %v1333, %v1405
          %v1409 = vmul.f32 %v1334, %v1406
          %vm1410 = vcmask 523264
          %1411 = vst.msk [vmem:[#allocation4] sm:$0xff] %vm1410, 0.0
          %1412 = vst.msk [vmem:[#allocation4 + $0x8] sm:$0xff] %vm1410, 0.0
          %vm1413 = vcmask 521216
          %1414 = vst.msk [vmem:[#allocation4 + $0x10] sm:$0x3f] %vm1413, 0.0
          %1415 = vst.msk [vmem:[#allocation4 + $0x1] sm:$0xff] %vm1410, %v1407
          %1416 = vst.msk [vmem:[#allocation4 + $0x9] sm:$0xff] %vm1410, %v1408
          %vm1417 = vcmask 519168
          %1418 = vst.msk [vmem:[#allocation4 + $0x11] sm:$0xf] %vm1417, %v1409
          %v1419 = vld [vmem:[#allocation4] ss:$2 sm:$0xff]
          %s1420 = scalar_lea.vmem [#allocation4], 16
          %v1421 = vld [vmem:[%s1420] ss:$2 sm:$0x3]
          %s1422 = scalar_lea.vmem [#allocation4], 1
          %v1423 = vld [vmem:[%s1422] ss:$2 sm:$0xff]
          %s1424 = scalar_lea.vmem [#allocation4], 17
          %v1425 = vld [vmem:[%s1424] ss:$2 sm:$0x3]
          %s1426 = scalar_lea.vmem [#allocation4], 2
          %v1427 = vld [vmem:[%s1426] ss:$2 sm:$0xff]
          %s1428 = scalar_lea.vmem [#allocation4], 18
          %v1429 = vld [vmem:[%s1428] ss:$2 sm:$0x3]
          %1432 = vrot.lane.b32.xlu0 %v1423, 64
          %v1433 = vpop.permute.xlu0 %1432
          %1434 = vrot.lane.b32.xlu0 %v1425, 64
          %v1435 = vpop.permute.xlu0 %1434
          %v1438 = vsel %vm1410, %v1419, %v1433
          %v1439 = vsel %vm1410, %v1421, %v1435
          %v1440 = vpack.c.bf16 %v1439, %v1438
          %v1441 = vpack.c.bf16 %v1429, %v1427
          %v1442 = vld [vmem:[%s4] sm:$0xf]
          %v1443 = vld [vmem:[%s4 + $0x4] sm:$0xf]
          %v1444 = vld [vmem:[%s4 + $0x8] sm:$0xf]
          %v1445 = vld [vmem:[%s4 + $0xc] sm:$0xf]
          %v1446 = vld [vmem:[%s4 + $0x10] sm:$0xf]
          %v1447 = vld [vmem:[%s4 + $0x14] sm:$0xf]
          %v1448 = vld [vmem:[%s4 + $0x18] sm:$0xf]
          %v1449 = vld [vmem:[%s4 + $0x1c] sm:$0xf]
          %v1450 = vld [vmem:[%s4 + $0x20] sm:$0xf]
          %v1451 = vld [vmem:[%s4 + $0x24] sm:$0xf]
          %v1452 = vld [vmem:[%s4 + $0x28] sm:$0xf]
          %v1453 = vld [vmem:[%s4 + $0x2c] sm:$0xf]
          %v1454 = vld [vmem:[%s4 + $0x30] sm:$0xf]
          %v1455 = vld [vmem:[%s4 + $0x34] sm:$0xf]
          %v1456 = vld [vmem:[%s4 + $0x38] sm:$0xf]
          %v1457 = vld [vmem:[%s4 + $0x3c] sm:$0xf]
          %v1458 = vld [vmem:[%s4 + $0x40] sm:$0xf]
          %v1459 = vld [vmem:[%s4 + $0x44] sm:$0xf]
          %v1460 = vld [vmem:[%s4 + $0x48] sm:$0xf]
          %v1461 = vld [vmem:[%s4 + $0x4c] sm:$0xf]
          %v1462 = vld [vmem:[%s4 + $0x50] sm:$0xf]
          %v1463 = vld [vmem:[%s4 + $0x54] sm:$0xf]
          %v1464 = vld [vmem:[%s4 + $0x58] sm:$0xf]
          %v1465 = vld [vmem:[%s4 + $0x5c] sm:$0xf]
          %v1466 = vld [vmem:[%s5] sm:$0x1]
          %v1468 = vlaneseq
          %v1469 = vshrl.u32 %v1468, 7
          %v1470 = vsub.s32 0, %v1469
          %v1471 = vrot.slane %v1466, %v1470
          %v1497 = vunpack.c.l.b16 %v1442
          %v1498 = vunpack.c.l.b16 %v1443
          %v1499 = vunpack.c.l.b16 %v1444
          %v1500 = vunpack.c.l.b16 %v1445
          %v1501 = vunpack.c.l.b16 %v1446
          %v1502 = vunpack.c.l.b16 %v1447
          %v1503 = vunpack.c.l.b16 %v1448
          %v1504 = vunpack.c.l.b16 %v1449
          %v1505 = vunpack.c.l.b16 %v1450
          %v1506 = vunpack.c.l.b16 %v1451
          %v1507 = vunpack.c.l.b16 %v1452
          %v1508 = vunpack.c.l.b16 %v1453
          %v1509 = vunpack.c.l.b16 %v1454
          %v1510 = vunpack.c.l.b16 %v1455
          %v1511 = vunpack.c.l.b16 %v1456
          %v1512 = vunpack.c.l.b16 %v1457
          %v1513 = vunpack.c.l.b16 %v1458
          %v1514 = vunpack.c.l.b16 %v1459
          %v1515 = vunpack.c.l.b16 %v1460
          %v1516 = vunpack.c.l.b16 %v1461
          %v1517 = vunpack.c.l.b16 %v1462
          %v1518 = vunpack.c.l.b16 %v1463
          %v1519 = vunpack.c.l.b16 %v1464
          %v1520 = vunpack.c.l.b16 %v1465
          %v1521 = vpack.c.b16 %v1498, %v1497
          %v1522 = vpack.c.b16 %v1500, %v1499
          %v1523 = vpack.c.b16 %v1502, %v1501
          %v1524 = vpack.c.b16 %v1504, %v1503
          %v1525 = vpack.c.b16 %v1506, %v1505
          %v1526 = vpack.c.b16 %v1508, %v1507
          %v1527 = vpack.c.b16 %v1510, %v1509
          %v1528 = vpack.c.b16 %v1512, %v1511
          %v1529 = vpack.c.b16 %v1514, %v1513
          %v1530 = vpack.c.b16 %v1516, %v1515
          %v1531 = vpack.c.b16 %v1518, %v1517
          %v1532 = vpack.c.b16 %v1520, %v1519
          %v1546 = vsel %vm1410, %v1441, 0
          %1548 = vmatprep.subr.bf16.mxu0 0
          %1549 = vmatpush1.bf16.msra.mxu0 %v1521
          %1550 = vmatprep.subr.bf16.mxu0 0
          %1551 = vmatpush1.bf16.msra.mxu0 %v1522
          %1552 = vmatprep.subr.bf16.mxu0 0
          %1553 = vmatpush1.bf16.msra.mxu0 %v1523
          %1554 = vmatprep.subr.bf16.mxu0 0
          %1555 = vmatpush1.bf16.msra.mxu0 %v1524
          %1556 = vmatprep.subr.bf16.mxu0 0
          %1557 = vmatpush1.bf16.msra.mxu0 %v1525
          %1558 = vmatprep.subr.bf16.mxu0 0
          %1559 = vmatpush1.bf16.msra.mxu0 %v1526
          %1560 = vmatprep.subr.bf16.mxu0 0
          %1561 = vmatpush1.bf16.msra.mxu0 %v1527
          %1562 = vmatprep.subr.bf16.mxu0 0
          %1563 = vmatpush1.bf16.msra.mxu0 %v1528
          %1564 = vmatprep.subr.bf16.mxu0 0
          %1565 = vmatpush1.bf16.msra.mxu0 %v1529
          %1566 = vmatprep.subr.bf16.mxu0 0
          %1567 = vmatpush1.bf16.msra.mxu0 %v1530
          %1568 = vmatprep.subr.bf16.mxu0 0
          %1569 = vmatpush1.bf16.msra.mxu0 %v1531
          %1570 = vmatprep.subr.bf16.mxu0 0
          %1571 = vmatpush1.bf16.msra.mxu0 %v1532
          %1572 = vmatprep.subr.bf16.mxu0 0
          %1573 = vmatpush1.bf16.msra.mxu0 0
          %1574 = vmatprep.subr.bf16.mxu0 0
          %1575 = vmatpush1.bf16.msra.mxu0 0
          %1576 = vmatprep.subr.bf16.mxu0 0
          %1577 = vmatpush1.bf16.msra.mxu0 0
          %1578 = vmatprep.subr.bf16.mxu0 0
          %1579 = vmatpush1.bf16.msra.mxu0 0
          %1580 = vmatprep.mubr.bf16.mxu0 %v1546
          %1581 = vmatmul.mubr.bf16.gmra.mrb[0].mxu0 %v1440
          %v1582 = vpop.f32.mrb[0].mxu0
          %v1583 = vadd.f32 %v1471, %v1582
          %v1584 = vpop.f32.mrb[0].mxu0
          %v1585 = vpop.f32.mrb[0].mxu0
          %v1586 = vadd.f32 %v1471, %v1585
          %v1587 = vpop.f32.mrb[0].mxu0
          %1588 = vdwg.mxu0
          %v1589 = vmul.f32 %v1583, 0.5
          %v1590 = vmul.f32 %v1586, 0.5
          %v1591 = vmul.f32 %v1583, 0.70710677
          %v1592 = vmul.f32 %v1586, 0.70710677
          %v1593 = vand.u32 2147483647, %v1591
          %v1594 = vand.u32 2147483647, %v1592
          %v1595 = vmul.f32 %v1593, 0.3275911
          %v1596 = vmul.f32 %v1594, 0.3275911
          %v1597 = vadd.f32 %v1595, 1.0
          %v1598 = vadd.f32 %v1596, 1.0
          %v1599 = vrcp.pop %v1597
          %v1600 = vrcp.pop %v1598
          %v1601 = vmul.f32 %v1599, 1.0614054
          %v1602 = vmul.f32 %v1600, 1.0614054
          %v1603 = vadd.f32 %v1601, -1.4531521
          %v1604 = vadd.f32 %v1602, -1.4531521
          %v1605 = vmul.f32 %v1603, %v1599
          %v1606 = vmul.f32 %v1604, %v1600
          %v1607 = vadd.f32 %v1605, 1.4214138
          %v1608 = vadd.f32 %v1606, 1.4214138
          %v1609 = vmul.f32 %v1607, %v1599
          %v1610 = vmul.f32 %v1608, %v1600
          %v1611 = vadd.f32 %v1609, -0.28449672
          %v1612 = vadd.f32 %v1610, -0.28449672
          %v1613 = vmul.f32 %v1611, %v1599
          %v1614 = vmul.f32 %v1612, %v1600
          %v1615 = vadd.f32 %v1613, 0.2548296
          %v1616 = vadd.f32 %v1614, 0.2548296
          %v1617 = vmul.f32 %v1615, %v1599
          %v1618 = vmul.f32 %v1616, %v1600
          %v1619 = vsub.f32 0.0, %v1593
          %v1620 = vsub.f32 0.0, %v1594
          %v1621 = vmul.f32 %v1619, %v1593
          %v1622 = vmul.f32 %v1620, %v1594
          %v1623 = vmul.f32 %v1621, 1.442695
          %v1624 = vpow.pop %v1623
          %v1625 = vmul.f32 %v1622, 1.442695
          %v1626 = vpow.pop %v1625
          %v1627 = vmul.f32 %v1617, %v1624
          %v1628 = vmul.f32 %v1618, %v1626
          %v1629 = vsub.f32 1.0, %v1627
          %v1630 = vsub.f32 1.0, %v1628
          %vm1631 = vcmp.ge.f32.partialorder %v1591, 0.0
          %vm1632 = vcmp.ge.f32.partialorder %v1592, 0.0
          %v1633 = vsub.f32 0.0, %v1629
          %v1634 = vsub.f32 0.0, %v1630
          %v1635 = vsel %vm1631, %v1629, %v1633
          %v1636 = vsel %vm1632, %v1630, %v1634
          %v1637 = vadd.f32 %v1635, 1.0
          %v1638 = vadd.f32 %v1636, 1.0
          %v1639 = vmul.f32 %v1589, %v1637
          %v1640 = vmul.f32 %v1590, %v1638
          %1641 = vst.msk [vmem:[#allocation2] sm:$0xff] %vm1410, 0.0
          %1642 = vst.msk [vmem:[#allocation2 + $0x8] sm:$0xff] %vm1410, 0.0
          %v1643 = vld [vmem:[%s6] sm:$0xff]
          %v1644 = vld [vmem:[%s6 + $0x8] sm:$0x3]
          %v1645 = vadd.f32 %v1639, %v1643
          %v1646 = vadd.f32 %v1640, %v1644
          %1647 = vst.msk [vmem:[#allocation2] sm:$0xff] %vm1410, %v1645
          %vm1648 = vcmask 517120
          %1649 = vst.msk [vmem:[#allocation2 + $0x8] sm:$0x3] %vm1648, %v1646
        $region112: #{tpu_custom_call.1} parent=103 // pred_fallthru
          _
        %v1650 = vld [vmem:[#allocation2] sm:$0xff]
        %v1651 = vld [vmem:[#allocation2 + $0x8] sm:$0xff]
        %v1652 = vld [vmem:[%s804] sm:$0x1]
        %v1653 = vld [vmem:[%s807] sm:$0x1]
        %vm1654 = vcmask 523264
        %v1655 = vsel %vm1654, %v1650, 0.0
        %1656 = vadd.xlane.f32.xlu0 %v1655
        %v1657 = vpop.xlane.xlu0 %1656
        %v1658 = vsel %vm1654, %v1651, 0.0
        %1659 = vadd.xlane.f32.xlu0 %v1658
        %v1660 = vpop.xlane.xlu0 %1659
        %v1661 = vrcp.pop 64.0
        %v1662 = vmul.f32 %v1657, %v1661
        %v1663 = vmul.f32 %v1660, %v1661
        %v1664 = vsub.f32 %v1650, %v1662
        %v1665 = vsub.f32 %v1651, %v1663
        %v1666 = vmul.f32 %v1664, %v1664
        %v1667 = vmul.f32 %v1665, %v1665
        %v1668 = vsel %vm1654, %v1666, 0.0
        %1669 = vadd.xlane.f32.xlu0 %v1668
        %v1670 = vpop.xlane.xlu0 %1669
        %v1671 = vsel %vm1654, %v1667, 0.0
        %1672 = vadd.xlane.f32.xlu0 %v1671
        %v1673 = vpop.xlane.xlu0 %1672
        %v1674 = vmul.f32 %v1670, %v1661
        %v1675 = vmul.f32 %v1673, %v1661
        %v1676 = vadd.f32 %v1674, 1e-05
        %v1677 = vadd.f32 %v1675, 1e-05
        %v1678 = vrsqrt.pop %v1676
        %v1679 = vrsqrt.pop %v1677
        %v1680 = vmul.f32 %v1664, %v1678
        %v1681 = vmul.f32 %v1665, %v1679
        %v1683 = vlaneseq
        %v1684 = vshrl.u32 %v1683, 7
        %v1685 = vsub.s32 0, %v1684
        %v1686 = vrot.slane %v1652, %v1685
        %v1688 = vmul.f32 %v1680, %v1686
        %v1689 = vmul.f32 %v1681, %v1686
        %v1691 = vlaneseq
        %v1692 = vshrl.u32 %v1691, 7
        %v1693 = vsub.s32 0, %v1692
        %v1694 = vrot.slane %v1653, %v1693
        %v1696 = vadd.f32 %v1688, %v1694
        %v1697 = vadd.f32 %v1689, %v1694
        %v1698 = vpack.c.bf16 %v1697, %v1696
        %v1699 = vld [vmem:[%s812] sm:$0xff]
        %v1700 = vld [vmem:[%s812 + $0x8] sm:$0xff]
        %v1701 = vld [vmem:[%s812 + $0x10] sm:$0xff]
        %v1702 = vld [vmem:[%s812 + $0x18] sm:$0xff]
        %v1703 = vld [vmem:[%s812 + $0x20] sm:$0xff]
        %v1704 = vld [vmem:[%s812 + $0x28] sm:$0xff]
        %v1705 = vld [vmem:[%s812 + $0x30] sm:$0xff]
        %v1706 = vld [vmem:[%s812 + $0x38] sm:$0xff]
        %v1707 = vld [vmem:[%s816] sm:$0x3]
        %v1709 = vlaneseq
        %v1710 = vshrl.u32 %v1709, 7
        %v1711 = vsub.s32 0, %v1710
        %v1712 = vrot.slane %v1707, %v1711
        %v1713 = vlaneseq
        %v1714 = vshrl.u32 %v1713, 7
        %v1715 = vsub.s32 1, %v1714
        %v1716 = vrot.slane %v1707, %v1715
        %v1727 = vunpack.c.l.b16 %v1699
        %v1728 = vunpack.c.h.b16 %v1699
        %v1729 = vunpack.c.l.b16 %v1700
        %v1730 = vunpack.c.h.b16 %v1700
        %v1731 = vunpack.c.l.b16 %v1701
        %v1732 = vunpack.c.h.b16 %v1701
        %v1733 = vunpack.c.l.b16 %v1702
        %v1734 = vunpack.c.h.b16 %v1702
        %v1735 = vunpack.c.l.b16 %v1703
        %v1736 = vunpack.c.h.b16 %v1703
        %v1737 = vunpack.c.l.b16 %v1704
        %v1738 = vunpack.c.h.b16 %v1704
        %v1739 = vunpack.c.l.b16 %v1705
        %v1740 = vunpack.c.h.b16 %v1705
        %v1741 = vunpack.c.l.b16 %v1706
        %v1742 = vunpack.c.h.b16 %v1706
        %v1743 = vpack.c.b16 %v1729, %v1727
        %v1744 = vpack.c.b16 %v1730, %v1728
        %v1745 = vpack.c.b16 %v1733, %v1731
        %v1746 = vpack.c.b16 %v1734, %v1732
        %v1747 = vpack.c.b16 %v1737, %v1735
        %v1748 = vpack.c.b16 %v1738, %v1736
        %v1749 = vpack.c.b16 %v1741, %v1739
        %v1750 = vpack.c.b16 %v1742, %v1740
        %v1760 = vsel %vm1654, %v1698, 0
        %1762 = vmatprep.subr.bf16.mxu0 %v1744
        %1763 = vmatpush1.bf16.msra.mxu0 %v1743
        %1764 = vmatprep.subr.bf16.mxu0 %v1746
        %1765 = vmatpush1.bf16.msra.mxu0 %v1745
        %1766 = vmatprep.subr.bf16.mxu0 %v1748
        %1767 = vmatpush1.bf16.msra.mxu0 %v1747
        %1768 = vmatprep.subr.bf16.mxu0 %v1750
        %1769 = vmatpush1.bf16.msra.mxu0 %v1749
        %1770 = vmatprep.subr.bf16.mxu0 0
        %1771 = vmatpush1.bf16.msra.mxu0 0
        %1772 = vmatprep.subr.bf16.mxu0 0
        %1773 = vmatpush1.bf16.msra.mxu0 0
        %1774 = vmatprep.subr.bf16.mxu0 0
        %1775 = vmatpush1.bf16.msra.mxu0 0
        %1776 = vmatprep.subr.bf16.mxu0 0
        %1777 = vmatpush1.bf16.msra.mxu0 0
        %1778 = vmatprep.subr.bf16.mxu0 0
        %1779 = vmatpush1.bf16.msra.mxu0 0
        %1780 = vmatprep.subr.bf16.mxu0 0
        %1781 = vmatpush1.bf16.msra.mxu0 0
        %1782 = vmatprep.subr.bf16.mxu0 0
        %1783 = vmatpush1.bf16.msra.mxu0 0
        %1784 = vmatprep.subr.bf16.mxu0 0
        %1785 = vmatpush1.bf16.msra.mxu0 0
        %1786 = vmatprep.subr.bf16.mxu0 0
        %1787 = vmatpush1.bf16.msra.mxu0 0
        %1788 = vmatprep.subr.bf16.mxu0 0
        %1789 = vmatpush1.bf16.msra.mxu0 0
        %1790 = vmatprep.subr.bf16.mxu0 0
        %1791 = vmatpush1.bf16.msra.mxu0 0
        %1792 = vmatprep.subr.bf16.mxu0 0
        %1793 = vmatpush1.bf16.msra.mxu0 0
        %1794 = vmatprep.mubr.bf16.mxu0 0
        %1795 = vmatmul.mubr.bf16.gmra.mrb[0].mxu0 %v1760
        %v1796 = vpop.f32.mrb[0].mxu0
        %v1797 = vadd.f32 %v1712, %v1796
        %v1798 = vpop.f32.mrb[0].mxu0
        %v1799 = vadd.f32 %v1716, %v1798
        %v1800 = vpop.f32.mrb[0].mxu0
        %v1801 = vadd.f32 %v1712, %v1800
        %v1802 = vpop.f32.mrb[0].mxu0
        %v1803 = vadd.f32 %v1716, %v1802
        %1804 = vdwg.mxu0
        %v1805 = vlaneseq
        %v1806 = vand.u32 %v1805, 127
        %vm1807 = vcmp.lt.s32.totalorder %v1806, 10
        %v1808 = vpack.c.bf16 %v1801, %v1797
        %v1809 = vpack.c.bf16 %v1803, %v1799
        %1811 = vrot.lane.b32.xlu0 %v1808, 64
        %v1812 = vpop.permute.xlu0 %1811
        %vm1813 = vcmask 130048
        %v1815 = vsel %vm1813, %v1808, 0
        %v1818 = vsel %vm1813, %v1812, 0
        %1820 = vmatprep.subr.bf16.mxu0 0
        %1821 = vmatpush1.bf16.xpose.msra.mxu0 %v1818
        %1822 = vmatprep.subr.bf16.mxu0 0
        %1823 = vmatpush1.bf16.xpose.msra.mxu0 0
        %1824 = vmatprep.subr.bf16.mxu0 0
        %1825 = vmatpush1.bf16.xpose.msra.mxu0 0
        %1826 = vmatprep.subr.bf16.mxu0 0
        %1827 = vmatpush1.bf16.xpose.msra.mxu0 0
        %1828 = vmatprep.subr.bf16.mxu0 0
        %1829 = vmatpush1.bf16.xpose.msra.mxu0 0
        %1830 = vmatprep.subr.bf16.mxu0 0
        %1831 = vmatpush1.bf16.xpose.msra.mxu0 0
        %1832 = vmatprep.subr.bf16.mxu0 0
        %1833 = vmatpush1.bf16.xpose.msra.mxu0 0
        %1834 = vmatprep.subr.bf16.mxu0 0
        %1835 = vmatpush1.bf16.xpose.msra.mxu0 0
        %1836 = vmatprep.subr.bf16.mxu0 0
        %1837 = vmatpush1.bf16.xpose.msra.mxu0 0
        %1838 = vmatprep.subr.bf16.mxu0 0
        %1839 = vmatpush1.bf16.xpose.msra.mxu0 0
        %1840 = vmatprep.subr.bf16.mxu0 0
        %1841 = vmatpush1.bf16.xpose.msra.mxu0 0
        %1842 = vmatprep.subr.bf16.mxu0 0
        %1843 = vmatpush1.bf16.xpose.msra.mxu0 0
        %1844 = vmatprep.subr.bf16.mxu0 0
        %1845 = vmatpush1.bf16.xpose.msra.mxu0 0
        %1846 = vmatprep.subr.bf16.mxu0 0
        %1847 = vmatpush1.bf16.xpose.msra.mxu0 0
        %1848 = vmatprep.subr.bf16.mxu0 0
        %1849 = vmatpush1.bf16.xpose.msra.mxu0 0
        %1850 = vmatprep.subr.bf16.mxu0 0
        %1851 = vmatpush1.bf16.xpose.msra.mxu0 0
        %1852 = vmatprep.mubr.bf16.mxu0 0
        %1853 = vmatmul.mubr.bf16.gmra.mrb[0].mxu0 %v1815
        %v1854 = vpop.f32.mrb[0].mxu0
        %v1855 = vadd.f32 0.0, %v1854
        %v1856 = vpop.f32.mrb[0].mxu0
        %v1857 = vpop.f32.mrb[0].mxu0
        %v1858 = vadd.f32 0.0, %v1857
        %v1859 = vpop.f32.mrb[0].mxu0
        %1860 = vdwg.mxu0
        %v1861 = vsel %vm1807, %v1855, -1e+30
        %v1862 = vsel %vm1807, %v1858, -1e+30
        %v1863 = vsel %vm1813, %v1861, -inf
        %1864 = vmax.xlane.f32.xlu0 %v1863
        %v1865 = vpop.xlane.xlu0 %1864
        %v1866 = vsel %vm1813, %v1862, -inf
        %1867 = vmax.xlane.f32.xlu0 %v1866
        %v1868 = vpop.xlane.xlu0 %1867
        %v1869 = vsub.f32 %v1861, %v1865
        %v1870 = vsub.f32 %v1862, %v1868
        %v1871 = vmul.f32 %v1869, 1.442695
        %v1872 = vpow.pop %v1871
        %v1873 = vmul.f32 %v1870, 1.442695
        %v1874 = vpow.pop %v1873
        %v1875 = vsel %vm1813, %v1872, 0.0
        %1876 = vadd.xlane.f32.xlu0 %v1875
        %v1877 = vpop.xlane.xlu0 %1876
        %v1878 = vsel %vm1813, %v1874, 0.0
        %1879 = vadd.xlane.f32.xlu0 %v1878
        %v1880 = vpop.xlane.xlu0 %1879
        %v1881 = vrcp.pop %v1877
        %v1882 = vrcp.pop %v1880
        %v1883 = vmul.f32 %v1872, %v1881
        %v1884 = vmul.f32 %v1874, %v1882
        %v1885 = vpack.c.bf16 %v1884, %v1883
        %v1887 = vsel %vm1813, %v1885, 0
        %1889 = vmatprep.subr.bf16.mxu0 0
        %1890 = vmatpush1.bf16.msra.mxu0 %v1809
        %1891 = vmatprep.subr.bf16.mxu0 0
        %1892 = vmatpush1.bf16.msra.mxu0 0
        %1893 = vmatprep.subr.bf16.mxu0 0
        %1894 = vmatpush1.bf16.msra.mxu0 0
        %1895 = vmatprep.subr.bf16.mxu0 0
        %1896 = vmatpush1.bf16.msra.mxu0 0
        %1897 = vmatprep.subr.bf16.mxu0 0
        %1898 = vmatpush1.bf16.msra.mxu0 0
        %1899 = vmatprep.subr.bf16.mxu0 0
        %1900 = vmatpush1.bf16.msra.mxu0 0
        %1901 = vmatprep.subr.bf16.mxu0 0
        %1902 = vmatpush1.bf16.msra.mxu0 0
        %1903 = vmatprep.subr.bf16.mxu0 0
        %1904 = vmatpush1.bf16.msra.mxu0 0
        %1905 = vmatprep.subr.bf16.mxu0 0
        %1906 = vmatpush1.bf16.msra.mxu0 0
        %1907 = vmatprep.subr.bf16.mxu0 0
        %1908 = vmatpush1.bf16.msra.mxu0 0
        %1909 = vmatprep.subr.bf16.mxu0 0
        %1910 = vmatpush1.bf16.msra.mxu0 0
        %1911 = vmatprep.subr.bf16.mxu0 0
        %1912 = vmatpush1.bf16.msra.mxu0 0
        %1913 = vmatprep.subr.bf16.mxu0 0
        %1914 = vmatpush1.bf16.msra.mxu0 0
        %1915 = vmatprep.subr.bf16.mxu0 0
        %1916 = vmatpush1.bf16.msra.mxu0 0
        %1917 = vmatprep.subr.bf16.mxu0 0
        %1918 = vmatpush1.bf16.msra.mxu0 0
        %1919 = vmatprep.subr.bf16.mxu0 0
        %1920 = vmatpush1.bf16.msra.mxu0 0
        %1921 = vmatprep.mubr.bf16.mxu0 0
        %1922 = vmatmul.mubr.bf16.gmra.mrb[0].mxu0 %v1887
        %v1923 = vpop.f32.mrb[0].mxu0
        %v1924 = vadd.f32 0.0, %v1923
        %v1925 = vpop.f32.mrb[0].mxu0
        %v1926 = vpop.f32.mrb[0].mxu0
        %v1927 = vadd.f32 0.0, %v1926
        %v1928 = vpop.f32.mrb[0].mxu0
        %1929 = vdwg.mxu0
        %1930 = vrot.lane.b32.xlu0 %v1808, 112
        %v1931 = vpop.permute.xlu0 %1930
        %1932 = vrot.lane.b32.xlu0 %v1808, 48
        %v1933 = vpop.permute.xlu0 %1932
        %v1935 = vsel %vm1813, %v1931, 0
        %v1938 = vsel %vm1813, %v1933, 0
        %1940 = vmatprep.subr.bf16.mxu0 0
        %1941 = vmatpush1.bf16.xpose.msra.mxu0 %v1938
        %1942 = vmatprep.subr.bf16.mxu0 0
        %1943 = vmatpush1.bf16.xpose.msra.mxu0 0
        %1944 = vmatprep.subr.bf16.mxu0 0
        %1945 = vmatpush1.bf16.xpose.msra.mxu0 0
        %1946 = vmatprep.subr.bf16.mxu0 0
        %1947 = vmatpush1.bf16.xpose.msra.mxu0 0
        %1948 = vmatprep.subr.bf16.mxu0 0
        %1949 = vmatpush1.bf16.xpose.msra.mxu0 0
        %1950 = vmatprep.subr.bf16.mxu0 0
        %1951 = vmatpush1.bf16.xpose.msra.mxu0 0
        %1952 = vmatprep.subr.bf16.mxu0 0
        %1953 = vmatpush1.bf16.xpose.msra.mxu0 0
        %1954 = vmatprep.subr.bf16.mxu0 0
        %1955 = vmatpush1.bf16.xpose.msra.mxu0 0
        %1956 = vmatprep.subr.bf16.mxu0 0
        %1957 = vmatpush1.bf16.xpose.msra.mxu0 0
        %1958 = vmatprep.subr.bf16.mxu0 0
        %1959 = vmatpush1.bf16.xpose.msra.mxu0 0
        %1960 = vmatprep.subr.bf16.mxu0 0
        %1961 = vmatpush1.bf16.xpose.msra.mxu0 0
        %1962 = vmatprep.subr.bf16.mxu0 0
        %1963 = vmatpush1.bf16.xpose.msra.mxu0 0
        %1964 = vmatprep.subr.bf16.mxu0 0
        %1965 = vmatpush1.bf16.xpose.msra.mxu0 0
        %1966 = vmatprep.subr.bf16.mxu0 0
        %1967 = vmatpush1.bf16.xpose.msra.mxu0 0
        %1968 = vmatprep.subr.bf16.mxu0 0
        %1969 = vmatpush1.bf16.xpose.msra.mxu0 0
        %1970 = vmatprep.subr.bf16.mxu0 0
        %1971 = vmatpush1.bf16.xpose.msra.mxu0 0
        %1972 = vmatprep.mubr.bf16.mxu0 0
        %1973 = vmatmul.mubr.bf16.gmra.mrb[0].mxu0 %v1935
        %v1974 = vpop.f32.mrb[0].mxu0
        %v1975 = vadd.f32 0.0, %v1974
        %v1976 = vpop.f32.mrb[0].mxu0
        %v1977 = vpop.f32.mrb[0].mxu0
        %v1978 = vadd.f32 0.0, %v1977
        %v1979 = vpop.f32.mrb[0].mxu0
        %1980 = vdwg.mxu0
        %v1981 = vsel %vm1807, %v1975, -1e+30
        %v1982 = vsel %vm1807, %v1978, -1e+30
        %v1983 = vsel %vm1813, %v1981, -inf
        %1984 = vmax.xlane.f32.xlu0 %v1983
        %v1985 = vpop.xlane.xlu0 %1984
        %v1986 = vsel %vm1813, %v1982, -inf
        %1987 = vmax.xlane.f32.xlu0 %v1986
        %v1988 = vpop.xlane.xlu0 %1987
        %v1989 = vsub.f32 %v1981, %v1985
        %v1990 = vsub.f32 %v1982, %v1988
        %v1991 = vmul.f32 %v1989, 1.442695
        %v1992 = vpow.pop %v1991
        %v1993 = vmul.f32 %v1990, 1.442695
        %v1994 = vpow.pop %v1993
        %v1995 = vsel %vm1813, %v1992, 0.0
        %1996 = vadd.xlane.f32.xlu0 %v1995
        %v1997 = vpop.xlane.xlu0 %1996
        %v1998 = vsel %vm1813, %v1994, 0.0
        %1999 = vadd.xlane.f32.xlu0 %v1998
        %v2000 = vpop.xlane.xlu0 %1999
        %v2001 = vrcp.pop %v1997
        %v2002 = vrcp.pop %v2000
        %v2003 = vmul.f32 %v1992, %v2001
        %v2004 = vmul.f32 %v1994, %v2002
        %v2005 = vpack.c.bf16 %v2004, %v2003
        %2007 = vrot.lane.b32.xlu0 %v1809, 112
        %v2008 = vpop.permute.xlu0 %2007
        %v2011 = vsel %vm1813, %v2005, 0
        %2013 = vmatprep.subr.bf16.mxu0 0
        %2014 = vmatpush1.bf16.msra.mxu0 %v2008
        %2015 = vmatprep.subr.bf16.mxu0 0
        %2016 = vmatpush1.bf16.msra.mxu0 0
        %2017 = vmatprep.subr.bf16.mxu0 0
        %2018 = vmatpush1.bf16.msra.mxu0 0
        %2019 = vmatprep.subr.bf16.mxu0 0
        %2020 = vmatpush1.bf16.msra.mxu0 0
        %2021 = vmatprep.subr.bf16.mxu0 0
        %2022 = vmatpush1.bf16.msra.mxu0 0
        %2023 = vmatprep.subr.bf16.mxu0 0
        %2024 = vmatpush1.bf16.msra.mxu0 0
        %2025 = vmatprep.subr.bf16.mxu0 0
        %2026 = vmatpush1.bf16.msra.mxu0 0
        %2027 = vmatprep.subr.bf16.mxu0 0
        %2028 = vmatpush1.bf16.msra.mxu0 0
        %2029 = vmatprep.subr.bf16.mxu0 0
        %2030 = vmatpush1.bf16.msra.mxu0 0
        %2031 = vmatprep.subr.bf16.mxu0 0
        %2032 = vmatpush1.bf16.msra.mxu0 0
        %2033 = vmatprep.subr.bf16.mxu0 0
        %2034 = vmatpush1.bf16.msra.mxu0 0
        %2035 = vmatprep.subr.bf16.mxu0 0
        %2036 = vmatpush1.bf16.msra.mxu0 0
        %2037 = vmatprep.subr.bf16.mxu0 0
        %2038 = vmatpush1.bf16.msra.mxu0 0
        %2039 = vmatprep.subr.bf16.mxu0 0
        %2040 = vmatpush1.bf16.msra.mxu0 0
        %2041 = vmatprep.subr.bf16.mxu0 0
        %2042 = vmatpush1.bf16.msra.mxu0 0
        %2043 = vmatprep.subr.bf16.mxu0 0
        %2044 = vmatpush1.bf16.msra.mxu0 0
        %2045 = vmatprep.mubr.bf16.mxu0 0
        %2046 = vmatmul.mubr.bf16.gmra.mrb[0].mxu0 %v2011
        %v2047 = vpop.f32.mrb[0].mxu0
        %v2048 = vadd.f32 0.0, %v2047
        %v2049 = vpop.f32.mrb[0].mxu0
        %v2050 = vpop.f32.mrb[0].mxu0
        %v2051 = vadd.f32 0.0, %v2050
        %v2052 = vpop.f32.mrb[0].mxu0
        %2053 = vdwg.mxu0
        %2054 = vrot.lane.b32.xlu0 %v1808, 96
        %v2055 = vpop.permute.xlu0 %2054
        %2056 = vrot.lane.b32.xlu0 %v1808, 32
        %v2057 = vpop.permute.xlu0 %2056
        %v2059 = vsel %vm1813, %v2055, 0
        %v2062 = vsel %vm1813, %v2057, 0
        %2064 = vmatprep.subr.bf16.mxu0 0
        %2065 = vmatpush1.bf16.xpose.msra.mxu0 %v2062
        %2066 = vmatprep.subr.bf16.mxu0 0
        %2067 = vmatpush1.bf16.xpose.msra.mxu0 0
        %2068 = vmatprep.subr.bf16.mxu0 0
        %2069 = vmatpush1.bf16.xpose.msra.mxu0 0
        %2070 = vmatprep.subr.bf16.mxu0 0
        %2071 = vmatpush1.bf16.xpose.msra.mxu0 0
        %2072 = vmatprep.subr.bf16.mxu0 0
        %2073 = vmatpush1.bf16.xpose.msra.mxu0 0
        %2074 = vmatprep.subr.bf16.mxu0 0
        %2075 = vmatpush1.bf16.xpose.msra.mxu0 0
        %2076 = vmatprep.subr.bf16.mxu0 0
        %2077 = vmatpush1.bf16.xpose.msra.mxu0 0
        %2078 = vmatprep.subr.bf16.mxu0 0
        %2079 = vmatpush1.bf16.xpose.msra.mxu0 0
        %2080 = vmatprep.subr.bf16.mxu0 0
        %2081 = vmatpush1.bf16.xpose.msra.mxu0 0
        %2082 = vmatprep.subr.bf16.mxu0 0
        %2083 = vmatpush1.bf16.xpose.msra.mxu0 0
        %2084 = vmatprep.subr.bf16.mxu0 0
        %2085 = vmatpush1.bf16.xpose.msra.mxu0 0
        %2086 = vmatprep.subr.bf16.mxu0 0
        %2087 = vmatpush1.bf16.xpose.msra.mxu0 0
        %2088 = vmatprep.subr.bf16.mxu0 0
        %2089 = vmatpush1.bf16.xpose.msra.mxu0 0
        %2090 = vmatprep.subr.bf16.mxu0 0
        %2091 = vmatpush1.bf16.xpose.msra.mxu0 0
        %2092 = vmatprep.subr.bf16.mxu0 0
        %2093 = vmatpush1.bf16.xpose.msra.mxu0 0
        %2094 = vmatprep.subr.bf16.mxu0 0
        %2095 = vmatpush1.bf16.xpose.msra.mxu0 0
        %2096 = vmatprep.mubr.bf16.mxu0 0
        %2097 = vmatmul.mubr.bf16.gmra.mrb[0].mxu0 %v2059
        %v2098 = vpop.f32.mrb[0].mxu0
        %v2099 = vadd.f32 0.0, %v2098
        %v2100 = vpop.f32.mrb[0].mxu0
        %v2101 = vpop.f32.mrb[0].mxu0
        %v2102 = vadd.f32 0.0, %v2101
        %v2103 = vpop.f32.mrb[0].mxu0
        %2104 = vdwg.mxu0
        %v2105 = vsel %vm1807, %v2099, -1e+30
        %v2106 = vsel %vm1807, %v2102, -1e+30
        %v2107 = vsel %vm1813, %v2105, -inf
        %2108 = vmax.xlane.f32.xlu0 %v2107
        %v2109 = vpop.xlane.xlu0 %2108
        %v2110 = vsel %vm1813, %v2106, -inf
        %2111 = vmax.xlane.f32.xlu0 %v2110
        %v2112 = vpop.xlane.xlu0 %2111
        %v2113 = vsub.f32 %v2105, %v2109
        %v2114 = vsub.f32 %v2106, %v2112
        %v2115 = vmul.f32 %v2113, 1.442695
        %v2116 = vpow.pop %v2115
        %v2117 = vmul.f32 %v2114, 1.442695
        %v2118 = vpow.pop %v2117
        %v2119 = vsel %vm1813, %v2116, 0.0
        %2120 = vadd.xlane.f32.xlu0 %v2119
        %v2121 = vpop.xlane.xlu0 %2120
        %v2122 = vsel %vm1813, %v2118, 0.0
        %2123 = vadd.xlane.f32.xlu0 %v2122
        %v2124 = vpop.xlane.xlu0 %2123
        %v2125 = vrcp.pop %v2121
        %v2126 = vrcp.pop %v2124
        %v2127 = vmul.f32 %v2116, %v2125
        %v2128 = vmul.f32 %v2118, %v2126
        %v2129 = vpack.c.bf16 %v2128, %v2127
        %2130 = vrot.lane.b32.xlu0 %v1809, 96
        %v2131 = vpop.permute.xlu0 %2130
        %v2134 = vsel %vm1813, %v2129, 0
        %2136 = vmatprep.subr.bf16.mxu0 0
        %2137 = vmatpush1.bf16.msra.mxu0 %v2131
        %2138 = vmatprep.subr.bf16.mxu0 0
        %2139 = vmatpush1.bf16.msra.mxu0 0
        %2140 = vmatprep.subr.bf16.mxu0 0
        %2141 = vmatpush1.bf16.msra.mxu0 0
        %2142 = vmatprep.subr.bf16.mxu0 0
        %2143 = vmatpush1.bf16.msra.mxu0 0
        %2144 = vmatprep.subr.bf16.mxu0 0
        %2145 = vmatpush1.bf16.msra.mxu0 0
        %2146 = vmatprep.subr.bf16.mxu0 0
        %2147 = vmatpush1.bf16.msra.mxu0 0
        %2148 = vmatprep.subr.bf16.mxu0 0
        %2149 = vmatpush1.bf16.msra.mxu0 0
        %2150 = vmatprep.subr.bf16.mxu0 0
        %2151 = vmatpush1.bf16.msra.mxu0 0
        %2152 = vmatprep.subr.bf16.mxu0 0
        %2153 = vmatpush1.bf16.msra.mxu0 0
        %2154 = vmatprep.subr.bf16.mxu0 0
        %2155 = vmatpush1.bf16.msra.mxu0 0
        %2156 = vmatprep.subr.bf16.mxu0 0
        %2157 = vmatpush1.bf16.msra.mxu0 0
        %2158 = vmatprep.subr.bf16.mxu0 0
        %2159 = vmatpush1.bf16.msra.mxu0 0
        %2160 = vmatprep.subr.bf16.mxu0 0
        %2161 = vmatpush1.bf16.msra.mxu0 0
        %2162 = vmatprep.subr.bf16.mxu0 0
        %2163 = vmatpush1.bf16.msra.mxu0 0
        %2164 = vmatprep.subr.bf16.mxu0 0
        %2165 = vmatpush1.bf16.msra.mxu0 0
        %2166 = vmatprep.subr.bf16.mxu0 0
        %2167 = vmatpush1.bf16.msra.mxu0 0
        %2168 = vmatprep.mubr.bf16.mxu0 0
        %2169 = vmatmul.mubr.bf16.gmra.mrb[0].mxu0 %v2134
        %v2170 = vpop.f32.mrb[0].mxu0
        %v2171 = vadd.f32 0.0, %v2170
        %v2172 = vpop.f32.mrb[0].mxu0
        %v2173 = vpop.f32.mrb[0].mxu0
        %v2174 = vadd.f32 0.0, %v2173
        %v2175 = vpop.f32.mrb[0].mxu0
        %2176 = vdwg.mxu0
        %2177 = vrot.lane.b32.xlu0 %v1808, 80
        %v2178 = vpop.permute.xlu0 %2177
        %2179 = vrot.lane.b32.xlu0 %v1808, 16
        %v2180 = vpop.permute.xlu0 %2179
        %v2182 = vsel %vm1813, %v2178, 0
        %v2185 = vsel %vm1813, %v2180, 0
        %2187 = vmatprep.subr.bf16.mxu0 0
        %2188 = vmatpush1.bf16.xpose.msra.mxu0 %v2185
        %2189 = vmatprep.subr.bf16.mxu0 0
        %2190 = vmatpush1.bf16.xpose.msra.mxu0 0
        %2191 = vmatprep.subr.bf16.mxu0 0
        %2192 = vmatpush1.bf16.xpose.msra.mxu0 0
        %2193 = vmatprep.subr.bf16.mxu0 0
        %2194 = vmatpush1.bf16.xpose.msra.mxu0 0
        %2195 = vmatprep.subr.bf16.mxu0 0
        %2196 = vmatpush1.bf16.xpose.msra.mxu0 0
        %2197 = vmatprep.subr.bf16.mxu0 0
        %2198 = vmatpush1.bf16.xpose.msra.mxu0 0
        %2199 = vmatprep.subr.bf16.mxu0 0
        %2200 = vmatpush1.bf16.xpose.msra.mxu0 0
        %2201 = vmatprep.subr.bf16.mxu0 0
        %2202 = vmatpush1.bf16.xpose.msra.mxu0 0
        %2203 = vmatprep.subr.bf16.mxu0 0
        %2204 = vmatpush1.bf16.xpose.msra.mxu0 0
        %2205 = vmatprep.subr.bf16.mxu0 0
        %2206 = vmatpush1.bf16.xpose.msra.mxu0 0
        %2207 = vmatprep.subr.bf16.mxu0 0
        %2208 = vmatpush1.bf16.xpose.msra.mxu0 0
        %2209 = vmatprep.subr.bf16.mxu0 0
        %2210 = vmatpush1.bf16.xpose.msra.mxu0 0
        %2211 = vmatprep.subr.bf16.mxu0 0
        %2212 = vmatpush1.bf16.xpose.msra.mxu0 0
        %2213 = vmatprep.subr.bf16.mxu0 0
        %2214 = vmatpush1.bf16.xpose.msra.mxu0 0
        %2215 = vmatprep.subr.bf16.mxu0 0
        %2216 = vmatpush1.bf16.xpose.msra.mxu0 0
        %2217 = vmatprep.subr.bf16.mxu0 0
        %2218 = vmatpush1.bf16.xpose.msra.mxu0 0
        %2219 = vmatprep.mubr.bf16.mxu0 0
        %2220 = vmatmul.mubr.bf16.gmra.mrb[0].mxu0 %v2182
        %v2221 = vpop.f32.mrb[0].mxu0
        %v2222 = vadd.f32 0.0, %v2221
        %v2223 = vpop.f32.mrb[0].mxu0
        %v2224 = vpop.f32.mrb[0].mxu0
        %v2225 = vadd.f32 0.0, %v2224
        %v2226 = vpop.f32.mrb[0].mxu0
        %2227 = vdwg.mxu0
        %v2228 = vsel %vm1807, %v2222, -1e+30
        %v2229 = vsel %vm1807, %v2225, -1e+30
        %v2230 = vsel %vm1813, %v2228, -inf
        %2231 = vmax.xlane.f32.xlu0 %v2230
        %v2232 = vpop.xlane.xlu0 %2231
        %v2233 = vsel %vm1813, %v2229, -inf
        %2234 = vmax.xlane.f32.xlu0 %v2233
        %v2235 = vpop.xlane.xlu0 %2234
        %v2236 = vsub.f32 %v2228, %v2232
        %v2237 = vsub.f32 %v2229, %v2235
        %v2238 = vmul.f32 %v2236, 1.442695
        %v2239 = vpow.pop %v2238
        %v2240 = vmul.f32 %v2237, 1.442695
        %v2241 = vpow.pop %v2240
        %v2242 = vsel %vm1813, %v2239, 0.0
        %2243 = vadd.xlane.f32.xlu0 %v2242
        %v2244 = vpop.xlane.xlu0 %2243
        %v2245 = vsel %vm1813, %v2241, 0.0
        %2246 = vadd.xlane.f32.xlu0 %v2245
        %v2247 = vpop.xlane.xlu0 %2246
        %v2248 = vrcp.pop %v2244
        %v2249 = vrcp.pop %v2247
        %v2250 = vmul.f32 %v2239, %v2248
        %v2251 = vmul.f32 %v2241, %v2249
        %v2252 = vpack.c.bf16 %v2251, %v2250
        %2253 = vrot.lane.b32.xlu0 %v1809, 80
        %v2254 = vpop.permute.xlu0 %2253
        %v2257 = vsel %vm1813, %v2252, 0
        %2259 = vmatprep.subr.bf16.mxu0 0
        %2260 = vmatpush1.bf16.msra.mxu0 %v2254
        %2261 = vmatprep.subr.bf16.mxu0 0
        %2262 = vmatpush1.bf16.msra.mxu0 0
        %2263 = vmatprep.subr.bf16.mxu0 0
        %2264 = vmatpush1.bf16.msra.mxu0 0
        %2265 = vmatprep.subr.bf16.mxu0 0
        %2266 = vmatpush1.bf16.msra.mxu0 0
        %2267 = vmatprep.subr.bf16.mxu0 0
        %2268 = vmatpush1.bf16.msra.mxu0 0
        %2269 = vmatprep.subr.bf16.mxu0 0
        %2270 = vmatpush1.bf16.msra.mxu0 0
        %2271 = vmatprep.subr.bf16.mxu0 0
        %2272 = vmatpush1.bf16.msra.mxu0 0
        %2273 = vmatprep.subr.bf16.mxu0 0
        %2274 = vmatpush1.bf16.msra.mxu0 0
        %2275 = vmatprep.subr.bf16.mxu0 0
        %2276 = vmatpush1.bf16.msra.mxu0 0
        %2277 = vmatprep.subr.bf16.mxu0 0
        %2278 = vmatpush1.bf16.msra.mxu0 0
        %2279 = vmatprep.subr.bf16.mxu0 0
        %2280 = vmatpush1.bf16.msra.mxu0 0
        %2281 = vmatprep.subr.bf16.mxu0 0
        %2282 = vmatpush1.bf16.msra.mxu0 0
        %2283 = vmatprep.subr.bf16.mxu0 0
        %2284 = vmatpush1.bf16.msra.mxu0 0
        %2285 = vmatprep.subr.bf16.mxu0 0
        %2286 = vmatpush1.bf16.msra.mxu0 0
        %2287 = vmatprep.subr.bf16.mxu0 0
        %2288 = vmatpush1.bf16.msra.mxu0 0
        %2289 = vmatprep.subr.bf16.mxu0 0
        %2290 = vmatpush1.bf16.msra.mxu0 0
        %2291 = vmatprep.mubr.bf16.mxu0 0
        %2292 = vmatmul.mubr.bf16.gmra.mrb[0].mxu0 %v2257
        %v2293 = vpop.f32.mrb[0].mxu0
        %v2294 = vadd.f32 0.0, %v2293
        %v2295 = vpop.f32.mrb[0].mxu0
        %v2296 = vpop.f32.mrb[0].mxu0
        %v2297 = vadd.f32 0.0, %v2296
        %v2298 = vpop.f32.mrb[0].mxu0
        %2299 = vdwg.mxu0
        %2302 = vrot.lane.b32.xlu0 %v2048, 16
        %v2303 = vpop.permute.xlu0 %2302
        %2304 = vrot.lane.b32.xlu0 %v2051, 16
        %v2305 = vpop.permute.xlu0 %2304
        %2310 = vrot.lane.b32.xlu0 %v2171, 32
        %v2311 = vpop.permute.xlu0 %2310
        %2312 = vrot.lane.b32.xlu0 %v2174, 32
        %v2313 = vpop.permute.xlu0 %2312
        %2318 = vrot.lane.b32.xlu0 %v2294, 48
        %v2319 = vpop.permute.xlu0 %2318
        %2320 = vrot.lane.b32.xlu0 %v2297, 48
        %v2321 = vpop.permute.xlu0 %2320
        %v2324 = vsel %vm1813, %v1924, %v2303
        %v2325 = vsel %vm1813, %v1927, %v2305
        %vm2326 = vcmask 261120
        %v2327 = vsel %vm2326, %v2324, %v2311
        %v2328 = vsel %vm2326, %v2325, %v2313
        %vm2329 = vcmask 392192
        %v2330 = vsel %vm2329, %v2327, %v2319
        %v2331 = vsel %vm2329, %v2328, %v2321
        %v2332 = vpack.c.bf16 %v2331, %v2330
        %v2333 = vld [vmem:[%s821] sm:$0xf]
        %v2334 = vld [vmem:[%s821 + $0x4] sm:$0xf]
        %v2335 = vld [vmem:[%s821 + $0x8] sm:$0xf]
        %v2336 = vld [vmem:[%s821 + $0xc] sm:$0xf]
        %v2337 = vld [vmem:[%s821 + $0x10] sm:$0xf]
        %v2338 = vld [vmem:[%s821 + $0x14] sm:$0xf]
        %v2339 = vld [vmem:[%s821 + $0x18] sm:$0xf]
        %v2340 = vld [vmem:[%s821 + $0x1c] sm:$0xf]
        %v2341 = vld [vmem:[%s824] sm:$0x1]
        %v2343 = vlaneseq
        %v2344 = vshrl.u32 %v2343, 7
        %v2345 = vsub.s32 0, %v2344
        %v2346 = vrot.slane %v2341, %v2345
        %v2356 = vunpack.c.l.b16 %v2333
        %v2357 = vunpack.c.l.b16 %v2334
        %v2358 = vunpack.c.l.b16 %v2335
        %v2359 = vunpack.c.l.b16 %v2336
        %v2360 = vunpack.c.l.b16 %v2337
        %v2361 = vunpack.c.l.b16 %v2338
        %v2362 = vunpack.c.l.b16 %v2339
        %v2363 = vunpack.c.l.b16 %v2340
        %v2364 = vpack.c.b16 %v2357, %v2356
        %v2365 = vpack.c.b16 %v2359, %v2358
        %v2366 = vpack.c.b16 %v2361, %v2360
        %v2367 = vpack.c.b16 %v2363, %v2362
        %v2373 = vsel %vm1654, %v2332, 0
        %2375 = vmatprep.subr.bf16.mxu0 0
        %2376 = vmatpush1.bf16.msra.mxu0 %v2364
        %2377 = vmatprep.subr.bf16.mxu0 0
        %2378 = vmatpush1.bf16.msra.mxu0 %v2365
        %2379 = vmatprep.subr.bf16.mxu0 0
        %2380 = vmatpush1.bf16.msra.mxu0 %v2366
        %2381 = vmatprep.subr.bf16.mxu0 0
        %2382 = vmatpush1.bf16.msra.mxu0 %v2367
        %2383 = vmatprep.subr.bf16.mxu0 0
        %2384 = vmatpush1.bf16.msra.mxu0 0
        %2385 = vmatprep.subr.bf16.mxu0 0
        %2386 = vmatpush1.bf16.msra.mxu0 0
        %2387 = vmatprep.subr.bf16.mxu0 0
        %2388 = vmatpush1.bf16.msra.mxu0 0
        %2389 = vmatprep.subr.bf16.mxu0 0
        %2390 = vmatpush1.bf16.msra.mxu0 0
        %2391 = vmatprep.subr.bf16.mxu0 0
        %2392 = vmatpush1.bf16.msra.mxu0 0
        %2393 = vmatprep.subr.bf16.mxu0 0
        %2394 = vmatpush1.bf16.msra.mxu0 0
        %2395 = vmatprep.subr.bf16.mxu0 0
        %2396 = vmatpush1.bf16.msra.mxu0 0
        %2397 = vmatprep.subr.bf16.mxu0 0
        %2398 = vmatpush1.bf16.msra.mxu0 0
        %2399 = vmatprep.subr.bf16.mxu0 0
        %2400 = vmatpush1.bf16.msra.mxu0 0
        %2401 = vmatprep.subr.bf16.mxu0 0
        %2402 = vmatpush1.bf16.msra.mxu0 0
        %2403 = vmatprep.subr.bf16.mxu0 0
        %2404 = vmatpush1.bf16.msra.mxu0 0
        %2405 = vmatprep.subr.bf16.mxu0 0
        %2406 = vmatpush1.bf16.msra.mxu0 0
        %2407 = vmatprep.mubr.bf16.mxu0 0
        %2408 = vmatmul.mubr.bf16.gmra.mrb[0].mxu0 %v2373
        %v2409 = vpop.f32.mrb[0].mxu0
        %v2410 = vadd.f32 %v2346, %v2409
        %v2411 = vpop.f32.mrb[0].mxu0
        %v2412 = vpop.f32.mrb[0].mxu0
        %v2413 = vadd.f32 %v2346, %v2412
        %v2414 = vpop.f32.mrb[0].mxu0
        %2415 = vdwg.mxu0
        %v2416 = vadd.f32 %v1650, %v2410
        %v2417 = vadd.f32 %v1651, %v2413
        %v2418 = vld [vmem:[%s827] sm:$0x1]
        %v2419 = vld [vmem:[%s830] sm:$0x1]
        %v2420 = vsel %vm1654, %v2416, 0.0
        %2421 = vadd.xlane.f32.xlu0 %v2420
        %v2422 = vpop.xlane.xlu0 %2421
        %v2423 = vsel %vm1654, %v2417, 0.0
        %2424 = vadd.xlane.f32.xlu0 %v2423
        %v2425 = vpop.xlane.xlu0 %2424
        %v2426 = vmul.f32 %v2422, %v1661
        %v2427 = vmul.f32 %v2425, %v1661
        %v2428 = vsub.f32 %v2416, %v2426
        %v2429 = vsub.f32 %v2417, %v2427
        %v2430 = vmul.f32 %v2428, %v2428
        %v2431 = vmul.f32 %v2429, %v2429
        %v2432 = vsel %vm1654, %v2430, 0.0
        %2433 = vadd.xlane.f32.xlu0 %v2432
        %v2434 = vpop.xlane.xlu0 %2433
        %v2435 = vsel %vm1654, %v2431, 0.0
        %2436 = vadd.xlane.f32.xlu0 %v2435
        %v2437 = vpop.xlane.xlu0 %2436
        %v2438 = vmul.f32 %v2434, %v1661
        %v2439 = vmul.f32 %v2437, %v1661
        %v2440 = vadd.f32 %v2438, 1e-05
        %v2441 = vadd.f32 %v2439, 1e-05
        %v2442 = vrsqrt.pop %v2440
        %v2443 = vrsqrt.pop %v2441
        %v2444 = vmul.f32 %v2428, %v2442
        %v2445 = vmul.f32 %v2429, %v2443
        %v2447 = vlaneseq
        %v2448 = vshrl.u32 %v2447, 7
        %v2449 = vsub.s32 0, %v2448
        %v2450 = vrot.slane %v2418, %v2449
        %v2452 = vmul.f32 %v2444, %v2450
        %v2453 = vmul.f32 %v2445, %v2450
        %v2455 = vlaneseq
        %v2456 = vshrl.u32 %v2455, 7
        %v2457 = vsub.s32 0, %v2456
        %v2458 = vrot.slane %v2419, %v2457
        %v2460 = vadd.f32 %v2452, %v2458
        %v2461 = vadd.f32 %v2453, %v2458
        %v2462 = vpack.c.bf16 %v2461, %v2460
        %v2463 = vld [vmem:[%s835] sm:$0xff]
        %v2464 = vld [vmem:[%s835 + $0x8] sm:$0xff]
        %v2465 = vld [vmem:[%s835 + $0x10] sm:$0xff]
        %v2466 = vld [vmem:[%s835 + $0x18] sm:$0xff]
        %v2467 = vld [vmem:[%s835 + $0x20] sm:$0xff]
        %v2468 = vld [vmem:[%s835 + $0x28] sm:$0xff]
        %v2469 = vld [vmem:[%s835 + $0x30] sm:$0xff]
        %v2470 = vld [vmem:[%s835 + $0x38] sm:$0xff]
        %v2471 = vld [vmem:[%s839] sm:$0x3]
        %v2473 = vlaneseq
        %v2474 = vshrl.u32 %v2473, 7
        %v2475 = vsub.s32 0, %v2474
        %v2476 = vrot.slane %v2471, %v2475
        %v2477 = vlaneseq
        %v2478 = vshrl.u32 %v2477, 7
        %v2479 = vsub.s32 1, %v2478
        %v2480 = vrot.slane %v2471, %v2479
        %v2491 = vunpack.c.l.b16 %v2463
        %v2492 = vunpack.c.h.b16 %v2463
        %v2493 = vunpack.c.l.b16 %v2464
        %v2494 = vunpack.c.h.b16 %v2464
        %v2495 = vunpack.c.l.b16 %v2465
        %v2496 = vunpack.c.h.b16 %v2465
        %v2497 = vunpack.c.l.b16 %v2466
        %v2498 = vunpack.c.h.b16 %v2466
        %v2499 = vunpack.c.l.b16 %v2467
        %v2500 = vunpack.c.h.b16 %v2467
        %v2501 = vunpack.c.l.b16 %v2468
        %v2502 = vunpack.c.h.b16 %v2468
        %v2503 = vunpack.c.l.b16 %v2469
        %v2504 = vunpack.c.h.b16 %v2469
        %v2505 = vunpack.c.l.b16 %v2470
        %v2506 = vunpack.c.h.b16 %v2470
        %v2507 = vpack.c.b16 %v2493, %v2491
        %v2508 = vpack.c.b16 %v2494, %v2492
        %v2509 = vpack.c.b16 %v2497, %v2495
        %v2510 = vpack.c.b16 %v2498, %v2496
        %v2511 = vpack.c.b16 %v2501, %v2499
        %v2512 = vpack.c.b16 %v2502, %v2500
        %v2513 = vpack.c.b16 %v2505, %v2503
        %v2514 = vpack.c.b16 %v2506, %v2504
        %v2524 = vsel %vm1654, %v2462, 0
        %2526 = vmatprep.subr.bf16.mxu0 %v2508
        %2527 = vmatpush1.bf16.msra.mxu0 %v2507
        %2528 = vmatprep.subr.bf16.mxu0 %v2510
        %2529 = vmatpush1.bf16.msra.mxu0 %v2509
        %2530 = vmatprep.subr.bf16.mxu0 %v2512
        %2531 = vmatpush1.bf16.msra.mxu0 %v2511
        %2532 = vmatprep.subr.bf16.mxu0 %v2514
        %2533 = vmatpush1.bf16.msra.mxu0 %v2513
        %2534 = vmatprep.subr.bf16.mxu0 0
        %2535 = vmatpush1.bf16.msra.mxu0 0
        %2536 = vmatprep.subr.bf16.mxu0 0
        %2537 = vmatpush1.bf16.msra.mxu0 0
        %2538 = vmatprep.subr.bf16.mxu0 0
        %2539 = vmatpush1.bf16.msra.mxu0 0
        %2540 = vmatprep.subr.bf16.mxu0 0
        %2541 = vmatpush1.bf16.msra.mxu0 0
        %2542 = vmatprep.subr.bf16.mxu0 0
        %2543 = vmatpush1.bf16.msra.mxu0 0
        %2544 = vmatprep.subr.bf16.mxu0 0
        %2545 = vmatpush1.bf16.msra.mxu0 0
        %2546 = vmatprep.subr.bf16.mxu0 0
        %2547 = vmatpush1.bf16.msra.mxu0 0
        %2548 = vmatprep.subr.bf16.mxu0 0
        %2549 = vmatpush1.bf16.msra.mxu0 0
        %2550 = vmatprep.subr.bf16.mxu0 0
        %2551 = vmatpush1.bf16.msra.mxu0 0
        %2552 = vmatprep.subr.bf16.mxu0 0
        %2553 = vmatpush1.bf16.msra.mxu0 0
        %2554 = vmatprep.subr.bf16.mxu0 0
        %2555 = vmatpush1.bf16.msra.mxu0 0
        %2556 = vmatprep.subr.bf16.mxu0 0
        %2557 = vmatpush1.bf16.msra.mxu0 0
        %2558 = vmatprep.mubr.bf16.mxu0 0
        %2559 = vmatmul.mubr.bf16.gmra.mrb[0].mxu0 %v2524
        %v2560 = vpop.f32.mrb[0].mxu0
        %v2561 = vadd.f32 %v2476, %v2560
        %v2562 = vpop.f32.mrb[0].mxu0
        %v2563 = vadd.f32 %v2480, %v2562
        %v2564 = vpop.f32.mrb[0].mxu0
        %v2565 = vadd.f32 %v2476, %v2564
        %v2566 = vpop.f32.mrb[0].mxu0
        %v2567 = vadd.f32 %v2480, %v2566
        %2568 = vdwg.mxu0
        %v2569 = vmul.f32 %v2561, 0.5
        %v2570 = vmul.f32 %v2563, 0.5
        %v2571 = vmul.f32 %v2565, 0.5
        %v2572 = vmul.f32 %v2567, 0.5
        %v2573 = vmul.f32 %v2561, 0.70710677
        %v2574 = vmul.f32 %v2563, 0.70710677
        %v2575 = vmul.f32 %v2565, 0.70710677
        %v2576 = vmul.f32 %v2567, 0.70710677
        %v2577 = vand.u32 2147483647, %v2573
        %v2578 = vand.u32 2147483647, %v2574
        %v2579 = vand.u32 2147483647, %v2575
        %v2580 = vand.u32 2147483647, %v2576
        %v2581 = vmul.f32 %v2577, 0.3275911
        %v2582 = vmul.f32 %v2578, 0.3275911
        %v2583 = vmul.f32 %v2579, 0.3275911
        %v2584 = vmul.f32 %v2580, 0.3275911
        %v2585 = vadd.f32 %v2581, 1.0
        %v2586 = vadd.f32 %v2582, 1.0
        %v2587 = vadd.f32 %v2583, 1.0
        %v2588 = vadd.f32 %v2584, 1.0
        %v2589 = vrcp.pop %v2585
        %v2590 = vrcp.pop %v2586
        %v2591 = vrcp.pop %v2587
        %v2592 = vrcp.pop %v2588
        %v2593 = vmul.f32 %v2589, 1.0614054
        %v2594 = vmul.f32 %v2590, 1.0614054
        %v2595 = vmul.f32 %v2591, 1.0614054
        %v2596 = vmul.f32 %v2592, 1.0614054
        %v2597 = vadd.f32 %v2593, -1.4531521
        %v2598 = vadd.f32 %v2594, -1.4531521
        %v2599 = vadd.f32 %v2595, -1.4531521
        %v2600 = vadd.f32 %v2596, -1.4531521
        %v2601 = vmul.f32 %v2597, %v2589
        %v2602 = vmul.f32 %v2598, %v2590
        %v2603 = vmul.f32 %v2599, %v2591
        %v2604 = vmul.f32 %v2600, %v2592
        %v2605 = vadd.f32 %v2601, 1.4214138
        %v2606 = vadd.f32 %v2602, 1.4214138
        %v2607 = vadd.f32 %v2603, 1.4214138
        %v2608 = vadd.f32 %v2604, 1.4214138
        %v2609 = vmul.f32 %v2605, %v2589
        %v2610 = vmul.f32 %v2606, %v2590
        %v2611 = vmul.f32 %v2607, %v2591
        %v2612 = vmul.f32 %v2608, %v2592
        %v2613 = vadd.f32 %v2609, -0.28449672
        %v2614 = vadd.f32 %v2610, -0.28449672
        %v2615 = vadd.f32 %v2611, -0.28449672
        %v2616 = vadd.f32 %v2612, -0.28449672
        %v2617 = vmul.f32 %v2613, %v2589
        %v2618 = vmul.f32 %v2614, %v2590
        %v2619 = vmul.f32 %v2615, %v2591
        %v2620 = vmul.f32 %v2616, %v2592
        %v2621 = vadd.f32 %v2617, 0.2548296
        %v2622 = vadd.f32 %v2618, 0.2548296
        %v2623 = vadd.f32 %v2619, 0.2548296
        %v2624 = vadd.f32 %v2620, 0.2548296
        %v2625 = vmul.f32 %v2621, %v2589
        %v2626 = vmul.f32 %v2622, %v2590
        %v2627 = vmul.f32 %v2623, %v2591
        %v2628 = vmul.f32 %v2624, %v2592
        %v2629 = vsub.f32 0.0, %v2577
        %v2630 = vsub.f32 0.0, %v2578
        %v2631 = vsub.f32 0.0, %v2579
        %v2632 = vsub.f32 0.0, %v2580
        %v2633 = vmul.f32 %v2629, %v2577
        %v2634 = vmul.f32 %v2630, %v2578
        %v2635 = vmul.f32 %v2631, %v2579
        %v2636 = vmul.f32 %v2632, %v2580
        %v2637 = vmul.f32 %v2633, 1.442695
        %v2638 = vpow.pop %v2637
        %v2639 = vmul.f32 %v2634, 1.442695
        %v2640 = vpow.pop %v2639
        %v2641 = vmul.f32 %v2635, 1.442695
        %v2642 = vpow.pop %v2641
        %v2643 = vmul.f32 %v2636, 1.442695
        %v2644 = vpow.pop %v2643
        %v2645 = vmul.f32 %v2625, %v2638
        %v2646 = vmul.f32 %v2626, %v2640
        %v2647 = vmul.f32 %v2627, %v2642
        %v2648 = vmul.f32 %v2628, %v2644
        %v2649 = vsub.f32 1.0, %v2645
        %v2650 = vsub.f32 1.0, %v2646
        %v2651 = vsub.f32 1.0, %v2647
        %v2652 = vsub.f32 1.0, %v2648
        %vm2653 = vcmp.ge.f32.partialorder %v2573, 0.0
        %vm2654 = vcmp.ge.f32.partialorder %v2574, 0.0
        %vm2655 = vcmp.ge.f32.partialorder %v2575, 0.0
        %vm2656 = vcmp.ge.f32.partialorder %v2576, 0.0
        %v2657 = vsub.f32 0.0, %v2649
        %v2658 = vsub.f32 0.0, %v2650
        %v2659 = vsub.f32 0.0, %v2651
        %v2660 = vsub.f32 0.0, %v2652
        %v2661 = vsel %vm2653, %v2649, %v2657
        %v2662 = vsel %vm2654, %v2650, %v2658
        %v2663 = vsel %vm2655, %v2651, %v2659
        %v2664 = vsel %vm2656, %v2652, %v2660
        %v2665 = vadd.f32 %v2661, 1.0
        %v2666 = vadd.f32 %v2662, 1.0
        %v2667 = vadd.f32 %v2663, 1.0
        %v2668 = vadd.f32 %v2664, 1.0
        %v2669 = vmul.f32 %v2569, %v2665
        %v2670 = vmul.f32 %v2570, %v2666
        %v2671 = vmul.f32 %v2571, %v2667
        %v2672 = vmul.f32 %v2572, %v2668
        %v2673 = vpack.c.bf16 %v2671, %v2669
        %v2674 = vpack.c.bf16 %v2672, %v2670
        %v2675 = vld [vmem:[%s844] sm:$0xf]
        %v2676 = vld [vmem:[%s844 + $0x4] sm:$0xf]
        %v2677 = vld [vmem:[%s844 + $0x8] sm:$0xf]
        %v2678 = vld [vmem:[%s844 + $0xc] sm:$0xf]
        %v2679 = vld [vmem:[%s844 + $0x10] sm:$0xf]
        %v2680 = vld [vmem:[%s844 + $0x14] sm:$0xf]
        %v2681 = vld [vmem:[%s844 + $0x18] sm:$0xf]
        %v2682 = vld [vmem:[%s844 + $0x1c] sm:$0xf]
        %v2683 = vld [vmem:[%s844 + $0x20] sm:$0xf]
        %v2684 = vld [vmem:[%s844 + $0x24] sm:$0xf]
        %v2685 = vld [vmem:[%s844 + $0x28] sm:$0xf]
        %v2686 = vld [vmem:[%s844 + $0x2c] sm:$0xf]
        %v2687 = vld [vmem:[%s844 + $0x30] sm:$0xf]
        %v2688 = vld [vmem:[%s844 + $0x34] sm:$0xf]
        %v2689 = vld [vmem:[%s844 + $0x38] sm:$0xf]
        %v2690 = vld [vmem:[%s844 + $0x3c] sm:$0xf]
        %v2691 = vld [vmem:[%s844 + $0x40] sm:$0xf]
        %v2692 = vld [vmem:[%s844 + $0x44] sm:$0xf]
        %v2693 = vld [vmem:[%s844 + $0x48] sm:$0xf]
        %v2694 = vld [vmem:[%s844 + $0x4c] sm:$0xf]
        %v2695 = vld [vmem:[%s844 + $0x50] sm:$0xf]
        %v2696 = vld [vmem:[%s844 + $0x54] sm:$0xf]
        %v2697 = vld [vmem:[%s844 + $0x58] sm:$0xf]
        %v2698 = vld [vmem:[%s844 + $0x5c] sm:$0xf]
        %v2699 = vld [vmem:[%s844 + $0x60] sm:$0xf]
        %v2700 = vld [vmem:[%s844 + $0x64] sm:$0xf]
        %v2701 = vld [vmem:[%s844 + $0x68] sm:$0xf]
        %v2702 = vld [vmem:[%s844 + $0x6c] sm:$0xf]
        %v2703 = vld [vmem:[%s844 + $0x70] sm:$0xf]
        %v2704 = vld [vmem:[%s844 + $0x74] sm:$0xf]
        %v2705 = vld [vmem:[%s844 + $0x78] sm:$0xf]
        %v2706 = vld [vmem:[%s844 + $0x7c] sm:$0xf]
        %v2707 = vld [vmem:[%s847] sm:$0x1]
        %v2709 = vlaneseq
        %v2710 = vshrl.u32 %v2709, 7
        %v2711 = vsub.s32 0, %v2710
        %v2712 = vrot.slane %v2707, %v2711
        %v2746 = vunpack.c.l.b16 %v2675
        %v2747 = vunpack.c.l.b16 %v2676
        %v2748 = vunpack.c.l.b16 %v2677
        %v2749 = vunpack.c.l.b16 %v2678
        %v2750 = vunpack.c.l.b16 %v2679
        %v2751 = vunpack.c.l.b16 %v2680
        %v2752 = vunpack.c.l.b16 %v2681
        %v2753 = vunpack.c.l.b16 %v2682
        %v2754 = vunpack.c.l.b16 %v2683
        %v2755 = vunpack.c.l.b16 %v2684
        %v2756 = vunpack.c.l.b16 %v2685
        %v2757 = vunpack.c.l.b16 %v2686
        %v2758 = vunpack.c.l.b16 %v2687
        %v2759 = vunpack.c.l.b16 %v2688
        %v2760 = vunpack.c.l.b16 %v2689
        %v2761 = vunpack.c.l.b16 %v2690
        %v2762 = vunpack.c.l.b16 %v2691
        %v2763 = vunpack.c.l.b16 %v2692
        %v2764 = vunpack.c.l.b16 %v2693
        %v2765 = vunpack.c.l.b16 %v2694
        %v2766 = vunpack.c.l.b16 %v2695
        %v2767 = vunpack.c.l.b16 %v2696
        %v2768 = vunpack.c.l.b16 %v2697
        %v2769 = vunpack.c.l.b16 %v2698
        %v2770 = vunpack.c.l.b16 %v2699
        %v2771 = vunpack.c.l.b16 %v2700
        %v2772 = vunpack.c.l.b16 %v2701
        %v2773 = vunpack.c.l.b16 %v2702
        %v2774 = vunpack.c.l.b16 %v2703
        %v2775 = vunpack.c.l.b16 %v2704
        %v2776 = vunpack.c.l.b16 %v2705
        %v2777 = vunpack.c.l.b16 %v2706
        %v2778 = vpack.c.b16 %v2747, %v2746
        %v2779 = vpack.c.b16 %v2749, %v2748
        %v2780 = vpack.c.b16 %v2751, %v2750
        %v2781 = vpack.c.b16 %v2753, %v2752
        %v2782 = vpack.c.b16 %v2755, %v2754
        %v2783 = vpack.c.b16 %v2757, %v2756
        %v2784 = vpack.c.b16 %v2759, %v2758
        %v2785 = vpack.c.b16 %v2761, %v2760
        %v2786 = vpack.c.b16 %v2763, %v2762
        %v2787 = vpack.c.b16 %v2765, %v2764
        %v2788 = vpack.c.b16 %v2767, %v2766
        %v2789 = vpack.c.b16 %v2769, %v2768
        %v2790 = vpack.c.b16 %v2771, %v2770
        %v2791 = vpack.c.b16 %v2773, %v2772
        %v2792 = vpack.c.b16 %v2775, %v2774
        %v2793 = vpack.c.b16 %v2777, %v2776
        %2810 = vmatprep.subr.bf16.mxu0 0
        %2811 = vmatpush1.bf16.msra.mxu0 %v2778
        %2812 = vmatprep.subr.bf16.mxu0 0
        %2813 = vmatpush1.bf16.msra.mxu0 %v2779
        %2814 = vmatprep.subr.bf16.mxu0 0
        %2815 = vmatpush1.bf16.msra.mxu0 %v2780
        %2816 = vmatprep.subr.bf16.mxu0 0
        %2817 = vmatpush1.bf16.msra.mxu0 %v2781
        %2818 = vmatprep.subr.bf16.mxu0 0
        %2819 = vmatpush1.bf16.msra.mxu0 %v2782
        %2820 = vmatprep.subr.bf16.mxu0 0
        %2821 = vmatpush1.bf16.msra.mxu0 %v2783
        %2822 = vmatprep.subr.bf16.mxu0 0
        %2823 = vmatpush1.bf16.msra.mxu0 %v2784
        %2824 = vmatprep.subr.bf16.mxu0 0
        %2825 = vmatpush1.bf16.msra.mxu0 %v2785
        %2826 = vmatprep.subr.bf16.mxu0 0
        %2827 = vmatpush1.bf16.msra.mxu0 %v2786
        %2828 = vmatprep.subr.bf16.mxu0 0
        %2829 = vmatpush1.bf16.msra.mxu0 %v2787
        %2830 = vmatprep.subr.bf16.mxu0 0
        %2831 = vmatpush1.bf16.msra.mxu0 %v2788
        %2832 = vmatprep.subr.bf16.mxu0 0
        %2833 = vmatpush1.bf16.msra.mxu0 %v2789
        %2834 = vmatprep.subr.bf16.mxu0 0
        %2835 = vmatpush1.bf16.msra.mxu0 %v2790
        %2836 = vmatprep.subr.bf16.mxu0 0
        %2837 = vmatpush1.bf16.msra.mxu0 %v2791
        %2838 = vmatprep.subr.bf16.mxu0 0
        %2839 = vmatpush1.bf16.msra.mxu0 %v2792
        %2840 = vmatprep.subr.bf16.mxu0 0
        %2841 = vmatpush1.bf16.msra.mxu0 %v2793
        %2842 = vmatprep.mubr.bf16.mxu0 %v2674
        %2843 = vmatmul.mubr.bf16.gmra.mrb[0].mxu0 %v2673
        %v2844 = vpop.f32.mrb[0].mxu0
        %v2845 = vadd.f32 %v2712, %v2844
        %v2846 = vpop.f32.mrb[0].mxu0
        %v2847 = vpop.f32.mrb[0].mxu0
        %v2848 = vadd.f32 %v2712, %v2847
        %v2849 = vpop.f32.mrb[0].mxu0
        %2850 = vdwg.mxu0
        %v2851 = vadd.f32 %v2416, %v2845
        %v2852 = vadd.f32 %v2417, %v2848
        %2853 = vst.msk [vmem:[#allocation2] sm:$0xff] %vm1654, %v2851
        %2854 = vst.msk [vmem:[#allocation2 + $0x8] sm:$0xff] %vm1654, %v2852
        %p2855 = scmp.lt.s32.totalorder %s36, 1
        // Predicated region
        $region113: #{tpu_custom_call.1} parent=103 // pred_check
          %p2856 = pneg %p2855
        $region114: #{tpu_custom_call.1} parent=103 // pred_check_branch
          %2858 = sbr.rel (%p2856) target = $region116
        $region115: #{tpu_custom_call.1} parent=103 // pred_region
          %v2859 = vsel %vm1654, %v2851, 0.0
          %v2860 = vsel %vm1654, %v2852, 0.0
          %2861 = vst [vmem:[%s801] sm:$0xff] %v2859
          %2862 = vst [vmem:[%s801 + $0x8] sm:$0xff] %v2860
        $region116: #{tpu_custom_call.1} parent=103 // pred_fallthru
          _
        %p2863 = scmp.eq.s32.totalorder %s36, 1
        // Predicated region
        $region117: #{tpu_custom_call.1} parent=103 // pred_check
          %p2864 = pneg %p2863
        $region118: #{tpu_custom_call.1} parent=103 // pred_check_branch
          %2866 = sbr.rel (%p2864) target = $region120
        $region119: #{tpu_custom_call.1} parent=103 // pred_region
          %v2867 = vld [vmem:[%s19] sm:$0x1]
          %v2868 = vld [vmem:[%s20] sm:$0x1]
          %v2869 = vsel %vm1654, %v2851, 0.0
          %2870 = vadd.xlane.f32.xlu0 %v2869
          %v2871 = vpop.xlane.xlu0 %2870
          %v2872 = vsel %vm1654, %v2852, 0.0
          %2873 = vadd.xlane.f32.xlu0 %v2872
          %v2874 = vpop.xlane.xlu0 %2873
          %v2875 = vmul.f32 %v2871, %v1661
          %v2876 = vmul.f32 %v2874, %v1661
          %v2877 = vsub.f32 %v2851, %v2875
          %v2878 = vsub.f32 %v2852, %v2876
          %v2879 = vmul.f32 %v2877, %v2877
          %v2880 = vmul.f32 %v2878, %v2878
          %v2881 = vsel %vm1654, %v2879, 0.0
          %2882 = vadd.xlane.f32.xlu0 %v2881
          %v2883 = vpop.xlane.xlu0 %2882
          %v2884 = vsel %vm1654, %v2880, 0.0
          %2885 = vadd.xlane.f32.xlu0 %v2884
          %v2886 = vpop.xlane.xlu0 %2885
          %v2887 = vmul.f32 %v2883, %v1661
          %v2888 = vmul.f32 %v2886, %v1661
          %v2889 = vadd.f32 %v2887, 1e-05
          %v2890 = vadd.f32 %v2888, 1e-05
          %v2891 = vrsqrt.pop %v2889
          %v2892 = vrsqrt.pop %v2890
          %v2893 = vmul.f32 %v2877, %v2891
          %v2894 = vmul.f32 %v2878, %v2892
          %v2896 = vlaneseq
          %v2897 = vshrl.u32 %v2896, 7
          %v2898 = vsub.s32 0, %v2897
          %v2899 = vrot.slane %v2867, %v2898
          %v2901 = vmul.f32 %v2893, %v2899
          %v2902 = vmul.f32 %v2894, %v2899
          %v2904 = vlaneseq
          %v2905 = vshrl.u32 %v2904, 7
          %v2906 = vsub.s32 0, %v2905
          %v2907 = vrot.slane %v2868, %v2906
          %v2909 = vadd.f32 %v2901, %v2907
          %v2910 = vadd.f32 %v2902, %v2907
          %v2911 = vsel %vm1654, %v2909, 0.0
          %v2912 = vsel %vm1654, %v2910, 0.0
          %2913 = vst [vmem:[%s801] sm:$0xff] %v2911
          %2914 = vst [vmem:[%s801 + $0x8] sm:$0xff] %v2912
        $region120: #{tpu_custom_call.1} parent=103 // pred_fallthru
          _
        %s2915 = sand.u32 %s545, 1
        %s2916 = scalar_lea.sflag [#allocation7], %s2915
        %s2917 = sand.u32 %s545, 1
        %s2918 = smul.addr %s2917, 16
        %s2919 = scalar_lea.vmem [#allocation8], %s2918
        // Predicated region
        $region121: #{tpu_custom_call.1} parent=103 // pred_check
          %p2920 = pneg %p555
        $region122: #{tpu_custom_call.1} parent=103 // pred_check_branch
          %2922 = sbr.rel (%p2920) target = $region124
        $region123: #{tpu_custom_call.1} parent=103 // pred_region
          %s2924 = ssub.s32 256, 256
          %2925 = vsyncadd %s2916, %s2924
          %s2926 = smul.addr %s36, 2
          %s2927 = smul.addr %s2926, 128
          %s2928 = scalar_lea.hbm %s21, %s2927
          %s2929 = sshll.u32 %s2919, 4
          %s2930 = int_to_ptr.vmem [resolvable:$true] %s2929
          %2935 = dma.vmem_to_hbm [thread:$0]  %s2930, 256, %s2928, %s2916, 128, 128, 8
        $region124: #{tpu_custom_call.1} parent=103 // pred_fallthru
          _
      $region104: #{tpu_custom_call.1} parent=5 // pred_fallthru
        _
      %p2936 = scmp.le.s32.totalorder 2, %s31
      // Predicated region
      $region125: #{tpu_custom_call.1} parent=5 // pred_check
        %p2937 = pneg %p2936
      $region126: #{tpu_custom_call.1} parent=5 // pred_check_branch
        %2939 = sbr.rel (%p2937) target = $region128
      $region127: #{tpu_custom_call.1} parent=5 // pred_region
        %s2940 = ssub.s32 %s31, 2
        // Predicated region
        $region129: #{tpu_custom_call.1} parent=127 // pred_check
          %p2941 = pneg %p561
        $region130: #{tpu_custom_call.1} parent=127 // pred_check_branch
          %2943 = sbr.rel (%p2941) target = $region132
        $region131: #{tpu_custom_call.1} parent=127 // pred_region
          %s2944 = sand.u32 %s546, 1
          %s2945 = scalar_lea.sflag [#allocation7], %s2944
          %s2946 = sand.u32 %s546, 1
          %s2947 = smul.addr %s2946, 16
          %s2948 = scalar_lea.vmem [#allocation8], %s2947
          %2949 = dma.done %s2945, 256
        $region132: #{tpu_custom_call.1} parent=127 // pred_fallthru
          _
      $region128: #{tpu_custom_call.1} parent=5 // pred_fallthru
        _
    $region6: #{tpu_custom_call.1} parent=1 // loop_footer
      %s35 = sadd.s32 1, %s31
    $region7: #{tpu_custom_call.1} parent=1 // loop_footer_branch
      %30 = sbr.rel target = $region3
    $region8: #{tpu_custom_call.1} parent=1 // loop_exit
      _
    %2950 = vsyncpa [#allocation6], 1
    %s2951 = scalar_lea.sflag [#allocation6], 1
    %2952 = vsyncpa %s2951, 1
    %2953 = vsyncpa [#allocation7], 1
    %s2954 = scalar_lea.sflag [#allocation7], 1
    %2955 = vsyncpa %s2954, 1

</llo_original>
